<compile_context>
chip_gen: v5e
topology: v5e:2x2
jax: 0.10.0
libtpu: 0.0.40
codegen_flags: <defaults>
</compile_context>

<pallas_src>
import functools

import jax
import jax.numpy as jnp
from jax.experimental import pallas as pl
from jax.experimental.pallas import tpu as pltpu


# ------------------------------ small helpers -------------------------------

def round_up(v, m):
    return ((v + m - 1) // m) * m


def pad_to_shape(x, shape):
    pads = [(0, t - s) for s, t in zip(x.shape, shape)]
    return jnp.pad(x, pads)


# --------------------------- fused Pallas kernel ----------------------------

def fused_forward_kernel(p1_ref, w1_ref, h1_ref,
                         w2_ref, h2_ref,
                         pool_ref, wc_ref, bc_ref,
                         logits_ref, feat_ref,
                         y1pad_ref):
    """conv1(+BN)+ReLU -> conv2(+BN)+ReLU -> GAP -> (folded BN1d)+Linear."""
    B, Hp, Wp, C1p = y1pad_ref.shape
    H, W = Hp - 2, Wp - 2
    BHW = B * H * W
    C2p = w2_ref.shape[-1]

    # --- stage 1 (thermal_net stand-in): im2col matmul, BN scale folded into
    #     the weight columns -> only a per-channel shift + ReLU remain.
    acc1 = jnp.dot(p1_ref[...], w1_ref[...],
                   preferred_element_type=jnp.float32)            # (BHW, C1p) f32
    y1 = jnp.maximum(acc1 + h1_ref[...], 0.0)

    # Write stage-1 output into a zero-halo VMEM scratch ("same" padding for the
    # next conv).  Padded channels are exactly zero because the folded weight
    # columns and shifts for them are zero and ReLU(0) = 0.
    y1pad_ref[...] = jnp.zeros_like(y1pad_ref)
    y1pad_ref[:, 1:1 + H, 1:1 + W, :] = y1.reshape(B, H, W, C1p)

    # --- stage 2 (basenet_share stand-in): 3x3 conv as 9 shifted bf16 matmuls
    #     accumulated in f32 (BN scale folded into weights).
    acc2 = jnp.zeros((BHW, C2p), jnp.float32)
    for kh in range(3):
        for kw in range(3):
            tap = y1pad_ref[:, kh:kh + H, kw:kw + W, :]           # (B,H,W,C1p)
            tap2d = tap.reshape(BHW, C1p).astype(w2_ref.dtype)
            acc2 = acc2 + jnp.dot(tap2d, w2_ref[kh * 3 + kw],
                                  preferred_element_type=jnp.float32)
    y2 = jnp.maximum(acc2 + h2_ref[...], 0.0)                     # (BHW, C2p) f32

    # --- global average pool as a matmul with a block-diagonal averaging matrix
    pooled = jnp.dot(pool_ref[...], y2.astype(pool_ref.dtype),
                     preferred_element_type=jnp.float32)          # (B, C2p) f32
    feat_ref[...] = pooled                                        # feat output

    # --- classifier: BatchNorm1d folded into Linear offline -> matmul + bias --
    logits_ref[...] = (jnp.dot(pooled.astype(wc_ref.dtype), wc_ref[...],
                               preferred_element_type=jnp.float32)
                       + bc_ref[...])


def gradcam_fused_call(p1, w1, h1, w2, h2, pool_mat, wc, bc, *, B, H, W):
    C1p = w1.shape[1]
    C2p = w2.shape[-1]
    NCp = wc.shape[1]

    def full_spec(arr):
        n = arr.ndim
        return pl.BlockSpec(arr.shape, lambda *_, n=n: (0,) * n)

    return pl.pallas_call(
        fused_forward_kernel,
        out_shape=(jax.ShapeDtypeStruct((B, NCp), jnp.float32),
                   jax.ShapeDtypeStruct((B, C2p), jnp.float32)),
        grid_spec=pltpu.PrefetchScalarGridSpec(
            num_scalar_prefetch=0,
            grid=(1,),
            in_specs=[full_spec(a) for a in
                      (p1, w1, h1, w2, h2, pool_mat, wc, bc)],
            out_specs=[pl.BlockSpec((B, NCp), lambda i: (0, 0)),
                       pl.BlockSpec((B, C2p), lambda i: (0, 0))],
            scratch_shapes=[pltpu.VMEM((B, H + 2, W + 2, C1p), jnp.float32)],
        ),
        compiler_params=pltpu.CompilerParams(
            dimension_semantics=("arbitrary",)),
    )(p1, w1, h1, w2, h2, pool_mat, wc, bc)


# -------------------------------- JAX glue -----------------------------------

def im2col_3x3_same(x_nhwc):
    # x: [B, H, W, C] -> patches [B*H*W, 9*C], patch ordering (kh, kw, cin)
    B, H, W, C = x_nhwc.shape
    xp = jnp.pad(x_nhwc, ((0, 0), (1, 1), (1, 1), (0, 0)))
    cols = []
    for i in range(3):
        for j in range(3):
            cols.append(xp[:, i:i + H, j:j + W, :])
    patches = jnp.concatenate(cols, axis=-1)
    return patches.reshape(B * H * W, 9 * C)


def conv_weight_to_mat(w_oihw):
    # PyTorch conv weight [Cout, Cin, KH, KW] -> [KH*KW*Cin, Cout]
    Cout, Cin, KH, KW = w_oihw.shape
    return jnp.transpose(w_oihw, (2, 3, 1, 0)).reshape(KH * KW * Cin, Cout)


def conv_weight_to_taps(w_oihw):
    # PyTorch conv weight [Cout, Cin, 3, 3] -> [9, Cin, Cout] (tap-major)
    Cout, Cin, KH, KW = w_oihw.shape
    return jnp.transpose(w_oihw, (2, 3, 1, 0)).reshape(KH * KW, Cin, Cout)


def fold_bn(gamma, beta, mean, var, eps=1e-5):
    scale = gamma / jnp.sqrt(var + eps)
    shift = beta - mean * scale
    return scale.reshape(1, -1), shift.reshape(1, -1)


def gradcam_forward(x_nchw, params, *, n_class, c2):
    B, Cin, H, W = x_nchw.shape
    x = jnp.transpose(x_nchw, (0, 2, 3, 1))                      # NCHW -> NHWC

    # Stage-1 im2col stays in the wrapper: Cin=3 so the 9x expansion is only
    # ~30 KB in bf16 (K padded 27->32).  The large stage-2 patches are gathered
    # in-kernel from the VMEM-resident stage-1 output.
    p1 = im2col_3x3_same(x)                                      # (BHW, 9*Cin)
    K1p = params["w1_mat"].shape[0]
    p1 = pad_to_shape(p1, (p1.shape[0], K1p)).astype(jnp.bfloat16)

    logits_p, feat_p = gradcam_fused_call(
        p1, params["w1_mat"], params["h1"],
        params["w2_taps"], params["h2"],
        params["pool_mat"], params["wc_folded"], params["bc_folded"],
        B=B, H=H, W=W)

    # Slice off the lane padding (padded weight/shift/bias columns are zero, so
    # the slice is exact).
    return logits_p[:, :n_class], feat_p[:, :c2]


# ---------------------------------- main -------------------------------------

if __name__ == "__main__":
    key = jax.random.PRNGKey(0)
    ks = jax.random.split(key, 20)

    B, Cin, H, W = 2, 3, 16, 16      # small synthetic image input (NCHW)
    C1, C2 = 32, 64                  # channel widths of the two stages
    n_class = 395

    # lane-padded (128-multiple) sizes
    C1p = round_up(C1, 128)          # 128
    C2p = round_up(C2, 128)          # 128
    NCp = round_up(n_class, 128)     # 512
    K1p = round_up(9 * Cin, 8)       # 27 -> 32

    x = jax.random.normal(ks[0], (B, Cin, H, W), jnp.float32)

    # thermal_net conv + BN params (deterministic)
    w1 = 0.1 * jax.random.normal(ks[1], (C1, Cin, 3, 3), jnp.float32)
    g1 = 1.0 + 0.05 * jax.random.normal(ks[2], (C1,), jnp.float32)
    b1 = 0.05 * jax.random.normal(ks[3], (C1,), jnp.float32)
    m1 = 0.02 * jax.random.normal(ks[4], (C1,), jnp.float32)
    v1 = jnp.abs(1.0 + 0.05 * jax.random.normal(ks[5], (C1,), jnp.float32))

    # basenet_share conv + BN params
    w2 = 0.1 * jax.random.normal(ks[6], (C2, C1, 3, 3), jnp.float32)
    g2 = 1.0 + 0.05 * jax.random.normal(ks[7], (C2,), jnp.float32)
    b2 = 0.05 * jax.random.normal(ks[8], (C2,), jnp.float32)
    m2 = 0.02 * jax.random.normal(ks[9], (C2,), jnp.float32)
    v2 = jnp.abs(1.0 + 0.05 * jax.random.normal(ks[10], (C2,), jnp.float32))

    # classifier: BatchNorm1d(C2) + Linear(C2, n_class)
    g3 = 1.0 + 0.05 * jax.random.normal(ks[11], (C2,), jnp.float32)
    b3 = 0.05 * jax.random.normal(ks[12], (C2,), jnp.float32)
    m3 = 0.02 * jax.random.normal(ks[13], (C2,), jnp.float32)
    v3 = jnp.abs(1.0 + 0.05 * jax.random.normal(ks[14], (C2,), jnp.float32))
    wc = 0.05 * jax.random.normal(ks[15], (C2, n_class), jnp.float32)
    bc = 0.01 * jax.random.normal(ks[16], (1, n_class), jnp.float32)

    # --- fold/pad parameters for the fused kernel (lane-dense, bf16 matmuls) --
    # BN scales are folded directly into the matmul weights (per output channel
    # = per weight column); only the per-channel shift remains for the kernel.
    s1, h1 = fold_bn(g1, b1, m1, v1)
    s2, h2 = fold_bn(g2, b2, m2, v2)

    w1_folded = conv_weight_to_mat(w1) * s1                        # (9*Cin, C1)
    w1_mat = pad_to_shape(w1_folded, (K1p, C1p)).astype(jnp.bfloat16)
    h1p = pad_to_shape(h1, (1, C1p))

    w2_folded = conv_weight_to_taps(w2) * s2                       # (9, C1, C2)
    w2_taps = pad_to_shape(w2_folded, (9, C1p, C2p)).astype(jnp.bfloat16)
    h2p = pad_to_shape(h2, (1, C2p))

    # classifier BN folded into the Linear:  W' = s3 * W (row-scale),  b' = bc + h3 @ W
    s3v = g3 / jnp.sqrt(v3 + 1e-5)
    h3v = b3 - m3 * s3v
    wc_folded = pad_to_shape(s3v[:, None] * wc, (C2p, NCp)).astype(jnp.bfloat16)
    bc_folded = pad_to_shape(bc + h3v[None, :] @ wc, (1, NCp))

    # GAP as matmul: block-diagonal (B, B*H*W) averaging matrix (1/256 exact in bf16)
    HW = H * W
    pool_mat = (jnp.repeat(jnp.eye(B, dtype=jnp.float32), HW, axis=1) / HW
                ).astype(jnp.bfloat16)

    params = dict(
        w1_mat=w1_mat, h1=h1p,
        w2_taps=w2_taps, h2=h2p,
        pool_mat=pool_mat, wc_folded=wc_folded, bc_folded=bc_folded,
    )

    fwd = jax.jit(functools.partial(gradcam_forward, n_class=n_class, c2=C2))
    logits, feat = fwd(x, params)
    logits = jax.block_until_ready(logits)
    feat = jax.block_until_ready(feat)

    assert logits.shape == (B, n_class) and logits.dtype == jnp.float32
    assert feat.shape == (B, C2)
    assert bool(jnp.all(jnp.isfinite(logits)))
    assert bool(jnp.all(jnp.isfinite(feat)))
    print("KERNEL_OK")
</pallas_src>

<mosaic_0001>
module attributes {stable_mosaic.version = 11 : i64} {
  func.func @fused_forward_kernel(%arg0: i32, %arg1: memref<512x32xbf16, #tpu.memory_space<vmem>>, %arg2: memref<32x128xbf16, #tpu.memory_space<vmem>>, %arg3: memref<1x128xf32, #tpu.memory_space<vmem>>, %arg4: memref<9x128x128xbf16, #tpu.memory_space<vmem>>, %arg5: memref<1x128xf32, #tpu.memory_space<vmem>>, %arg6: memref<2x512xbf16, #tpu.memory_space<vmem>>, %arg7: memref<128x512xbf16, #tpu.memory_space<vmem>>, %arg8: memref<1x512xf32, #tpu.memory_space<vmem>>, %arg9: memref<2x512xf32, #tpu.memory_space<vmem>>, %arg10: memref<2x128xf32, #tpu.memory_space<vmem>>, %arg11: memref<2x18x18x128xf32, #tpu.memory_space<vmem>>) attributes {dimension_semantics = [#tpu.dimension_semantics<arbitrary>], iteration_bounds = array<i64: 1>, scalar_prefetch = 0 : i64, scratch_operands = 1 : i64, tpu.core_type = #tpu.core_type<tc>, window_params = [{pipeline_mode = #tpu.pipeline_mode<synchronous>, transform_indices = @transform_0, window_bounds = array<i64: 512, 32>}, {pipeline_mode = #tpu.pipeline_mode<synchronous>, transform_indices = @transform_1, window_bounds = array<i64: 32, 128>}, {pipeline_mode = #tpu.pipeline_mode<synchronous>, transform_indices = @transform_2, window_bounds = array<i64: 1, 128>}, {pipeline_mode = #tpu.pipeline_mode<synchronous>, transform_indices = @transform_3, window_bounds = array<i64: 9, 128, 128>}, {pipeline_mode = #tpu.pipeline_mode<synchronous>, transform_indices = @transform_4, window_bounds = array<i64: 1, 128>}, {pipeline_mode = #tpu.pipeline_mode<synchronous>, transform_indices = @transform_5, window_bounds = array<i64: 2, 512>}, {pipeline_mode = #tpu.pipeline_mode<synchronous>, transform_indices = @transform_6, window_bounds = array<i64: 128, 512>}, {pipeline_mode = #tpu.pipeline_mode<synchronous>, transform_indices = @transform_7, window_bounds = array<i64: 1, 512>}, {pipeline_mode = #tpu.pipeline_mode<synchronous>, transform_indices = @transform_8, window_bounds = array<i64: 2, 512>}, {pipeline_mode = #tpu.pipeline_mode<synchronous>, transform_indices = @transform_9, window_bounds = array<i64: 2, 128>}]} {
    %c0 = arith.constant 0 : index
    %c0_0 = arith.constant 0 : index
    %0 = vector.load %arg1[%c0, %c0_0] : memref<512x32xbf16, #tpu.memory_space<vmem>>, vector<512x32xbf16>
    %c0_1 = arith.constant 0 : index
    %c0_2 = arith.constant 0 : index
    %1 = vector.load %arg2[%c0_1, %c0_2] : memref<32x128xbf16, #tpu.memory_space<vmem>>, vector<32x128xbf16>
    %cst = arith.constant dense<0.000000e+00> : vector<512x128xf32>
    %2 = tpu.matmul %0, %1, %cst {dimension_numbers = #tpu.dot_dimension_numbers<[1], [0], [0], [1], [0, 0, 1, 1], [], []>} : vector<512x32xbf16>, vector<32x128xbf16>, vector<512x128xf32> -> vector<512x128xf32>
    %c0_3 = arith.constant 0 : index
    %c0_4 = arith.constant 0 : index
    %3 = vector.load %arg3[%c0_3, %c0_4] : memref<1x128xf32, #tpu.memory_space<vmem>>, vector<1x128xf32>
    %4 = vector.broadcast %3 : vector<1x128xf32> to vector<512x128xf32>
    %5 = arith.addf %2, %4 : vector<512x128xf32>
    %cst_5 = arith.constant 0.000000e+00 : f32
    %6 = vector.broadcast %cst_5 : f32 to vector<512x128xf32>
    %7 = arith.maximumf %5, %6 : vector<512x128xf32>
    %cst_6 = arith.constant 0.000000e+00 : f32
    %8 = vector.broadcast %cst_6 : f32 to vector<2x18x18x128xf32>
    %c0_7 = arith.constant 0 : index
    %c0_8 = arith.constant 0 : index
    %c0_9 = arith.constant 0 : index
    %c0_10 = arith.constant 0 : index
    %9 = vector.load %arg11[%c0_7, %c0_8, %c0_9, %c0_10] : memref<2x18x18x128xf32, #tpu.memory_space<vmem>>, vector<2x18x18x128xf32>
    tpu.vector_store %arg11[%c0_7, %c0_8, %c0_9, %c0_10], %8 {strides = array<i32>} : memref<2x18x18x128xf32, #tpu.memory_space<vmem>>, vector<2x18x18x128xf32>,
    %10 = vector.shape_cast %7 : vector<512x128xf32> to vector<2x16x16x128xf32>
    %c0_11 = arith.constant 0 : index
    %c1 = arith.constant 1 : index
    %c1_12 = arith.constant 1 : index
    %c0_13 = arith.constant 0 : index
    %11 = vector.load %arg11[%c0_11, %c1, %c1_12, %c0_13] : memref<2x18x18x128xf32, #tpu.memory_space<vmem>>, vector<2x16x16x128xf32>
    tpu.vector_store %arg11[%c0_11, %c1, %c1_12, %c0_13], %10 {strides = array<i32>} : memref<2x18x18x128xf32, #tpu.memory_space<vmem>>, vector<2x16x16x128xf32>,
    %cst_14 = arith.constant 0.000000e+00 : f32
    %12 = vector.broadcast %cst_14 : f32 to vector<512x128xf32>
    %c0_15 = arith.constant 0 : index
    %c0_16 = arith.constant 0 : index
    %c0_17 = arith.constant 0 : index
    %c0_18 = arith.constant 0 : index
    %13 = vector.load %arg11[%c0_15, %c0_16, %c0_17, %c0_18] : memref<2x18x18x128xf32, #tpu.memory_space<vmem>>, vector<2x16x16x128xf32>
    %14 = vector.shape_cast %13 : vector<2x16x16x128xf32> to vector<512x128xf32>
    %15 = arith.truncf %14 : vector<512x128xf32> to vector<512x128xbf16>
    %c0_19 = arith.constant 0 : index
    %c0_20 = arith.constant 0 : index
    %c0_21 = arith.constant 0 : index
    %16 = vector.load %arg4[%c0_19, %c0_20, %c0_21] : memref<9x128x128xbf16, #tpu.memory_space<vmem>>, vector<1x128x128xbf16>
    %17 = vector.shape_cast %16 : vector<1x128x128xbf16> to vector<128x128xbf16>
    %cst_22 = arith.constant dense<0.000000e+00> : vector<512x128xf32>
    %18 = tpu.matmul %15, %17, %cst_22 {dimension_numbers = #tpu.dot_dimension_numbers<[1], [0], [0], [1], [0, 0, 1, 1], [], []>} : vector<512x128xbf16>, vector<128x128xbf16>, vector<512x128xf32> -> vector<512x128xf32>
    %19 = arith.addf %12, %18 : vector<512x128xf32>
    %c0_23 = arith.constant 0 : index
    %c0_24 = arith.constant 0 : index
    %c1_25 = arith.constant 1 : index
    %c0_26 = arith.constant 0 : index
    %20 = vector.load %arg11[%c0_23, %c0_24, %c1_25, %c0_26] : memref<2x18x18x128xf32, #tpu.memory_space<vmem>>, vector<2x16x16x128xf32>
    %21 = vector.shape_cast %20 : vector<2x16x16x128xf32> to vector<512x128xf32>
    %22 = arith.truncf %21 : vector<512x128xf32> to vector<512x128xbf16>
    %c1_27 = arith.constant 1 : index
    %c0_28 = arith.constant 0 : index
    %c0_29 = arith.constant 0 : index
    %23 = vector.load %arg4[%c1_27, %c0_28, %c0_29] : memref<9x128x128xbf16, #tpu.memory_space<vmem>>, vector<1x128x128xbf16>
    %24 = vector.shape_cast %23 : vector<1x128x128xbf16> to vector<128x128xbf16>
    %cst_30 = arith.constant dense<0.000000e+00> : vector<512x128xf32>
    %25 = tpu.matmul %22, %24, %cst_30 {dimension_numbers = #tpu.dot_dimension_numbers<[1], [0], [0], [1], [0, 0, 1, 1], [], []>} : vector<512x128xbf16>, vector<128x128xbf16>, vector<512x128xf32> -> vector<512x128xf32>
    %26 = arith.addf %19, %25 : vector<512x128xf32>
    %c0_31 = arith.constant 0 : index
    %c0_32 = arith.constant 0 : index
    %c2 = arith.constant 2 : index
    %c0_33 = arith.constant 0 : index
    %27 = vector.load %arg11[%c0_31, %c0_32, %c2, %c0_33] : memref<2x18x18x128xf32, #tpu.memory_space<vmem>>, vector<2x16x16x128xf32>
    %28 = vector.shape_cast %27 : vector<2x16x16x128xf32> to vector<512x128xf32>
    %29 = arith.truncf %28 : vector<512x128xf32> to vector<512x128xbf16>
    %c2_34 = arith.constant 2 : index
    %c0_35 = arith.constant 0 : index
    %c0_36 = arith.constant 0 : index
    %30 = vector.load %arg4[%c2_34, %c0_35, %c0_36] : memref<9x128x128xbf16, #tpu.memory_space<vmem>>, vector<1x128x128xbf16>
    %31 = vector.shape_cast %30 : vector<1x128x128xbf16> to vector<128x128xbf16>
    %cst_37 = arith.constant dense<0.000000e+00> : vector<512x128xf32>
    %32 = tpu.matmul %29, %31, %cst_37 {dimension_numbers = #tpu.dot_dimension_numbers<[1], [0], [0], [1], [0, 0, 1, 1], [], []>} : vector<512x128xbf16>, vector<128x128xbf16>, vector<512x128xf32> -> vector<512x128xf32>
    %33 = arith.addf %26, %32 : vector<512x128xf32>
    %c0_38 = arith.constant 0 : index
    %c1_39 = arith.constant 1 : index
    %c0_40 = arith.constant 0 : index
    %c0_41 = arith.constant 0 : index
    %34 = vector.load %arg11[%c0_38, %c1_39, %c0_40, %c0_41] : memref<2x18x18x128xf32, #tpu.memory_space<vmem>>, vector<2x16x16x128xf32>
    %35 = vector.shape_cast %34 : vector<2x16x16x128xf32> to vector<512x128xf32>
    %36 = arith.truncf %35 : vector<512x128xf32> to vector<512x128xbf16>
    %c3 = arith.constant 3 : index
    %c0_42 = arith.constant 0 : index
    %c0_43 = arith.constant 0 : index
    %37 = vector.load %arg4[%c3, %c0_42, %c0_43] : memref<9x128x128xbf16, #tpu.memory_space<vmem>>, vector<1x128x128xbf16>
    %38 = vector.shape_cast %37 : vector<1x128x128xbf16> to vector<128x128xbf16>
    %cst_44 = arith.constant dense<0.000000e+00> : vector<512x128xf32>
    %39 = tpu.matmul %36, %38, %cst_44 {dimension_numbers = #tpu.dot_dimension_numbers<[1], [0], [0], [1], [0, 0, 1, 1], [], []>} : vector<512x128xbf16>, vector<128x128xbf16>, vector<512x128xf32> -> vector<512x128xf32>
    %40 = arith.addf %33, %39 : vector<512x128xf32>
    %c0_45 = arith.constant 0 : index
    %c1_46 = arith.constant 1 : index
    %c1_47 = arith.constant 1 : index
    %c0_48 = arith.constant 0 : index
    %41 = vector.load %arg11[%c0_45, %c1_46, %c1_47, %c0_48] : memref<2x18x18x128xf32, #tpu.memory_space<vmem>>, vector<2x16x16x128xf32>
    %42 = vector.shape_cast %41 : vector<2x16x16x128xf32> to vector<512x128xf32>
    %43 = arith.truncf %42 : vector<512x128xf32> to vector<512x128xbf16>
    %c4 = arith.constant 4 : index
    %c0_49 = arith.constant 0 : index
    %c0_50 = arith.constant 0 : index
    %44 = vector.load %arg4[%c4, %c0_49, %c0_50] : memref<9x128x128xbf16, #tpu.memory_space<vmem>>, vector<1x128x128xbf16>
    %45 = vector.shape_cast %44 : vector<1x128x128xbf16> to vector<128x128xbf16>
    %cst_51 = arith.constant dense<0.000000e+00> : vector<512x128xf32>
    %46 = tpu.matmul %43, %45, %cst_51 {dimension_numbers = #tpu.dot_dimension_numbers<[1], [0], [0], [1], [0, 0, 1, 1], [], []>} : vector<512x128xbf16>, vector<128x128xbf16>, vector<512x128xf32> -> vector<512x128xf32>
    %47 = arith.addf %40, %46 : vector<512x128xf32>
    %c0_52 = arith.constant 0 : index
    %c1_53 = arith.constant 1 : index
    %c2_54 = arith.constant 2 : index
    %c0_55 = arith.constant 0 : index
    %48 = vector.load %arg11[%c0_52, %c1_53, %c2_54, %c0_55] : memref<2x18x18x128xf32, #tpu.memory_space<vmem>>, vector<2x16x16x128xf32>
    %49 = vector.shape_cast %48 : vector<2x16x16x128xf32> to vector<512x128xf32>
    %50 = arith.truncf %49 : vector<512x128xf32> to vector<512x128xbf16>
    %c5 = arith.constant 5 : index
    %c0_56 = arith.constant 0 : index
    %c0_57 = arith.constant 0 : index
    %51 = vector.load %arg4[%c5, %c0_56, %c0_57] : memref<9x128x128xbf16, #tpu.memory_space<vmem>>, vector<1x128x128xbf16>
    %52 = vector.shape_cast %51 : vector<1x128x128xbf16> to vector<128x128xbf16>
    %cst_58 = arith.constant dense<0.000000e+00> : vector<512x128xf32>
    %53 = tpu.matmul %50, %52, %cst_58 {dimension_numbers = #tpu.dot_dimension_numbers<[1], [0], [0], [1], [0, 0, 1, 1], [], []>} : vector<512x128xbf16>, vector<128x128xbf16>, vector<512x128xf32> -> vector<512x128xf32>
    %54 = arith.addf %47, %53 : vector<512x128xf32>
    %c0_59 = arith.constant 0 : index
    %c2_60 = arith.constant 2 : index
    %c0_61 = arith.constant 0 : index
    %c0_62 = arith.constant 0 : index
    %55 = vector.load %arg11[%c0_59, %c2_60, %c0_61, %c0_62] : memref<2x18x18x128xf32, #tpu.memory_space<vmem>>, vector<2x16x16x128xf32>
    %56 = vector.shape_cast %55 : vector<2x16x16x128xf32> to vector<512x128xf32>
    %57 = arith.truncf %56 : vector<512x128xf32> to vector<512x128xbf16>
    %c6 = arith.constant 6 : index
    %c0_63 = arith.constant 0 : index
    %c0_64 = arith.constant 0 : index
    %58 = vector.load %arg4[%c6, %c0_63, %c0_64] : memref<9x128x128xbf16, #tpu.memory_space<vmem>>, vector<1x128x128xbf16>
    %59 = vector.shape_cast %58 : vector<1x128x128xbf16> to vector<128x128xbf16>
    %cst_65 = arith.constant dense<0.000000e+00> : vector<512x128xf32>
    %60 = tpu.matmul %57, %59, %cst_65 {dimension_numbers = #tpu.dot_dimension_numbers<[1], [0], [0], [1], [0, 0, 1, 1], [], []>} : vector<512x128xbf16>, vector<128x128xbf16>, vector<512x128xf32> -> vector<512x128xf32>
    %61 = arith.addf %54, %60 : vector<512x128xf32>
    %c0_66 = arith.constant 0 : index
    %c2_67 = arith.constant 2 : index
    %c1_68 = arith.constant 1 : index
    %c0_69 = arith.constant 0 : index
    %62 = vector.load %arg11[%c0_66, %c2_67, %c1_68, %c0_69] : memref<2x18x18x128xf32, #tpu.memory_space<vmem>>, vector<2x16x16x128xf32>
    %63 = vector.shape_cast %62 : vector<2x16x16x128xf32> to vector<512x128xf32>
    %64 = arith.truncf %63 : vector<512x128xf32> to vector<512x128xbf16>
    %c7 = arith.constant 7 : index
    %c0_70 = arith.constant 0 : index
    %c0_71 = arith.constant 0 : index
    %65 = vector.load %arg4[%c7, %c0_70, %c0_71] : memref<9x128x128xbf16, #tpu.memory_space<vmem>>, vector<1x128x128xbf16>
    %66 = vector.shape_cast %65 : vector<1x128x128xbf16> to vector<128x128xbf16>
    %cst_72 = arith.constant dense<0.000000e+00> : vector<512x128xf32>
    %67 = tpu.matmul %64, %66, %cst_72 {dimension_numbers = #tpu.dot_dimension_numbers<[1], [0], [0], [1], [0, 0, 1, 1], [], []>} : vector<512x128xbf16>, vector<128x128xbf16>, vector<512x128xf32> -> vector<512x128xf32>
    %68 = arith.addf %61, %67 : vector<512x128xf32>
    %c0_73 = arith.constant 0 : index
    %c2_74 = arith.constant 2 : index
    %c2_75 = arith.constant 2 : index
    %c0_76 = arith.constant 0 : index
    %69 = vector.load %arg11[%c0_73, %c2_74, %c2_75, %c0_76] : memref<2x18x18x128xf32, #tpu.memory_space<vmem>>, vector<2x16x16x128xf32>
    %70 = vector.shape_cast %69 : vector<2x16x16x128xf32> to vector<512x128xf32>
    %71 = arith.truncf %70 : vector<512x128xf32> to vector<512x128xbf16>
    %c8 = arith.constant 8 : index
    %c0_77 = arith.constant 0 : index
    %c0_78 = arith.constant 0 : index
    %72 = vector.load %arg4[%c8, %c0_77, %c0_78] : memref<9x128x128xbf16, #tpu.memory_space<vmem>>, vector<1x128x128xbf16>
    %73 = vector.shape_cast %72 : vector<1x128x128xbf16> to vector<128x128xbf16>
    %cst_79 = arith.constant dense<0.000000e+00> : vector<512x128xf32>
    %74 = tpu.matmul %71, %73, %cst_79 {dimension_numbers = #tpu.dot_dimension_numbers<[1], [0], [0], [1], [0, 0, 1, 1], [], []>} : vector<512x128xbf16>, vector<128x128xbf16>, vector<512x128xf32> -> vector<512x128xf32>
    %75 = arith.addf %68, %74 : vector<512x128xf32>
    %c0_80 = arith.constant 0 : index
    %c0_81 = arith.constant 0 : index
    %76 = vector.load %arg5[%c0_80, %c0_81] : memref<1x128xf32, #tpu.memory_space<vmem>>, vector<1x128xf32>
    %77 = vector.broadcast %76 : vector<1x128xf32> to vector<512x128xf32>
    %78 = arith.addf %75, %77 : vector<512x128xf32>
    %cst_82 = arith.constant 0.000000e+00 : f32
    %79 = vector.broadcast %cst_82 : f32 to vector<512x128xf32>
    %80 = arith.maximumf %78, %79 : vector<512x128xf32>
    %c0_83 = arith.constant 0 : index
    %c0_84 = arith.constant 0 : index
    %81 = vector.load %arg6[%c0_83, %c0_84] : memref<2x512xbf16, #tpu.memory_space<vmem>>, vector<2x512xbf16>
    %82 = arith.truncf %80 : vector<512x128xf32> to vector<512x128xbf16>
    %cst_85 = arith.constant dense<0.000000e+00> : vector<2x128xf32>
    %83 = tpu.matmul %81, %82, %cst_85 {dimension_numbers = #tpu.dot_dimension_numbers<[1], [0], [0], [1], [0, 0, 1, 1], [], []>} : vector<2x512xbf16>, vector<512x128xbf16>, vector<2x128xf32> -> vector<2x128xf32>
    %c0_86 = arith.constant 0 : index
    %c0_87 = arith.constant 0 : index
    %84 = vector.load %arg10[%c0_86, %c0_87] : memref<2x128xf32, #tpu.memory_space<vmem>>, vector<2x128xf32>
    tpu.vector_store %arg10[%c0_86, %c0_87], %83 {strides = array<i32>} : memref<2x128xf32, #tpu.memory_space<vmem>>, vector<2x128xf32>,
    %85 = arith.truncf %83 : vector<2x128xf32> to vector<2x128xbf16>
    %c0_88 = arith.constant 0 : index
    %c0_89 = arith.constant 0 : index
    %86 = vector.load %arg7[%c0_88, %c0_89] : memref<128x512xbf16, #tpu.memory_space<vmem>>, vector<128x512xbf16>
    %cst_90 = arith.constant dense<0.000000e+00> : vector<2x512xf32>
    %87 = tpu.matmul %85, %86, %cst_90 {dimension_numbers = #tpu.dot_dimension_numbers<[1], [0], [0], [1], [0, 0, 1, 1], [], []>} : vector<2x128xbf16>, vector<128x512xbf16>, vector<2x512xf32> -> vector<2x512xf32>
    %c0_91 = arith.constant 0 : index
    %c0_92 = arith.constant 0 : index
    %88 = vector.load %arg8[%c0_91, %c0_92] : memref<1x512xf32, #tpu.memory_space<vmem>>, vector<1x512xf32>
    %89 = vector.broadcast %88 : vector<1x512xf32> to vector<2x512xf32>
    %90 = arith.addf %87, %89 : vector<2x512xf32>
    %c0_93 = arith.constant 0 : index
    %c0_94 = arith.constant 0 : index
    %91 = vector.load %arg9[%c0_93, %c0_94] : memref<2x512xf32, #tpu.memory_space<vmem>>, vector<2x512xf32>
    tpu.vector_store %arg9[%c0_93, %c0_94], %90 {strides = array<i32>} : memref<2x512xf32, #tpu.memory_space<vmem>>, vector<2x512xf32>,
    return
  }
  func.func @transform_0(%arg0: i32) -> (i32, i32) {
    %c0_i32 = arith.constant 0 : i32
    %c0_i32_0 = arith.constant 0 : i32
    %c0_i32_1 = arith.constant 0 : i32
    return %c0_i32, %c0_i32_0 : i32, i32
  }
  func.func @transform_1(%arg0: i32) -> (i32, i32) {
    %c0_i32 = arith.constant 0 : i32
    %c0_i32_0 = arith.constant 0 : i32
    %c0_i32_1 = arith.constant 0 : i32
    return %c0_i32, %c0_i32_0 : i32, i32
  }
  func.func @transform_2(%arg0: i32) -> (i32, i32) {
    %c0_i32 = arith.constant 0 : i32
    %c0_i32_0 = arith.constant 0 : i32
    %c0_i32_1 = arith.constant 0 : i32
    return %c0_i32, %c0_i32_0 : i32, i32
  }
  func.func @transform_3(%arg0: i32) -> (i32, i32, i32) {
    %c0_i32 = arith.constant 0 : i32
    %c0_i32_0 = arith.constant 0 : i32
    %c0_i32_1 = arith.constant 0 : i32
    %c0_i32_2 = arith.constant 0 : i32
    return %c0_i32, %c0_i32_0, %c0_i32_1 : i32, i32, i32
  }
  func.func @transform_4(%arg0: i32) -> (i32, i32) {
    %c0_i32 = arith.constant 0 : i32
    %c0_i32_0 = arith.constant 0 : i32
    %c0_i32_1 = arith.constant 0 : i32
    return %c0_i32, %c0_i32_0 : i32, i32
  }
  func.func @transform_5(%arg0: i32) -> (i32, i32) {
    %c0_i32 = arith.constant 0 : i32
    %c0_i32_0 = arith.constant 0 : i32
    %c0_i32_1 = arith.constant 0 : i32
    return %c0_i32, %c0_i32_0 : i32, i32
  }
  func.func @transform_6(%arg0: i32) -> (i32, i32) {
    %c0_i32 = arith.constant 0 : i32
    %c0_i32_0 = arith.constant 0 : i32
    %c0_i32_1 = arith.constant 0 : i32
    return %c0_i32, %c0_i32_0 : i32, i32
  }
  func.func @transform_7(%arg0: i32) -> (i32, i32) {
    %c0_i32 = arith.constant 0 : i32
    %c0_i32_0 = arith.constant 0 : i32
    %c0_i32_1 = arith.constant 0 : i32
    return %c0_i32, %c0_i32_0 : i32, i32
  }
  func.func @transform_8(%arg0: i32) -> (i32, i32) {
    %c0_i32 = arith.constant 0 : i32
    %c0_i32_0 = arith.constant 0 : i32
    %c0_i32_1 = arith.constant 0 : i32
    return %c0_i32, %c0_i32_0 : i32, i32
  }
  func.func @transform_9(%arg0: i32) -> (i32, i32) {
    %c0_i32 = arith.constant 0 : i32
    %c0_i32_0 = arith.constant 0 : i32
    %c0_i32_1 = arith.constant 0 : i32
    return %c0_i32, %c0_i32_0 : i32, i32
  }
}

</mosaic_0001>

<llo_original>
// kernel: gradcam_forward.1
$region0: #{gradcam_forward.1}
  #allocation0 [shape = 'u32[]', space=smem, size = 0x4, offset = 0x4, fixed_abs, tag = 'smem constant byte address 0x4 - core index']
  #allocation1 [shape = 'u32[72,128]{1,0:T(1,128)}', space=vmem, size = 0x9000, scoped, tag = 'internal scratch']
  #allocation2 [shape = 'f32[2,18,18,128]{3,2,1,0:T(8,128)}', space=vmem, size = 0x6c000, scoped, tag = 'scratch operand']
  %s0 = inlined_call_operand.vmem [shape: bf16[512,32], index: 0, kind: input, shape index: {}]
  %s1 = inlined_call_operand.vmem [shape: bf16[32,128], index: 1, kind: input, shape index: {}]
  %s2 = inlined_call_operand.vmem [shape: f32[1,128], index: 2, kind: input, shape index: {}]
  %s3 = inlined_call_operand.vmem [shape: bf16[9,128,128], index: 3, kind: input, shape index: {}]
  %s4 = inlined_call_operand.vmem [shape: f32[1,128], index: 4, kind: input, shape index: {}]
  %s5 = inlined_call_operand.vmem [shape: bf16[2,512], index: 5, kind: input, shape index: {}]
  %s6 = inlined_call_operand.vmem [shape: bf16[128,512], index: 6, kind: input, shape index: {}]
  %s7 = inlined_call_operand.vmem [shape: f32[1,512], index: 7, kind: input, shape index: {}]
  %s8 = inlined_call_operand.hbm [shape: f32[2,512], index: 8, kind: output, shape index: {0}]
  %s9 = inlined_call_operand.hbm [shape: f32[2,128], index: 9, kind: output, shape index: {1}]
  %10 = xla_tuple %s8, %s9
  %s11 = sld [smem:[#allocation0]]
  $region50: #{gradcam_forward.1} parent=0
    _
  %s13 = ssub.s32 1, %s11
  %s14 = scalar_select 0, %s13, %s11
  $region1: #{gradcam_forward.1} parent=0
    #allocation3 [shape = 'u8[4096]{0}', space=vmem, size = 0x1000, scoped, tag = 'output window, operand 0, single buffered']
    #allocation4 [shape = 's32[1]{0}', space=sflag, size = 0x4, scoped, tag = 'scoped memory for gradcam_forward.1']
    #allocation5 [shape = 'u8[1024]{0}', space=vmem, size = 0x400, scoped, tag = 'output window, operand 1, single buffered']
    #allocation6 [shape = 's32[1]{0}', space=sflag, size = 0x4, scoped, tag = 'scoped memory for gradcam_forward.1']
    %15 = vsyncpa [#allocation4], 0
    %16 = vsyncpa [#allocation6], 0
    // Predicated region
    $region2: #{gradcam_forward.1} parent=1 // pred_check
      _
    $region3: #{gradcam_forward.1} parent=1 // pred_check_branch
      %18 = sbr.rel (0) target = $region5
    $region4: #{gradcam_forward.1} parent=1 // pred_region
      _
    $region5: #{gradcam_forward.1} parent=1 // pred_fallthru
      _
    // Predicated region
    $region6: #{gradcam_forward.1} parent=1 // pred_check
      _
    $region7: #{gradcam_forward.1} parent=1 // pred_check_branch
      %20 = sbr.rel (0) target = $region9
    $region8: #{gradcam_forward.1} parent=1 // pred_region
      _
    $region9: #{gradcam_forward.1} parent=1 // pred_fallthru
      _
    // Predicated region
    $region10: #{gradcam_forward.1} parent=1 // pred_check
      _
    $region11: #{gradcam_forward.1} parent=1 // pred_check_branch
      %22 = sbr.rel (0) target = $region13
    $region12: #{gradcam_forward.1} parent=1 // pred_region
      _
    $region13: #{gradcam_forward.1} parent=1 // pred_fallthru
      _
    // Predicated region
    $region14: #{gradcam_forward.1} parent=1 // pred_check
      _
    $region15: #{gradcam_forward.1} parent=1 // pred_check_branch
      %24 = sbr.rel (0) target = $region17
    $region16: #{gradcam_forward.1} parent=1 // pred_region
      _
    $region17: #{gradcam_forward.1} parent=1 // pred_fallthru
      _
    // Predicated region
    $region18: #{gradcam_forward.1} parent=1 // pred_check
      _
    $region19: #{gradcam_forward.1} parent=1 // pred_check_branch
      %26 = sbr.rel (0) target = $region21
    $region20: #{gradcam_forward.1} parent=1 // pred_region
      _
    $region21: #{gradcam_forward.1} parent=1 // pred_fallthru
      _
    // Predicated region
    $region22: #{gradcam_forward.1} parent=1 // pred_check
      _
    $region23: #{gradcam_forward.1} parent=1 // pred_check_branch
      %28 = sbr.rel (0) target = $region25
    $region24: #{gradcam_forward.1} parent=1 // pred_region
      _
    $region25: #{gradcam_forward.1} parent=1 // pred_fallthru
      _
    // Predicated region
    $region26: #{gradcam_forward.1} parent=1 // pred_check
      _
    $region27: #{gradcam_forward.1} parent=1 // pred_check_branch
      %30 = sbr.rel (0) target = $region29
    $region28: #{gradcam_forward.1} parent=1 // pred_region
      _
    $region29: #{gradcam_forward.1} parent=1 // pred_fallthru
      _
    // Predicated region
    $region30: #{gradcam_forward.1} parent=1 // pred_check
      _
    $region31: #{gradcam_forward.1} parent=1 // pred_check_branch
      %32 = sbr.rel (0) target = $region33
    $region32: #{gradcam_forward.1} parent=1 // pred_region
      _
    $region33: #{gradcam_forward.1} parent=1 // pred_fallthru
      _
    %v34 = vld [vmem:[%s0] sm:$0xf]
    %v35 = vld [vmem:[%s0 + $0x4] sm:$0xf]
    %v36 = vld [vmem:[%s0 + $0x8] sm:$0xf]
    %v37 = vld [vmem:[%s0 + $0xc] sm:$0xf]
    %v38 = vld [vmem:[%s0 + $0x10] sm:$0xf]
    %v39 = vld [vmem:[%s0 + $0x14] sm:$0xf]
    %v40 = vld [vmem:[%s0 + $0x18] sm:$0xf]
    %v41 = vld [vmem:[%s0 + $0x1c] sm:$0xf]
    %v42 = vld [vmem:[%s0 + $0x20] sm:$0xf]
    %v43 = vld [vmem:[%s0 + $0x24] sm:$0xf]
    %v44 = vld [vmem:[%s0 + $0x28] sm:$0xf]
    %v45 = vld [vmem:[%s0 + $0x2c] sm:$0xf]
    %v46 = vld [vmem:[%s0 + $0x30] sm:$0xf]
    %v47 = vld [vmem:[%s0 + $0x34] sm:$0xf]
    %v48 = vld [vmem:[%s0 + $0x38] sm:$0xf]
    %v49 = vld [vmem:[%s0 + $0x3c] sm:$0xf]
    %v50 = vld [vmem:[%s0 + $0x40] sm:$0xf]
    %v51 = vld [vmem:[%s0 + $0x44] sm:$0xf]
    %v52 = vld [vmem:[%s0 + $0x48] sm:$0xf]
    %v53 = vld [vmem:[%s0 + $0x4c] sm:$0xf]
    %v54 = vld [vmem:[%s0 + $0x50] sm:$0xf]
    %v55 = vld [vmem:[%s0 + $0x54] sm:$0xf]
    %v56 = vld [vmem:[%s0 + $0x58] sm:$0xf]
    %v57 = vld [vmem:[%s0 + $0x5c] sm:$0xf]
    %v58 = vld [vmem:[%s0 + $0x60] sm:$0xf]
    %v59 = vld [vmem:[%s0 + $0x64] sm:$0xf]
    %v60 = vld [vmem:[%s0 + $0x68] sm:$0xf]
    %v61 = vld [vmem:[%s0 + $0x6c] sm:$0xf]
    %v62 = vld [vmem:[%s0 + $0x70] sm:$0xf]
    %v63 = vld [vmem:[%s0 + $0x74] sm:$0xf]
    %v64 = vld [vmem:[%s0 + $0x78] sm:$0xf]
    %v65 = vld [vmem:[%s0 + $0x7c] sm:$0xf]
    %v66 = vld [vmem:[%s0 + $0x80] sm:$0xf]
    %v67 = vld [vmem:[%s0 + $0x84] sm:$0xf]
    %v68 = vld [vmem:[%s0 + $0x88] sm:$0xf]
    %v69 = vld [vmem:[%s0 + $0x8c] sm:$0xf]
    %v70 = vld [vmem:[%s0 + $0x90] sm:$0xf]
    %v71 = vld [vmem:[%s0 + $0x94] sm:$0xf]
    %v72 = vld [vmem:[%s0 + $0x98] sm:$0xf]
    %v73 = vld [vmem:[%s0 + $0x9c] sm:$0xf]
    %v74 = vld [vmem:[%s0 + $0xa0] sm:$0xf]
    %v75 = vld [vmem:[%s0 + $0xa4] sm:$0xf]
    %v76 = vld [vmem:[%s0 + $0xa8] sm:$0xf]
    %v77 = vld [vmem:[%s0 + $0xac] sm:$0xf]
    %v78 = vld [vmem:[%s0 + $0xb0] sm:$0xf]
    %v79 = vld [vmem:[%s0 + $0xb4] sm:$0xf]
    %v80 = vld [vmem:[%s0 + $0xb8] sm:$0xf]
    %v81 = vld [vmem:[%s0 + $0xbc] sm:$0xf]
    %v82 = vld [vmem:[%s0 + $0xc0] sm:$0xf]
    %v83 = vld [vmem:[%s0 + $0xc4] sm:$0xf]
    %v84 = vld [vmem:[%s0 + $0xc8] sm:$0xf]
    %v85 = vld [vmem:[%s0 + $0xcc] sm:$0xf]
    %v86 = vld [vmem:[%s0 + $0xd0] sm:$0xf]
    %v87 = vld [vmem:[%s0 + $0xd4] sm:$0xf]
    %v88 = vld [vmem:[%s0 + $0xd8] sm:$0xf]
    %v89 = vld [vmem:[%s0 + $0xdc] sm:$0xf]
    %v90 = vld [vmem:[%s0 + $0xe0] sm:$0xf]
    %v91 = vld [vmem:[%s0 + $0xe4] sm:$0xf]
    %v92 = vld [vmem:[%s0 + $0xe8] sm:$0xf]
    %v93 = vld [vmem:[%s0 + $0xec] sm:$0xf]
    %v94 = vld [vmem:[%s0 + $0xf0] sm:$0xf]
    %v95 = vld [vmem:[%s0 + $0xf4] sm:$0xf]
    %v96 = vld [vmem:[%s0 + $0xf8] sm:$0xf]
    %v97 = vld [vmem:[%s0 + $0xfc] sm:$0xf]
    %v98 = vld [vmem:[%s1] sm:$0xf]
    %v99 = vld [vmem:[%s1 + $0x4] sm:$0xf]
    %v100 = vld [vmem:[%s1 + $0x8] sm:$0xf]
    %v101 = vld [vmem:[%s1 + $0xc] sm:$0xf]
    %v102 = vld [vmem:[%s2] sm:$0x1]
    %v104 = vperm.slane %v102, 0
    %v170 = vunpack.c.l.b16 %v34
    %v171 = vunpack.c.l.b16 %v35
    %v172 = vunpack.c.l.b16 %v36
    %v173 = vunpack.c.l.b16 %v37
    %v174 = vunpack.c.l.b16 %v38
    %v175 = vunpack.c.l.b16 %v39
    %v176 = vunpack.c.l.b16 %v40
    %v177 = vunpack.c.l.b16 %v41
    %v178 = vunpack.c.l.b16 %v42
    %v179 = vunpack.c.l.b16 %v43
    %v180 = vunpack.c.l.b16 %v44
    %v181 = vunpack.c.l.b16 %v45
    %v182 = vunpack.c.l.b16 %v46
    %v183 = vunpack.c.l.b16 %v47
    %v184 = vunpack.c.l.b16 %v48
    %v185 = vunpack.c.l.b16 %v49
    %v186 = vunpack.c.l.b16 %v50
    %v187 = vunpack.c.l.b16 %v51
    %v188 = vunpack.c.l.b16 %v52
    %v189 = vunpack.c.l.b16 %v53
    %v190 = vunpack.c.l.b16 %v54
    %v191 = vunpack.c.l.b16 %v55
    %v192 = vunpack.c.l.b16 %v56
    %v193 = vunpack.c.l.b16 %v57
    %v194 = vunpack.c.l.b16 %v58
    %v195 = vunpack.c.l.b16 %v59
    %v196 = vunpack.c.l.b16 %v60
    %v197 = vunpack.c.l.b16 %v61
    %v198 = vunpack.c.l.b16 %v62
    %v199 = vunpack.c.l.b16 %v63
    %v200 = vunpack.c.l.b16 %v64
    %v201 = vunpack.c.l.b16 %v65
    %v202 = vunpack.c.l.b16 %v66
    %v203 = vunpack.c.l.b16 %v67
    %v204 = vunpack.c.l.b16 %v68
    %v205 = vunpack.c.l.b16 %v69
    %v206 = vunpack.c.l.b16 %v70
    %v207 = vunpack.c.l.b16 %v71
    %v208 = vunpack.c.l.b16 %v72
    %v209 = vunpack.c.l.b16 %v73
    %v210 = vunpack.c.l.b16 %v74
    %v211 = vunpack.c.l.b16 %v75
    %v212 = vunpack.c.l.b16 %v76
    %v213 = vunpack.c.l.b16 %v77
    %v214 = vunpack.c.l.b16 %v78
    %v215 = vunpack.c.l.b16 %v79
    %v216 = vunpack.c.l.b16 %v80
    %v217 = vunpack.c.l.b16 %v81
    %v218 = vunpack.c.l.b16 %v82
    %v219 = vunpack.c.l.b16 %v83
    %v220 = vunpack.c.l.b16 %v84
    %v221 = vunpack.c.l.b16 %v85
    %v222 = vunpack.c.l.b16 %v86
    %v223 = vunpack.c.l.b16 %v87
    %v224 = vunpack.c.l.b16 %v88
    %v225 = vunpack.c.l.b16 %v89
    %v226 = vunpack.c.l.b16 %v90
    %v227 = vunpack.c.l.b16 %v91
    %v228 = vunpack.c.l.b16 %v92
    %v229 = vunpack.c.l.b16 %v93
    %v230 = vunpack.c.l.b16 %v94
    %v231 = vunpack.c.l.b16 %v95
    %v232 = vunpack.c.l.b16 %v96
    %v233 = vunpack.c.l.b16 %v97
    %v234 = vpack.c.b16 %v171, %v170
    %v235 = vpack.c.b16 %v173, %v172
    %v236 = vpack.c.b16 %v175, %v174
    %v237 = vpack.c.b16 %v177, %v176
    %v238 = vpack.c.b16 %v179, %v178
    %v239 = vpack.c.b16 %v181, %v180
    %v240 = vpack.c.b16 %v183, %v182
    %v241 = vpack.c.b16 %v185, %v184
    %v242 = vpack.c.b16 %v187, %v186
    %v243 = vpack.c.b16 %v189, %v188
    %v244 = vpack.c.b16 %v191, %v190
    %v245 = vpack.c.b16 %v193, %v192
    %v246 = vpack.c.b16 %v195, %v194
    %v247 = vpack.c.b16 %v197, %v196
    %v248 = vpack.c.b16 %v199, %v198
    %v249 = vpack.c.b16 %v201, %v200
    %v250 = vpack.c.b16 %v203, %v202
    %v251 = vpack.c.b16 %v205, %v204
    %v252 = vpack.c.b16 %v207, %v206
    %v253 = vpack.c.b16 %v209, %v208
    %v254 = vpack.c.b16 %v211, %v210
    %v255 = vpack.c.b16 %v213, %v212
    %v256 = vpack.c.b16 %v215, %v214
    %v257 = vpack.c.b16 %v217, %v216
    %v258 = vpack.c.b16 %v219, %v218
    %v259 = vpack.c.b16 %v221, %v220
    %v260 = vpack.c.b16 %v223, %v222
    %v261 = vpack.c.b16 %v225, %v224
    %v262 = vpack.c.b16 %v227, %v226
    %v263 = vpack.c.b16 %v229, %v228
    %v264 = vpack.c.b16 %v231, %v230
    %v265 = vpack.c.b16 %v233, %v232
    %v270 = vunpack.c.l.b16 %v98
    %v271 = vunpack.c.l.b16 %v99
    %v272 = vunpack.c.l.b16 %v100
    %v273 = vunpack.c.l.b16 %v101
    %v274 = vpack.c.b16 %v271, %v270
    %v275 = vpack.c.b16 %v273, %v272
    %vm278 = vcmask 261120
    %v280 = vsel %vm278, %v234, 0
    %v283 = vsel %vm278, %v235, 0
    %v286 = vsel %vm278, %v236, 0
    %v289 = vsel %vm278, %v237, 0
    %v292 = vsel %vm278, %v238, 0
    %v295 = vsel %vm278, %v239, 0
    %v298 = vsel %vm278, %v240, 0
    %v301 = vsel %vm278, %v241, 0
    %v304 = vsel %vm278, %v242, 0
    %v307 = vsel %vm278, %v243, 0
    %v310 = vsel %vm278, %v244, 0
    %v313 = vsel %vm278, %v245, 0
    %v316 = vsel %vm278, %v246, 0
    %v319 = vsel %vm278, %v247, 0
    %v322 = vsel %vm278, %v248, 0
    %v325 = vsel %vm278, %v249, 0
    %v328 = vsel %vm278, %v250, 0
    %v331 = vsel %vm278, %v251, 0
    %v334 = vsel %vm278, %v252, 0
    %v337 = vsel %vm278, %v253, 0
    %v340 = vsel %vm278, %v254, 0
    %v343 = vsel %vm278, %v255, 0
    %v346 = vsel %vm278, %v256, 0
    %v349 = vsel %vm278, %v257, 0
    %v352 = vsel %vm278, %v258, 0
    %v355 = vsel %vm278, %v259, 0
    %v358 = vsel %vm278, %v260, 0
    %v361 = vsel %vm278, %v261, 0
    %v364 = vsel %vm278, %v262, 0
    %v367 = vsel %vm278, %v263, 0
    %v370 = vsel %vm278, %v264, 0
    %v373 = vsel %vm278, %v265, 0
    %375 = vmatpush.bf16.msra.mxu0 0
    %376 = vmatpush.bf16.msra.mxu0 0
    %377 = vmatpush.bf16.msra.mxu0 0
    %378 = vmatpush.bf16.msra.mxu0 0
    %379 = vmatpush.bf16.msra.mxu0 0
    %380 = vmatpush.bf16.msra.mxu0 0
    %381 = vmatpush.bf16.msra.mxu0 %v275
    %382 = vmatpush.bf16.msra.mxu0 %v274
    %383 = vmatmul.bf16.gmra.mxu0 %v280
    %v384 = vpop.f32.mrf.mxu0
    %v385 = vadd.f32 %v104, %v384
    %v386 = vpop.f32.mrf.mxu0
    %v387 = vadd.f32 %v104, %v386
    %388 = vmatmul.bf16.gmra.mxu0 %v283
    %v389 = vpop.f32.mrf.mxu0
    %v390 = vadd.f32 %v104, %v389
    %v391 = vpop.f32.mrf.mxu0
    %v392 = vadd.f32 %v104, %v391
    %393 = vmatmul.bf16.gmra.mxu0 %v286
    %v394 = vpop.f32.mrf.mxu0
    %v395 = vadd.f32 %v104, %v394
    %v396 = vpop.f32.mrf.mxu0
    %v397 = vadd.f32 %v104, %v396
    %398 = vmatmul.bf16.gmra.mxu0 %v289
    %v399 = vpop.f32.mrf.mxu0
    %v400 = vadd.f32 %v104, %v399
    %v401 = vpop.f32.mrf.mxu0
    %v402 = vadd.f32 %v104, %v401
    %403 = vmatmul.bf16.gmra.mxu0 %v292
    %v404 = vpop.f32.mrf.mxu0
    %v405 = vadd.f32 %v104, %v404
    %v406 = vpop.f32.mrf.mxu0
    %v407 = vadd.f32 %v104, %v406
    %408 = vmatmul.bf16.gmra.mxu0 %v295
    %v409 = vpop.f32.mrf.mxu0
    %v410 = vadd.f32 %v104, %v409
    %v411 = vpop.f32.mrf.mxu0
    %v412 = vadd.f32 %v104, %v411
    %413 = vmatmul.bf16.gmra.mxu0 %v298
    %v414 = vpop.f32.mrf.mxu0
    %v415 = vadd.f32 %v104, %v414
    %v416 = vpop.f32.mrf.mxu0
    %v417 = vadd.f32 %v104, %v416
    %418 = vmatmul.bf16.gmra.mxu0 %v301
    %v419 = vpop.f32.mrf.mxu0
    %v420 = vadd.f32 %v104, %v419
    %v421 = vpop.f32.mrf.mxu0
    %v422 = vadd.f32 %v104, %v421
    %423 = vmatmul.bf16.gmra.mxu0 %v304
    %v424 = vpop.f32.mrf.mxu0
    %v425 = vadd.f32 %v104, %v424
    %v426 = vpop.f32.mrf.mxu0
    %v427 = vadd.f32 %v104, %v426
    %428 = vmatmul.bf16.gmra.mxu0 %v307
    %v429 = vpop.f32.mrf.mxu0
    %v430 = vadd.f32 %v104, %v429
    %v431 = vpop.f32.mrf.mxu0
    %v432 = vadd.f32 %v104, %v431
    %433 = vmatmul.bf16.gmra.mxu0 %v310
    %v434 = vpop.f32.mrf.mxu0
    %v435 = vadd.f32 %v104, %v434
    %v436 = vpop.f32.mrf.mxu0
    %v437 = vadd.f32 %v104, %v436
    %438 = vmatmul.bf16.gmra.mxu0 %v313
    %v439 = vpop.f32.mrf.mxu0
    %v440 = vadd.f32 %v104, %v439
    %v441 = vpop.f32.mrf.mxu0
    %v442 = vadd.f32 %v104, %v441
    %443 = vmatmul.bf16.gmra.mxu0 %v316
    %v444 = vpop.f32.mrf.mxu0
    %v445 = vadd.f32 %v104, %v444
    %v446 = vpop.f32.mrf.mxu0
    %v447 = vadd.f32 %v104, %v446
    %448 = vmatmul.bf16.gmra.mxu0 %v319
    %v449 = vpop.f32.mrf.mxu0
    %v450 = vadd.f32 %v104, %v449
    %v451 = vpop.f32.mrf.mxu0
    %v452 = vadd.f32 %v104, %v451
    %453 = vmatmul.bf16.gmra.mxu0 %v322
    %v454 = vpop.f32.mrf.mxu0
    %v455 = vadd.f32 %v104, %v454
    %v456 = vpop.f32.mrf.mxu0
    %v457 = vadd.f32 %v104, %v456
    %458 = vmatmul.bf16.gmra.mxu0 %v325
    %v459 = vpop.f32.mrf.mxu0
    %v460 = vadd.f32 %v104, %v459
    %v461 = vpop.f32.mrf.mxu0
    %v462 = vadd.f32 %v104, %v461
    %463 = vmatmul.bf16.gmra.mxu0 %v328
    %v464 = vpop.f32.mrf.mxu0
    %v465 = vadd.f32 %v104, %v464
    %v466 = vpop.f32.mrf.mxu0
    %v467 = vadd.f32 %v104, %v466
    %468 = vmatmul.bf16.gmra.mxu0 %v331
    %v469 = vpop.f32.mrf.mxu0
    %v470 = vadd.f32 %v104, %v469
    %v471 = vpop.f32.mrf.mxu0
    %v472 = vadd.f32 %v104, %v471
    %473 = vmatmul.bf16.gmra.mxu0 %v334
    %v474 = vpop.f32.mrf.mxu0
    %v475 = vadd.f32 %v104, %v474
    %v476 = vpop.f32.mrf.mxu0
    %v477 = vadd.f32 %v104, %v476
    %478 = vmatmul.bf16.gmra.mxu0 %v337
    %v479 = vpop.f32.mrf.mxu0
    %v480 = vadd.f32 %v104, %v479
    %v481 = vpop.f32.mrf.mxu0
    %v482 = vadd.f32 %v104, %v481
    %483 = vmatmul.bf16.gmra.mxu0 %v340
    %v484 = vpop.f32.mrf.mxu0
    %v485 = vadd.f32 %v104, %v484
    %v486 = vpop.f32.mrf.mxu0
    %v487 = vadd.f32 %v104, %v486
    %488 = vmatmul.bf16.gmra.mxu0 %v343
    %v489 = vpop.f32.mrf.mxu0
    %v490 = vadd.f32 %v104, %v489
    %v491 = vpop.f32.mrf.mxu0
    %v492 = vadd.f32 %v104, %v491
    %493 = vmatmul.bf16.gmra.mxu0 %v346
    %v494 = vpop.f32.mrf.mxu0
    %v495 = vadd.f32 %v104, %v494
    %v496 = vpop.f32.mrf.mxu0
    %v497 = vadd.f32 %v104, %v496
    %498 = vmatmul.bf16.gmra.mxu0 %v349
    %v499 = vpop.f32.mrf.mxu0
    %v500 = vadd.f32 %v104, %v499
    %v501 = vpop.f32.mrf.mxu0
    %v502 = vadd.f32 %v104, %v501
    %503 = vmatmul.bf16.gmra.mxu0 %v352
    %v504 = vpop.f32.mrf.mxu0
    %v505 = vadd.f32 %v104, %v504
    %v506 = vpop.f32.mrf.mxu0
    %v507 = vadd.f32 %v104, %v506
    %508 = vmatmul.bf16.gmra.mxu0 %v355
    %v509 = vpop.f32.mrf.mxu0
    %v510 = vadd.f32 %v104, %v509
    %v511 = vpop.f32.mrf.mxu0
    %v512 = vadd.f32 %v104, %v511
    %513 = vmatmul.bf16.gmra.mxu0 %v358
    %v514 = vpop.f32.mrf.mxu0
    %v515 = vadd.f32 %v104, %v514
    %v516 = vpop.f32.mrf.mxu0
    %v517 = vadd.f32 %v104, %v516
    %518 = vmatmul.bf16.gmra.mxu0 %v361
    %v519 = vpop.f32.mrf.mxu0
    %v520 = vadd.f32 %v104, %v519
    %v521 = vpop.f32.mrf.mxu0
    %v522 = vadd.f32 %v104, %v521
    %523 = vmatmul.bf16.gmra.mxu0 %v364
    %v524 = vpop.f32.mrf.mxu0
    %v525 = vadd.f32 %v104, %v524
    %v526 = vpop.f32.mrf.mxu0
    %v527 = vadd.f32 %v104, %v526
    %528 = vmatmul.bf16.gmra.mxu0 %v367
    %v529 = vpop.f32.mrf.mxu0
    %v530 = vadd.f32 %v104, %v529
    %v531 = vpop.f32.mrf.mxu0
    %v532 = vadd.f32 %v104, %v531
    %533 = vmatmul.bf16.gmra.mxu0 %v370
    %v534 = vpop.f32.mrf.mxu0
    %v535 = vadd.f32 %v104, %v534
    %v536 = vpop.f32.mrf.mxu0
    %v537 = vadd.f32 %v104, %v536
    %538 = vmatmul.bf16.gmra.mxu0 %v373
    %v539 = vpop.f32.mrf.mxu0
    %v540 = vadd.f32 %v104, %v539
    %v541 = vpop.f32.mrf.mxu0
    %v542 = vadd.f32 %v104, %v541
    %543 = vdwg.mxu0
    %v544 = vmax.f32 %v385, 0.0
    %v545 = vmax.f32 %v387, 0.0
    %v546 = vmax.f32 %v390, 0.0
    %v547 = vmax.f32 %v392, 0.0
    %v548 = vmax.f32 %v395, 0.0
    %v549 = vmax.f32 %v397, 0.0
    %v550 = vmax.f32 %v400, 0.0
    %v551 = vmax.f32 %v402, 0.0
    %v552 = vmax.f32 %v405, 0.0
    %v553 = vmax.f32 %v407, 0.0
    %v554 = vmax.f32 %v410, 0.0
    %v555 = vmax.f32 %v412, 0.0
    %v556 = vmax.f32 %v415, 0.0
    %v557 = vmax.f32 %v417, 0.0
    %v558 = vmax.f32 %v420, 0.0
    %v559 = vmax.f32 %v422, 0.0
    %v560 = vmax.f32 %v425, 0.0
    %v561 = vmax.f32 %v427, 0.0
    %v562 = vmax.f32 %v430, 0.0
    %v563 = vmax.f32 %v432, 0.0
    %v564 = vmax.f32 %v435, 0.0
    %v565 = vmax.f32 %v437, 0.0
    %v566 = vmax.f32 %v440, 0.0
    %v567 = vmax.f32 %v442, 0.0
    %v568 = vmax.f32 %v445, 0.0
    %v569 = vmax.f32 %v447, 0.0
    %v570 = vmax.f32 %v450, 0.0
    %v571 = vmax.f32 %v452, 0.0
    %v572 = vmax.f32 %v455, 0.0
    %v573 = vmax.f32 %v457, 0.0
    %v574 = vmax.f32 %v460, 0.0
    %v575 = vmax.f32 %v462, 0.0
    %v576 = vmax.f32 %v465, 0.0
    %v577 = vmax.f32 %v467, 0.0
    %v578 = vmax.f32 %v470, 0.0
    %v579 = vmax.f32 %v472, 0.0
    %v580 = vmax.f32 %v475, 0.0
    %v581 = vmax.f32 %v477, 0.0
    %v582 = vmax.f32 %v480, 0.0
    %v583 = vmax.f32 %v482, 0.0
    %v584 = vmax.f32 %v485, 0.0
    %v585 = vmax.f32 %v487, 0.0
    %v586 = vmax.f32 %v490, 0.0
    %v587 = vmax.f32 %v492, 0.0
    %v588 = vmax.f32 %v495, 0.0
    %v589 = vmax.f32 %v497, 0.0
    %v590 = vmax.f32 %v500, 0.0
    %v591 = vmax.f32 %v502, 0.0
    %v592 = vmax.f32 %v505, 0.0
    %v593 = vmax.f32 %v507, 0.0
    %v594 = vmax.f32 %v510, 0.0
    %v595 = vmax.f32 %v512, 0.0
    %v596 = vmax.f32 %v515, 0.0
    %v597 = vmax.f32 %v517, 0.0
    %v598 = vmax.f32 %v520, 0.0
    %v599 = vmax.f32 %v522, 0.0
    %v600 = vmax.f32 %v525, 0.0
    %v601 = vmax.f32 %v527, 0.0
    %v602 = vmax.f32 %v530, 0.0
    %v603 = vmax.f32 %v532, 0.0
    %v604 = vmax.f32 %v535, 0.0
    %v605 = vmax.f32 %v537, 0.0
    %v606 = vmax.f32 %v540, 0.0
    %v607 = vmax.f32 %v542, 0.0
    %608 = vst [vmem:[#allocation2] sm:$0xff] 0.0
    %609 = vst [vmem:[#allocation2 + $0x8] sm:$0xff] 0.0
    %610 = vst [vmem:[#allocation2 + $0x10] sm:$0x3] 0.0
    %611 = vst [vmem:[#allocation2 + $0x18] sm:$0xff] 0.0
    %612 = vst [vmem:[#allocation2 + $0x20] sm:$0xff] 0.0
    %613 = vst [vmem:[#allocation2 + $0x28] sm:$0x3] 0.0
    %614 = vst [vmem:[#allocation2 + $0x30] sm:$0xff] 0.0
    %615 = vst [vmem:[#allocation2 + $0x38] sm:$0xff] 0.0
    %616 = vst [vmem:[#allocation2 + $0x40] sm:$0x3] 0.0
    %617 = vst [vmem:[#allocation2 + $0x48] sm:$0xff] 0.0
    %618 = vst [vmem:[#allocation2 + $0x50] sm:$0xff] 0.0
    %619 = vst [vmem:[#allocation2 + $0x58] sm:$0x3] 0.0
    %620 = vst [vmem:[#allocation2 + $0x60] sm:$0xff] 0.0
    %621 = vst [vmem:[#allocation2 + $0x68] sm:$0xff] 0.0
    %622 = vst [vmem:[#allocation2 + $0x70] sm:$0x3] 0.0
    %623 = vst [vmem:[#allocation2 + $0x78] sm:$0xff] 0.0
    %624 = vst [vmem:[#allocation2 + $0x80] sm:$0xff] 0.0
    %625 = vst [vmem:[#allocation2 + $0x88] sm:$0x3] 0.0
    %626 = vst [vmem:[#allocation2 + $0x90] sm:$0xff] 0.0
    %627 = vst [vmem:[#allocation2 + $0x98] sm:$0xff] 0.0
    %628 = vst [vmem:[#allocation2 + $0xa0] sm:$0x3] 0.0
    %629 = vst [vmem:[#allocation2 + $0xa8] sm:$0xff] 0.0
    %630 = vst [vmem:[#allocation2 + $0xb0] sm:$0xff] 0.0
    %631 = vst [vmem:[#allocation2 + $0xb8] sm:$0x3] 0.0
    %632 = vst [vmem:[#allocation2 + $0xc0] sm:$0xff] 0.0
    %633 = vst [vmem:[#allocation2 + $0xc8] sm:$0xff] 0.0
    %634 = vst [vmem:[#allocation2 + $0xd0] sm:$0x3] 0.0
    %635 = vst [vmem:[#allocation2 + $0xd8] sm:$0xff] 0.0
    %636 = vst [vmem:[#allocation2 + $0xe0] sm:$0xff] 0.0
    %637 = vst [vmem:[#allocation2 + $0xe8] sm:$0x3] 0.0
    %638 = vst [vmem:[#allocation2 + $0xf0] sm:$0xff] 0.0
    %639 = vst [vmem:[#allocation2 + $0xf8] sm:$0xff] 0.0
    %640 = vst [vmem:[#allocation2 + $0x100] sm:$0x3] 0.0
    %641 = vst [vmem:[#allocation2 + $0x108] sm:$0xff] 0.0
    %642 = vst [vmem:[#allocation2 + $0x110] sm:$0xff] 0.0
    %643 = vst [vmem:[#allocation2 + $0x118] sm:$0x3] 0.0
    %644 = vst [vmem:[#allocation2 + $0x120] sm:$0xff] 0.0
    %645 = vst [vmem:[#allocation2 + $0x128] sm:$0xff] 0.0
    %646 = vst [vmem:[#allocation2 + $0x130] sm:$0x3] 0.0
    %647 = vst [vmem:[#allocation2 + $0x138] sm:$0xff] 0.0
    %648 = vst [vmem:[#allocation2 + $0x140] sm:$0xff] 0.0
    %649 = vst [vmem:[#allocation2 + $0x148] sm:$0x3] 0.0
    %650 = vst [vmem:[#allocation2 + $0x150] sm:$0xff] 0.0
    %651 = vst [vmem:[#allocation2 + $0x158] sm:$0xff] 0.0
    %652 = vst [vmem:[#allocation2 + $0x160] sm:$0x3] 0.0
    %653 = vst [vmem:[#allocation2 + $0x168] sm:$0xff] 0.0
    %654 = vst [vmem:[#allocation2 + $0x170] sm:$0xff] 0.0
    %655 = vst [vmem:[#allocation2 + $0x178] sm:$0x3] 0.0
    %656 = vst [vmem:[#allocation2 + $0x180] sm:$0xff] 0.0
    %657 = vst [vmem:[#allocation2 + $0x188] sm:$0xff] 0.0
    %658 = vst [vmem:[#allocation2 + $0x190] sm:$0x3] 0.0
    %659 = vst [vmem:[#allocation2 + $0x198] sm:$0xff] 0.0
    %660 = vst [vmem:[#allocation2 + $0x1a0] sm:$0xff] 0.0
    %661 = vst [vmem:[#allocation2 + $0x1a8] sm:$0x3] 0.0
    %662 = vst [vmem:[#allocation2 + $0x1b0] sm:$0xff] 0.0
    %663 = vst [vmem:[#allocation2 + $0x1b8] sm:$0xff] 0.0
    %664 = vst [vmem:[#allocation2 + $0x1c0] sm:$0x3] 0.0
    %665 = vst [vmem:[#allocation2 + $0x1c8] sm:$0xff] 0.0
    %666 = vst [vmem:[#allocation2 + $0x1d0] sm:$0xff] 0.0
    %667 = vst [vmem:[#allocation2 + $0x1d8] sm:$0x3] 0.0
    %668 = vst [vmem:[#allocation2 + $0x1e0] sm:$0xff] 0.0
    %669 = vst [vmem:[#allocation2 + $0x1e8] sm:$0xff] 0.0
    %670 = vst [vmem:[#allocation2 + $0x1f0] sm:$0x3] 0.0
    %671 = vst [vmem:[#allocation2 + $0x1f8] sm:$0xff] 0.0
    %672 = vst [vmem:[#allocation2 + $0x200] sm:$0xff] 0.0
    %673 = vst [vmem:[#allocation2 + $0x208] sm:$0x3] 0.0
    %674 = vst [vmem:[#allocation2 + $0x210] sm:$0xff] 0.0
    %675 = vst [vmem:[#allocation2 + $0x218] sm:$0xff] 0.0
    %676 = vst [vmem:[#allocation2 + $0x220] sm:$0x3] 0.0
    %677 = vst [vmem:[#allocation2 + $0x228] sm:$0xff] 0.0
    %678 = vst [vmem:[#allocation2 + $0x230] sm:$0xff] 0.0
    %679 = vst [vmem:[#allocation2 + $0x238] sm:$0x3] 0.0
    %680 = vst [vmem:[#allocation2 + $0x240] sm:$0xff] 0.0
    %681 = vst [vmem:[#allocation2 + $0x248] sm:$0xff] 0.0
    %682 = vst [vmem:[#allocation2 + $0x250] sm:$0x3] 0.0
    %683 = vst [vmem:[#allocation2 + $0x258] sm:$0xff] 0.0
    %684 = vst [vmem:[#allocation2 + $0x260] sm:$0xff] 0.0
    %685 = vst [vmem:[#allocation2 + $0x268] sm:$0x3] 0.0
    %686 = vst [vmem:[#allocation2 + $0x270] sm:$0xff] 0.0
    %687 = vst [vmem:[#allocation2 + $0x278] sm:$0xff] 0.0
    %688 = vst [vmem:[#allocation2 + $0x280] sm:$0x3] 0.0
    %689 = vst [vmem:[#allocation2 + $0x288] sm:$0xff] 0.0
    %690 = vst [vmem:[#allocation2 + $0x290] sm:$0xff] 0.0
    %691 = vst [vmem:[#allocation2 + $0x298] sm:$0x3] 0.0
    %692 = vst [vmem:[#allocation2 + $0x2a0] sm:$0xff] 0.0
    %693 = vst [vmem:[#allocation2 + $0x2a8] sm:$0xff] 0.0
    %694 = vst [vmem:[#allocation2 + $0x2b0] sm:$0x3] 0.0
    %695 = vst [vmem:[#allocation2 + $0x2b8] sm:$0xff] 0.0
    %696 = vst [vmem:[#allocation2 + $0x2c0] sm:$0xff] 0.0
    %697 = vst [vmem:[#allocation2 + $0x2c8] sm:$0x3] 0.0
    %698 = vst [vmem:[#allocation2 + $0x2d0] sm:$0xff] 0.0
    %699 = vst [vmem:[#allocation2 + $0x2d8] sm:$0xff] 0.0
    %700 = vst [vmem:[#allocation2 + $0x2e0] sm:$0x3] 0.0
    %701 = vst [vmem:[#allocation2 + $0x2e8] sm:$0xff] 0.0
    %702 = vst [vmem:[#allocation2 + $0x2f0] sm:$0xff] 0.0
    %703 = vst [vmem:[#allocation2 + $0x2f8] sm:$0x3] 0.0
    %704 = vst [vmem:[#allocation2 + $0x300] sm:$0xff] 0.0
    %705 = vst [vmem:[#allocation2 + $0x308] sm:$0xff] 0.0
    %706 = vst [vmem:[#allocation2 + $0x310] sm:$0x3] 0.0
    %707 = vst [vmem:[#allocation2 + $0x318] sm:$0xff] 0.0
    %708 = vst [vmem:[#allocation2 + $0x320] sm:$0xff] 0.0
    %709 = vst [vmem:[#allocation2 + $0x328] sm:$0x3] 0.0
    %710 = vst [vmem:[#allocation2 + $0x330] sm:$0xff] 0.0
    %711 = vst [vmem:[#allocation2 + $0x338] sm:$0xff] 0.0
    %712 = vst [vmem:[#allocation2 + $0x340] sm:$0x3] 0.0
    %713 = vst [vmem:[#allocation2 + $0x348] sm:$0xff] 0.0
    %714 = vst [vmem:[#allocation2 + $0x350] sm:$0xff] 0.0
    %715 = vst [vmem:[#allocation2 + $0x358] sm:$0x3] 0.0
    %s716 = scalar_lea.vmem [#allocation2], 24
    %717 = vst [vmem:[%s716 + $0x1] sm:$0xff] %v544
    %718 = vst [vmem:[%s716 + $0x9] sm:$0xff] %v545
    %719 = vst [vmem:[%s716 + $0x19] sm:$0xff] %v546
    %720 = vst [vmem:[%s716 + $0x21] sm:$0xff] %v547
    %721 = vst [vmem:[%s716 + $0x31] sm:$0xff] %v548
    %722 = vst [vmem:[%s716 + $0x39] sm:$0xff] %v549
    %723 = vst [vmem:[%s716 + $0x49] sm:$0xff] %v550
    %724 = vst [vmem:[%s716 + $0x51] sm:$0xff] %v551
    %725 = vst [vmem:[%s716 + $0x61] sm:$0xff] %v552
    %726 = vst [vmem:[%s716 + $0x69] sm:$0xff] %v553
    %727 = vst [vmem:[%s716 + $0x79] sm:$0xff] %v554
    %728 = vst [vmem:[%s716 + $0x81] sm:$0xff] %v555
    %729 = vst [vmem:[%s716 + $0x91] sm:$0xff] %v556
    %730 = vst [vmem:[%s716 + $0x99] sm:$0xff] %v557
    %731 = vst [vmem:[%s716 + $0xa9] sm:$0xff] %v558
    %732 = vst [vmem:[%s716 + $0xb1] sm:$0xff] %v559
    %733 = vst [vmem:[%s716 + $0xc1] sm:$0xff] %v560
    %734 = vst [vmem:[%s716 + $0xc9] sm:$0xff] %v561
    %735 = vst [vmem:[%s716 + $0xd9] sm:$0xff] %v562
    %736 = vst [vmem:[%s716 + $0xe1] sm:$0xff] %v563
    %737 = vst [vmem:[%s716 + $0xf1] sm:$0xff] %v564
    %738 = vst [vmem:[%s716 + $0xf9] sm:$0xff] %v565
    %739 = vst [vmem:[%s716 + $0x109] sm:$0xff] %v566
    %740 = vst [vmem:[%s716 + $0x111] sm:$0xff] %v567
    %741 = vst [vmem:[%s716 + $0x121] sm:$0xff] %v568
    %742 = vst [vmem:[%s716 + $0x129] sm:$0xff] %v569
    %743 = vst [vmem:[%s716 + $0x139] sm:$0xff] %v570
    %744 = vst [vmem:[%s716 + $0x141] sm:$0xff] %v571
    %745 = vst [vmem:[%s716 + $0x151] sm:$0xff] %v572
    %746 = vst [vmem:[%s716 + $0x159] sm:$0xff] %v573
    %747 = vst [vmem:[%s716 + $0x169] sm:$0xff] %v574
    %748 = vst [vmem:[%s716 + $0x171] sm:$0xff] %v575
    %749 = vst [vmem:[%s716 + $0x1b1] sm:$0xff] %v576
    %750 = vst [vmem:[%s716 + $0x1b9] sm:$0xff] %v577
    %751 = vst [vmem:[%s716 + $0x1c9] sm:$0xff] %v578
    %752 = vst [vmem:[%s716 + $0x1d1] sm:$0xff] %v579
    %753 = vst [vmem:[%s716 + $0x1e1] sm:$0xff] %v580
    %754 = vst [vmem:[%s716 + $0x1e9] sm:$0xff] %v581
    %755 = vst [vmem:[%s716 + $0x1f9] sm:$0xff] %v582
    %756 = vst [vmem:[%s716 + $0x201] sm:$0xff] %v583
    %757 = vst [vmem:[%s716 + $0x211] sm:$0xff] %v584
    %758 = vst [vmem:[%s716 + $0x219] sm:$0xff] %v585
    %759 = vst [vmem:[%s716 + $0x229] sm:$0xff] %v586
    %760 = vst [vmem:[%s716 + $0x231] sm:$0xff] %v587
    %761 = vst [vmem:[%s716 + $0x241] sm:$0xff] %v588
    %762 = vst [vmem:[%s716 + $0x249] sm:$0xff] %v589
    %763 = vst [vmem:[%s716 + $0x259] sm:$0xff] %v590
    %764 = vst [vmem:[%s716 + $0x261] sm:$0xff] %v591
    %765 = vst [vmem:[%s716 + $0x271] sm:$0xff] %v592
    %766 = vst [vmem:[%s716 + $0x279] sm:$0xff] %v593
    %767 = vst [vmem:[%s716 + $0x289] sm:$0xff] %v594
    %768 = vst [vmem:[%s716 + $0x291] sm:$0xff] %v595
    %769 = vst [vmem:[%s716 + $0x2a1] sm:$0xff] %v596
    %770 = vst [vmem:[%s716 + $0x2a9] sm:$0xff] %v597
    %771 = vst [vmem:[%s716 + $0x2b9] sm:$0xff] %v598
    %772 = vst [vmem:[%s716 + $0x2c1] sm:$0xff] %v599
    %773 = vst [vmem:[%s716 + $0x2d1] sm:$0xff] %v600
    %774 = vst [vmem:[%s716 + $0x2d9] sm:$0xff] %v601
    %775 = vst [vmem:[%s716 + $0x2e9] sm:$0xff] %v602
    %776 = vst [vmem:[%s716 + $0x2f1] sm:$0xff] %v603
    %777 = vst [vmem:[%s716 + $0x301] sm:$0xff] %v604
    %778 = vst [vmem:[%s716 + $0x309] sm:$0xff] %v605
    %779 = vst [vmem:[%s716 + $0x319] sm:$0xff] %v606
    %780 = vst [vmem:[%s716 + $0x321] sm:$0xff] %v607
    %v781 = vld [vmem:[#allocation2] sm:$0xff]
    %v782 = vld [vmem:[#allocation2 + $0x8] sm:$0xff]
    %v783 = vld [vmem:[#allocation2 + $0x18] sm:$0xff]
    %v784 = vld [vmem:[#allocation2 + $0x20] sm:$0xff]
    %v785 = vld [vmem:[#allocation2 + $0x30] sm:$0xff]
    %v786 = vld [vmem:[#allocation2 + $0x38] sm:$0xff]
    %v787 = vld [vmem:[#allocation2 + $0x48] sm:$0xff]
    %v788 = vld [vmem:[#allocation2 + $0x50] sm:$0xff]
    %v789 = vld [vmem:[#allocation2 + $0x60] sm:$0xff]
    %v790 = vld [vmem:[#allocation2 + $0x68] sm:$0xff]
    %v791 = vld [vmem:[#allocation2 + $0x78] sm:$0xff]
    %v792 = vld [vmem:[#allocation2 + $0x80] sm:$0xff]
    %v793 = vld [vmem:[#allocation2 + $0x90] sm:$0xff]
    %v794 = vld [vmem:[#allocation2 + $0x98] sm:$0xff]
    %v795 = vld [vmem:[#allocation2 + $0xa8] sm:$0xff]
    %v796 = vld [vmem:[#allocation2 + $0xb0] sm:$0xff]
    %v797 = vld [vmem:[#allocation2 + $0xc0] sm:$0xff]
    %v798 = vld [vmem:[#allocation2 + $0xc8] sm:$0xff]
    %v799 = vld [vmem:[#allocation2 + $0xd8] sm:$0xff]
    %v800 = vld [vmem:[#allocation2 + $0xe0] sm:$0xff]
    %v801 = vld [vmem:[#allocation2 + $0xf0] sm:$0xff]
    %v802 = vld [vmem:[#allocation2 + $0xf8] sm:$0xff]
    %v803 = vld [vmem:[#allocation2 + $0x108] sm:$0xff]
    %v804 = vld [vmem:[#allocation2 + $0x110] sm:$0xff]
    %v805 = vld [vmem:[#allocation2 + $0x120] sm:$0xff]
    %v806 = vld [vmem:[#allocation2 + $0x128] sm:$0xff]
    %v807 = vld [vmem:[#allocation2 + $0x138] sm:$0xff]
    %v808 = vld [vmem:[#allocation2 + $0x140] sm:$0xff]
    %v809 = vld [vmem:[#allocation2 + $0x150] sm:$0xff]
    %v810 = vld [vmem:[#allocation2 + $0x158] sm:$0xff]
    %v811 = vld [vmem:[#allocation2 + $0x168] sm:$0xff]
    %v812 = vld [vmem:[#allocation2 + $0x170] sm:$0xff]
    %v813 = vld [vmem:[#allocation2 + $0x1b0] sm:$0xff]
    %v814 = vld [vmem:[#allocation2 + $0x1b8] sm:$0xff]
    %v815 = vld [vmem:[#allocation2 + $0x1c8] sm:$0xff]
    %v816 = vld [vmem:[#allocation2 + $0x1d0] sm:$0xff]
    %v817 = vld [vmem:[#allocation2 + $0x1e0] sm:$0xff]
    %v818 = vld [vmem:[#allocation2 + $0x1e8] sm:$0xff]
    %v819 = vld [vmem:[#allocation2 + $0x1f8] sm:$0xff]
    %v820 = vld [vmem:[#allocation2 + $0x200] sm:$0xff]
    %v821 = vld [vmem:[#allocation2 + $0x210] sm:$0xff]
    %v822 = vld [vmem:[#allocation2 + $0x218] sm:$0xff]
    %v823 = vld [vmem:[#allocation2 + $0x228] sm:$0xff]
    %v824 = vld [vmem:[#allocation2 + $0x230] sm:$0xff]
    %v825 = vld [vmem:[#allocation2 + $0x240] sm:$0xff]
    %v826 = vld [vmem:[#allocation2 + $0x248] sm:$0xff]
    %v827 = vld [vmem:[#allocation2 + $0x258] sm:$0xff]
    %v828 = vld [vmem:[#allocation2 + $0x260] sm:$0xff]
    %v829 = vld [vmem:[#allocation2 + $0x270] sm:$0xff]
    %v830 = vld [vmem:[#allocation2 + $0x278] sm:$0xff]
    %v831 = vld [vmem:[#allocation2 + $0x288] sm:$0xff]
    %v832 = vld [vmem:[#allocation2 + $0x290] sm:$0xff]
    %v833 = vld [vmem:[#allocation2 + $0x2a0] sm:$0xff]
    %v834 = vld [vmem:[#allocation2 + $0x2a8] sm:$0xff]
    %v835 = vld [vmem:[#allocation2 + $0x2b8] sm:$0xff]
    %v836 = vld [vmem:[#allocation2 + $0x2c0] sm:$0xff]
    %v837 = vld [vmem:[#allocation2 + $0x2d0] sm:$0xff]
    %v838 = vld [vmem:[#allocation2 + $0x2d8] sm:$0xff]
    %v839 = vld [vmem:[#allocation2 + $0x2e8] sm:$0xff]
    %v840 = vld [vmem:[#allocation2 + $0x2f0] sm:$0xff]
    %v841 = vld [vmem:[#allocation2 + $0x300] sm:$0xff]
    %v842 = vld [vmem:[#allocation2 + $0x308] sm:$0xff]
    %v843 = vld [vmem:[#allocation2 + $0x318] sm:$0xff]
    %v844 = vld [vmem:[#allocation2 + $0x320] sm:$0xff]
    %v845 = vpack.c.bf16 %v782, %v781
    %v846 = vpack.c.bf16 %v784, %v783
    %v847 = vpack.c.bf16 %v786, %v785
    %v848 = vpack.c.bf16 %v788, %v787
    %v849 = vpack.c.bf16 %v790, %v789
    %v850 = vpack.c.bf16 %v792, %v791
    %v851 = vpack.c.bf16 %v794, %v793
    %v852 = vpack.c.bf16 %v796, %v795
    %v853 = vpack.c.bf16 %v798, %v797
    %v854 = vpack.c.bf16 %v800, %v799
    %v855 = vpack.c.bf16 %v802, %v801
    %v856 = vpack.c.bf16 %v804, %v803
    %v857 = vpack.c.bf16 %v806, %v805
    %v858 = vpack.c.bf16 %v808, %v807
    %v859 = vpack.c.bf16 %v810, %v809
    %v860 = vpack.c.bf16 %v812, %v811
    %v861 = vpack.c.bf16 %v814, %v813
    %v862 = vpack.c.bf16 %v816, %v815
    %v863 = vpack.c.bf16 %v818, %v817
    %v864 = vpack.c.bf16 %v820, %v819
    %v865 = vpack.c.bf16 %v822, %v821
    %v866 = vpack.c.bf16 %v824, %v823
    %v867 = vpack.c.bf16 %v826, %v825
    %v868 = vpack.c.bf16 %v828, %v827
    %v869 = vpack.c.bf16 %v830, %v829
    %v870 = vpack.c.bf16 %v832, %v831
    %v871 = vpack.c.bf16 %v834, %v833
    %v872 = vpack.c.bf16 %v836, %v835
    %v873 = vpack.c.bf16 %v838, %v837
    %v874 = vpack.c.bf16 %v840, %v839
    %v875 = vpack.c.bf16 %v842, %v841
    %v876 = vpack.c.bf16 %v844, %v843
    %v877 = vld [vmem:[%s3] sm:$0xf]
    %v878 = vld [vmem:[%s3 + $0x4] sm:$0xf]
    %v879 = vld [vmem:[%s3 + $0x8] sm:$0xf]
    %v880 = vld [vmem:[%s3 + $0xc] sm:$0xf]
    %v881 = vld [vmem:[%s3 + $0x10] sm:$0xf]
    %v882 = vld [vmem:[%s3 + $0x14] sm:$0xf]
    %v883 = vld [vmem:[%s3 + $0x18] sm:$0xf]
    %v884 = vld [vmem:[%s3 + $0x1c] sm:$0xf]
    %v885 = vld [vmem:[%s3 + $0x20] sm:$0xf]
    %v886 = vld [vmem:[%s3 + $0x24] sm:$0xf]
    %v887 = vld [vmem:[%s3 + $0x28] sm:$0xf]
    %v888 = vld [vmem:[%s3 + $0x2c] sm:$0xf]
    %v889 = vld [vmem:[%s3 + $0x30] sm:$0xf]
    %v890 = vld [vmem:[%s3 + $0x34] sm:$0xf]
    %v891 = vld [vmem:[%s3 + $0x38] sm:$0xf]
    %v892 = vld [vmem:[%s3 + $0x3c] sm:$0xf]
    %v893 = vld [vmem:[#allocation2 + $0x1] sm:$0xff]
    %v894 = vld [vmem:[#allocation2 + $0x9] sm:$0xff]
    %v895 = vld [vmem:[#allocation2 + $0x19] sm:$0xff]
    %v896 = vld [vmem:[#allocation2 + $0x21] sm:$0xff]
    %v897 = vld [vmem:[#allocation2 + $0x31] sm:$0xff]
    %v898 = vld [vmem:[#allocation2 + $0x39] sm:$0xff]
    %v899 = vld [vmem:[#allocation2 + $0x49] sm:$0xff]
    %v900 = vld [vmem:[#allocation2 + $0x51] sm:$0xff]
    %v901 = vld [vmem:[#allocation2 + $0x61] sm:$0xff]
    %v902 = vld [vmem:[#allocation2 + $0x69] sm:$0xff]
    %v903 = vld [vmem:[#allocation2 + $0x79] sm:$0xff]
    %v904 = vld [vmem:[#allocation2 + $0x81] sm:$0xff]
    %v905 = vld [vmem:[#allocation2 + $0x91] sm:$0xff]
    %v906 = vld [vmem:[#allocation2 + $0x99] sm:$0xff]
    %v907 = vld [vmem:[#allocation2 + $0xa9] sm:$0xff]
    %v908 = vld [vmem:[#allocation2 + $0xb1] sm:$0xff]
    %v909 = vld [vmem:[#allocation2 + $0xc1] sm:$0xff]
    %v910 = vld [vmem:[#allocation2 + $0xc9] sm:$0xff]
    %v911 = vld [vmem:[#allocation2 + $0xd9] sm:$0xff]
    %v912 = vld [vmem:[#allocation2 + $0xe1] sm:$0xff]
    %v913 = vld [vmem:[#allocation2 + $0xf1] sm:$0xff]
    %v914 = vld [vmem:[#allocation2 + $0xf9] sm:$0xff]
    %v915 = vld [vmem:[#allocation2 + $0x109] sm:$0xff]
    %v916 = vld [vmem:[#allocation2 + $0x111] sm:$0xff]
    %v917 = vld [vmem:[#allocation2 + $0x121] sm:$0xff]
    %v918 = vld [vmem:[#allocation2 + $0x129] sm:$0xff]
    %v919 = vld [vmem:[#allocation2 + $0x139] sm:$0xff]
    %v920 = vld [vmem:[#allocation2 + $0x141] sm:$0xff]
    %v921 = vld [vmem:[#allocation2 + $0x151] sm:$0xff]
    %v922 = vld [vmem:[#allocation2 + $0x159] sm:$0xff]
    %v923 = vld [vmem:[#allocation2 + $0x169] sm:$0xff]
    %v924 = vld [vmem:[#allocation2 + $0x171] sm:$0xff]
    %v925 = vld [vmem:[#allocation2 + $0x1b1] sm:$0xff]
    %v926 = vld [vmem:[#allocation2 + $0x1b9] sm:$0xff]
    %v927 = vld [vmem:[#allocation2 + $0x1c9] sm:$0xff]
    %v928 = vld [vmem:[#allocation2 + $0x1d1] sm:$0xff]
    %v929 = vld [vmem:[#allocation2 + $0x1e1] sm:$0xff]
    %v930 = vld [vmem:[#allocation2 + $0x1e9] sm:$0xff]
    %v931 = vld [vmem:[#allocation2 + $0x1f9] sm:$0xff]
    %v932 = vld [vmem:[#allocation2 + $0x201] sm:$0xff]
    %v933 = vld [vmem:[#allocation2 + $0x211] sm:$0xff]
    %v934 = vld [vmem:[#allocation2 + $0x219] sm:$0xff]
    %v935 = vld [vmem:[#allocation2 + $0x229] sm:$0xff]
    %v936 = vld [vmem:[#allocation2 + $0x231] sm:$0xff]
    %v937 = vld [vmem:[#allocation2 + $0x241] sm:$0xff]
    %v938 = vld [vmem:[#allocation2 + $0x249] sm:$0xff]
    %v939 = vld [vmem:[#allocation2 + $0x259] sm:$0xff]
    %v940 = vld [vmem:[#allocation2 + $0x261] sm:$0xff]
    %v941 = vld [vmem:[#allocation2 + $0x271] sm:$0xff]
    %v942 = vld [vmem:[#allocation2 + $0x279] sm:$0xff]
    %v943 = vld [vmem:[#allocation2 + $0x289] sm:$0xff]
    %v944 = vld [vmem:[#allocation2 + $0x291] sm:$0xff]
    %v945 = vld [vmem:[#allocation2 + $0x2a1] sm:$0xff]
    %v946 = vld [vmem:[#allocation2 + $0x2a9] sm:$0xff]
    %v947 = vld [vmem:[#allocation2 + $0x2b9] sm:$0xff]
    %v948 = vld [vmem:[#allocation2 + $0x2c1] sm:$0xff]
    %v949 = vld [vmem:[#allocation2 + $0x2d1] sm:$0xff]
    %v950 = vld [vmem:[#allocation2 + $0x2d9] sm:$0xff]
    %v951 = vld [vmem:[#allocation2 + $0x2e9] sm:$0xff]
    %v952 = vld [vmem:[#allocation2 + $0x2f1] sm:$0xff]
    %v953 = vld [vmem:[#allocation2 + $0x301] sm:$0xff]
    %v954 = vld [vmem:[#allocation2 + $0x309] sm:$0xff]
    %v955 = vld [vmem:[#allocation2 + $0x319] sm:$0xff]
    %v956 = vld [vmem:[#allocation2 + $0x321] sm:$0xff]
    %v957 = vpack.c.bf16 %v894, %v893
    %v958 = vpack.c.bf16 %v896, %v895
    %v959 = vpack.c.bf16 %v898, %v897
    %v960 = vpack.c.bf16 %v900, %v899
    %v961 = vpack.c.bf16 %v902, %v901
    %v962 = vpack.c.bf16 %v904, %v903
    %v963 = vpack.c.bf16 %v906, %v905
    %v964 = vpack.c.bf16 %v908, %v907
    %v965 = vpack.c.bf16 %v910, %v909
    %v966 = vpack.c.bf16 %v912, %v911
    %v967 = vpack.c.bf16 %v914, %v913
    %v968 = vpack.c.bf16 %v916, %v915
    %v969 = vpack.c.bf16 %v918, %v917
    %v970 = vpack.c.bf16 %v920, %v919
    %v971 = vpack.c.bf16 %v922, %v921
    %v972 = vpack.c.bf16 %v924, %v923
    %v973 = vpack.c.bf16 %v926, %v925
    %v974 = vpack.c.bf16 %v928, %v927
    %v975 = vpack.c.bf16 %v930, %v929
    %v976 = vpack.c.bf16 %v932, %v931
    %v977 = vpack.c.bf16 %v934, %v933
    %v978 = vpack.c.bf16 %v936, %v935
    %v979 = vpack.c.bf16 %v938, %v937
    %v980 = vpack.c.bf16 %v940, %v939
    %v981 = vpack.c.bf16 %v942, %v941
    %v982 = vpack.c.bf16 %v944, %v943
    %v983 = vpack.c.bf16 %v946, %v945
    %v984 = vpack.c.bf16 %v948, %v947
    %v985 = vpack.c.bf16 %v950, %v949
    %v986 = vpack.c.bf16 %v952, %v951
    %v987 = vpack.c.bf16 %v954, %v953
    %v988 = vpack.c.bf16 %v956, %v955
    %s989 = scalar_lea.vmem %s3, 64
    %v990 = vld [vmem:[%s989] sm:$0xf]
    %v991 = vld [vmem:[%s989 + $0x4] sm:$0xf]
    %v992 = vld [vmem:[%s989 + $0x8] sm:$0xf]
    %v993 = vld [vmem:[%s989 + $0xc] sm:$0xf]
    %v994 = vld [vmem:[%s989 + $0x10] sm:$0xf]
    %v995 = vld [vmem:[%s989 + $0x14] sm:$0xf]
    %v996 = vld [vmem:[%s989 + $0x18] sm:$0xf]
    %v997 = vld [vmem:[%s989 + $0x1c] sm:$0xf]
    %v998 = vld [vmem:[%s989 + $0x20] sm:$0xf]
    %v999 = vld [vmem:[%s989 + $0x24] sm:$0xf]
    %v1000 = vld [vmem:[%s989 + $0x28] sm:$0xf]
    %v1001 = vld [vmem:[%s989 + $0x2c] sm:$0xf]
    %v1002 = vld [vmem:[%s989 + $0x30] sm:$0xf]
    %v1003 = vld [vmem:[%s989 + $0x34] sm:$0xf]
    %v1004 = vld [vmem:[%s989 + $0x38] sm:$0xf]
    %v1005 = vld [vmem:[%s989 + $0x3c] sm:$0xf]
    %v1022 = vunpack.c.l.b16 %v990
    %v1023 = vunpack.c.l.b16 %v991
    %v1024 = vunpack.c.l.b16 %v992
    %v1025 = vunpack.c.l.b16 %v993
    %v1026 = vunpack.c.l.b16 %v994
    %v1027 = vunpack.c.l.b16 %v995
    %v1028 = vunpack.c.l.b16 %v996
    %v1029 = vunpack.c.l.b16 %v997
    %v1030 = vunpack.c.l.b16 %v998
    %v1031 = vunpack.c.l.b16 %v999
    %v1032 = vunpack.c.l.b16 %v1000
    %v1033 = vunpack.c.l.b16 %v1001
    %v1034 = vunpack.c.l.b16 %v1002
    %v1035 = vunpack.c.l.b16 %v1003
    %v1036 = vunpack.c.l.b16 %v1004
    %v1037 = vunpack.c.l.b16 %v1005
    %v1038 = vpack.c.b16 %v1023, %v1022
    %v1039 = vpack.c.b16 %v1025, %v1024
    %v1040 = vpack.c.b16 %v1027, %v1026
    %v1041 = vpack.c.b16 %v1029, %v1028
    %v1042 = vpack.c.b16 %v1031, %v1030
    %v1043 = vpack.c.b16 %v1033, %v1032
    %v1044 = vpack.c.b16 %v1035, %v1034
    %v1045 = vpack.c.b16 %v1037, %v1036
    %1054 = vmatpush.bf16.msra.mxu0 %v1045
    %1055 = vmatpush.bf16.msra.mxu0 %v1044
    %1056 = vmatpush.bf16.msra.mxu0 %v1043
    %1057 = vmatpush.bf16.msra.mxu0 %v1042
    %1058 = vmatpush.bf16.msra.mxu0 %v1041
    %1059 = vmatpush.bf16.msra.mxu0 %v1040
    %1060 = vmatpush.bf16.msra.mxu0 %v1039
    %1061 = vmatpush.bf16.msra.mxu0 %v1038
    %1062 = vmatmul.bf16.gmra.mxu0 %v957
    %v1063 = vpop.f32.mrf.mxu0
    %v1064 = vadd.f32 0.0, %v1063
    %v1065 = vpop.f32.mrf.mxu0
    %v1066 = vadd.f32 0.0, %v1065
    %1067 = vmatmul.bf16.gmra.mxu0 %v958
    %v1068 = vpop.f32.mrf.mxu0
    %v1069 = vadd.f32 0.0, %v1068
    %v1070 = vpop.f32.mrf.mxu0
    %v1071 = vadd.f32 0.0, %v1070
    %1072 = vmatmul.bf16.gmra.mxu0 %v959
    %v1073 = vpop.f32.mrf.mxu0
    %v1074 = vadd.f32 0.0, %v1073
    %v1075 = vpop.f32.mrf.mxu0
    %v1076 = vadd.f32 0.0, %v1075
    %1077 = vmatmul.bf16.gmra.mxu0 %v960
    %v1078 = vpop.f32.mrf.mxu0
    %v1079 = vadd.f32 0.0, %v1078
    %v1080 = vpop.f32.mrf.mxu0
    %v1081 = vadd.f32 0.0, %v1080
    %1082 = vmatmul.bf16.gmra.mxu0 %v961
    %v1083 = vpop.f32.mrf.mxu0
    %v1084 = vadd.f32 0.0, %v1083
    %v1085 = vpop.f32.mrf.mxu0
    %v1086 = vadd.f32 0.0, %v1085
    %1087 = vmatmul.bf16.gmra.mxu0 %v962
    %v1088 = vpop.f32.mrf.mxu0
    %v1089 = vadd.f32 0.0, %v1088
    %v1090 = vpop.f32.mrf.mxu0
    %v1091 = vadd.f32 0.0, %v1090
    %1092 = vmatmul.bf16.gmra.mxu0 %v963
    %v1093 = vpop.f32.mrf.mxu0
    %v1094 = vadd.f32 0.0, %v1093
    %v1095 = vpop.f32.mrf.mxu0
    %v1096 = vadd.f32 0.0, %v1095
    %1097 = vmatmul.bf16.gmra.mxu0 %v964
    %v1098 = vpop.f32.mrf.mxu0
    %v1099 = vadd.f32 0.0, %v1098
    %v1100 = vpop.f32.mrf.mxu0
    %v1101 = vadd.f32 0.0, %v1100
    %1102 = vmatmul.bf16.gmra.mxu0 %v965
    %v1103 = vpop.f32.mrf.mxu0
    %v1104 = vadd.f32 0.0, %v1103
    %v1105 = vpop.f32.mrf.mxu0
    %v1106 = vadd.f32 0.0, %v1105
    %1107 = vmatmul.bf16.gmra.mxu0 %v966
    %v1108 = vpop.f32.mrf.mxu0
    %v1109 = vadd.f32 0.0, %v1108
    %v1110 = vpop.f32.mrf.mxu0
    %v1111 = vadd.f32 0.0, %v1110
    %1112 = vmatmul.bf16.gmra.mxu0 %v967
    %v1113 = vpop.f32.mrf.mxu0
    %v1114 = vadd.f32 0.0, %v1113
    %v1115 = vpop.f32.mrf.mxu0
    %v1116 = vadd.f32 0.0, %v1115
    %1117 = vmatmul.bf16.gmra.mxu0 %v968
    %v1118 = vpop.f32.mrf.mxu0
    %v1119 = vadd.f32 0.0, %v1118
    %v1120 = vpop.f32.mrf.mxu0
    %v1121 = vadd.f32 0.0, %v1120
    %1122 = vmatmul.bf16.gmra.mxu0 %v969
    %v1123 = vpop.f32.mrf.mxu0
    %v1124 = vadd.f32 0.0, %v1123
    %v1125 = vpop.f32.mrf.mxu0
    %v1126 = vadd.f32 0.0, %v1125
    %1127 = vmatmul.bf16.gmra.mxu0 %v970
    %v1128 = vpop.f32.mrf.mxu0
    %v1129 = vadd.f32 0.0, %v1128
    %v1130 = vpop.f32.mrf.mxu0
    %v1131 = vadd.f32 0.0, %v1130
    %1132 = vmatmul.bf16.gmra.mxu0 %v971
    %v1133 = vpop.f32.mrf.mxu0
    %v1134 = vadd.f32 0.0, %v1133
    %v1135 = vpop.f32.mrf.mxu0
    %v1136 = vadd.f32 0.0, %v1135
    %1137 = vmatmul.bf16.gmra.mxu0 %v972
    %v1138 = vpop.f32.mrf.mxu0
    %v1139 = vadd.f32 0.0, %v1138
    %v1140 = vpop.f32.mrf.mxu0
    %v1141 = vadd.f32 0.0, %v1140
    %1142 = vmatmul.bf16.gmra.mxu0 %v973
    %v1143 = vpop.f32.mrf.mxu0
    %v1144 = vadd.f32 0.0, %v1143
    %v1145 = vpop.f32.mrf.mxu0
    %v1146 = vadd.f32 0.0, %v1145
    %1147 = vmatmul.bf16.gmra.mxu0 %v974
    %v1148 = vpop.f32.mrf.mxu0
    %v1149 = vadd.f32 0.0, %v1148
    %v1150 = vpop.f32.mrf.mxu0
    %v1151 = vadd.f32 0.0, %v1150
    %1152 = vmatmul.bf16.gmra.mxu0 %v975
    %v1153 = vpop.f32.mrf.mxu0
    %v1154 = vadd.f32 0.0, %v1153
    %v1155 = vpop.f32.mrf.mxu0
    %v1156 = vadd.f32 0.0, %v1155
    %1157 = vmatmul.bf16.gmra.mxu0 %v976
    %v1158 = vpop.f32.mrf.mxu0
    %v1159 = vadd.f32 0.0, %v1158
    %v1160 = vpop.f32.mrf.mxu0
    %v1161 = vadd.f32 0.0, %v1160
    %1162 = vmatmul.bf16.gmra.mxu0 %v977
    %v1163 = vpop.f32.mrf.mxu0
    %v1164 = vadd.f32 0.0, %v1163
    %v1165 = vpop.f32.mrf.mxu0
    %v1166 = vadd.f32 0.0, %v1165
    %1167 = vmatmul.bf16.gmra.mxu0 %v978
    %v1168 = vpop.f32.mrf.mxu0
    %v1169 = vadd.f32 0.0, %v1168
    %v1170 = vpop.f32.mrf.mxu0
    %v1171 = vadd.f32 0.0, %v1170
    %1172 = vmatmul.bf16.gmra.mxu0 %v979
    %v1173 = vpop.f32.mrf.mxu0
    %v1174 = vadd.f32 0.0, %v1173
    %v1175 = vpop.f32.mrf.mxu0
    %v1176 = vadd.f32 0.0, %v1175
    %1177 = vmatmul.bf16.gmra.mxu0 %v980
    %v1178 = vpop.f32.mrf.mxu0
    %v1179 = vadd.f32 0.0, %v1178
    %v1180 = vpop.f32.mrf.mxu0
    %v1181 = vadd.f32 0.0, %v1180
    %1182 = vmatmul.bf16.gmra.mxu0 %v981
    %v1183 = vpop.f32.mrf.mxu0
    %v1184 = vadd.f32 0.0, %v1183
    %v1185 = vpop.f32.mrf.mxu0
    %v1186 = vadd.f32 0.0, %v1185
    %1187 = vmatmul.bf16.gmra.mxu0 %v982
    %v1188 = vpop.f32.mrf.mxu0
    %v1189 = vadd.f32 0.0, %v1188
    %v1190 = vpop.f32.mrf.mxu0
    %v1191 = vadd.f32 0.0, %v1190
    %1192 = vmatmul.bf16.gmra.mxu0 %v983
    %v1193 = vpop.f32.mrf.mxu0
    %v1194 = vadd.f32 0.0, %v1193
    %v1195 = vpop.f32.mrf.mxu0
    %v1196 = vadd.f32 0.0, %v1195
    %1197 = vmatmul.bf16.gmra.mxu0 %v984
    %v1198 = vpop.f32.mrf.mxu0
    %v1199 = vadd.f32 0.0, %v1198
    %v1200 = vpop.f32.mrf.mxu0
    %v1201 = vadd.f32 0.0, %v1200
    %1202 = vmatmul.bf16.gmra.mxu0 %v985
    %v1203 = vpop.f32.mrf.mxu0
    %v1204 = vadd.f32 0.0, %v1203
    %v1205 = vpop.f32.mrf.mxu0
    %v1206 = vadd.f32 0.0, %v1205
    %1207 = vmatmul.bf16.gmra.mxu0 %v986
    %v1208 = vpop.f32.mrf.mxu0
    %v1209 = vadd.f32 0.0, %v1208
    %v1210 = vpop.f32.mrf.mxu0
    %v1211 = vadd.f32 0.0, %v1210
    %1212 = vmatmul.bf16.gmra.mxu0 %v987
    %v1213 = vpop.f32.mrf.mxu0
    %v1214 = vadd.f32 0.0, %v1213
    %v1215 = vpop.f32.mrf.mxu0
    %v1216 = vadd.f32 0.0, %v1215
    %1217 = vmatmul.bf16.gmra.mxu0 %v988
    %v1218 = vpop.f32.mrf.mxu0
    %v1219 = vadd.f32 0.0, %v1218
    %v1220 = vpop.f32.mrf.mxu0
    %v1221 = vadd.f32 0.0, %v1220
    %1222 = vdwg.mxu0
    %v1239 = vunpack.c.l.b16 %v877
    %v1240 = vunpack.c.l.b16 %v878
    %v1241 = vunpack.c.l.b16 %v879
    %v1242 = vunpack.c.l.b16 %v880
    %v1243 = vunpack.c.l.b16 %v881
    %v1244 = vunpack.c.l.b16 %v882
    %v1245 = vunpack.c.l.b16 %v883
    %v1246 = vunpack.c.l.b16 %v884
    %v1247 = vunpack.c.l.b16 %v885
    %v1248 = vunpack.c.l.b16 %v886
    %v1249 = vunpack.c.l.b16 %v887
    %v1250 = vunpack.c.l.b16 %v888
    %v1251 = vunpack.c.l.b16 %v889
    %v1252 = vunpack.c.l.b16 %v890
    %v1253 = vunpack.c.l.b16 %v891
    %v1254 = vunpack.c.l.b16 %v892
    %v1255 = vpack.c.b16 %v1240, %v1239
    %v1256 = vpack.c.b16 %v1242, %v1241
    %v1257 = vpack.c.b16 %v1244, %v1243
    %v1258 = vpack.c.b16 %v1246, %v1245
    %v1259 = vpack.c.b16 %v1248, %v1247
    %v1260 = vpack.c.b16 %v1250, %v1249
    %v1261 = vpack.c.b16 %v1252, %v1251
    %v1262 = vpack.c.b16 %v1254, %v1253
    %1271 = vmatpush.bf16.msra.mxu0 %v1262
    %1272 = vmatpush.bf16.msra.mxu0 %v1261
    %1273 = vmatpush.bf16.msra.mxu0 %v1260
    %1274 = vmatpush.bf16.msra.mxu0 %v1259
    %1275 = vmatpush.bf16.msra.mxu0 %v1258
    %1276 = vmatpush.bf16.msra.mxu0 %v1257
    %1277 = vmatpush.bf16.msra.mxu0 %v1256
    %1278 = vmatpush.bf16.msra.mxu0 %v1255
    %1279 = vmatmul.bf16.gmra.mxu0 %v845
    %v1280 = vpop.f32.mrf.mxu0
    %v1281 = vadd.f32 %v1064, %v1280
    %v1282 = vpop.f32.mrf.mxu0
    %v1283 = vadd.f32 %v1066, %v1282
    %1284 = vmatmul.bf16.gmra.mxu0 %v846
    %v1285 = vpop.f32.mrf.mxu0
    %v1286 = vadd.f32 %v1069, %v1285
    %v1287 = vpop.f32.mrf.mxu0
    %v1288 = vadd.f32 %v1071, %v1287
    %1289 = vmatmul.bf16.gmra.mxu0 %v847
    %v1290 = vpop.f32.mrf.mxu0
    %v1291 = vadd.f32 %v1074, %v1290
    %v1292 = vpop.f32.mrf.mxu0
    %v1293 = vadd.f32 %v1076, %v1292
    %1294 = vmatmul.bf16.gmra.mxu0 %v848
    %v1295 = vpop.f32.mrf.mxu0
    %v1296 = vadd.f32 %v1079, %v1295
    %v1297 = vpop.f32.mrf.mxu0
    %v1298 = vadd.f32 %v1081, %v1297
    %1299 = vmatmul.bf16.gmra.mxu0 %v849
    %v1300 = vpop.f32.mrf.mxu0
    %v1301 = vadd.f32 %v1084, %v1300
    %v1302 = vpop.f32.mrf.mxu0
    %v1303 = vadd.f32 %v1086, %v1302
    %1304 = vmatmul.bf16.gmra.mxu0 %v850
    %v1305 = vpop.f32.mrf.mxu0
    %v1306 = vadd.f32 %v1089, %v1305
    %v1307 = vpop.f32.mrf.mxu0
    %v1308 = vadd.f32 %v1091, %v1307
    %1309 = vmatmul.bf16.gmra.mxu0 %v851
    %v1310 = vpop.f32.mrf.mxu0
    %v1311 = vadd.f32 %v1094, %v1310
    %v1312 = vpop.f32.mrf.mxu0
    %v1313 = vadd.f32 %v1096, %v1312
    %1314 = vmatmul.bf16.gmra.mxu0 %v852
    %v1315 = vpop.f32.mrf.mxu0
    %v1316 = vadd.f32 %v1099, %v1315
    %v1317 = vpop.f32.mrf.mxu0
    %v1318 = vadd.f32 %v1101, %v1317
    %1319 = vmatmul.bf16.gmra.mxu0 %v853
    %v1320 = vpop.f32.mrf.mxu0
    %v1321 = vadd.f32 %v1104, %v1320
    %v1322 = vpop.f32.mrf.mxu0
    %v1323 = vadd.f32 %v1106, %v1322
    %1324 = vmatmul.bf16.gmra.mxu0 %v854
    %v1325 = vpop.f32.mrf.mxu0
    %v1326 = vadd.f32 %v1109, %v1325
    %v1327 = vpop.f32.mrf.mxu0
    %v1328 = vadd.f32 %v1111, %v1327
    %1329 = vmatmul.bf16.gmra.mxu0 %v855
    %v1330 = vpop.f32.mrf.mxu0
    %v1331 = vadd.f32 %v1114, %v1330
    %v1332 = vpop.f32.mrf.mxu0
    %v1333 = vadd.f32 %v1116, %v1332
    %1334 = vmatmul.bf16.gmra.mxu0 %v856
    %v1335 = vpop.f32.mrf.mxu0
    %v1336 = vadd.f32 %v1119, %v1335
    %v1337 = vpop.f32.mrf.mxu0
    %v1338 = vadd.f32 %v1121, %v1337
    %1339 = vmatmul.bf16.gmra.mxu0 %v857
    %v1340 = vpop.f32.mrf.mxu0
    %v1341 = vadd.f32 %v1124, %v1340
    %v1342 = vpop.f32.mrf.mxu0
    %v1343 = vadd.f32 %v1126, %v1342
    %1344 = vmatmul.bf16.gmra.mxu0 %v858
    %v1345 = vpop.f32.mrf.mxu0
    %v1346 = vadd.f32 %v1129, %v1345
    %v1347 = vpop.f32.mrf.mxu0
    %v1348 = vadd.f32 %v1131, %v1347
    %1349 = vmatmul.bf16.gmra.mxu0 %v859
    %v1350 = vpop.f32.mrf.mxu0
    %v1351 = vadd.f32 %v1134, %v1350
    %v1352 = vpop.f32.mrf.mxu0
    %v1353 = vadd.f32 %v1136, %v1352
    %1354 = vmatmul.bf16.gmra.mxu0 %v860
    %v1355 = vpop.f32.mrf.mxu0
    %v1356 = vadd.f32 %v1139, %v1355
    %v1357 = vpop.f32.mrf.mxu0
    %v1358 = vadd.f32 %v1141, %v1357
    %1359 = vmatmul.bf16.gmra.mxu0 %v861
    %v1360 = vpop.f32.mrf.mxu0
    %v1361 = vadd.f32 %v1144, %v1360
    %v1362 = vpop.f32.mrf.mxu0
    %v1363 = vadd.f32 %v1146, %v1362
    %1364 = vmatmul.bf16.gmra.mxu0 %v862
    %v1365 = vpop.f32.mrf.mxu0
    %v1366 = vadd.f32 %v1149, %v1365
    %v1367 = vpop.f32.mrf.mxu0
    %v1368 = vadd.f32 %v1151, %v1367
    %1369 = vmatmul.bf16.gmra.mxu0 %v863
    %v1370 = vpop.f32.mrf.mxu0
    %v1371 = vadd.f32 %v1154, %v1370
    %v1372 = vpop.f32.mrf.mxu0
    %v1373 = vadd.f32 %v1156, %v1372
    %1374 = vmatmul.bf16.gmra.mxu0 %v864
    %v1375 = vpop.f32.mrf.mxu0
    %v1376 = vadd.f32 %v1159, %v1375
    %v1377 = vpop.f32.mrf.mxu0
    %v1378 = vadd.f32 %v1161, %v1377
    %1379 = vmatmul.bf16.gmra.mxu0 %v865
    %v1380 = vpop.f32.mrf.mxu0
    %v1381 = vadd.f32 %v1164, %v1380
    %v1382 = vpop.f32.mrf.mxu0
    %v1383 = vadd.f32 %v1166, %v1382
    %1384 = vmatmul.bf16.gmra.mxu0 %v866
    %v1385 = vpop.f32.mrf.mxu0
    %v1386 = vadd.f32 %v1169, %v1385
    %v1387 = vpop.f32.mrf.mxu0
    %v1388 = vadd.f32 %v1171, %v1387
    %1389 = vmatmul.bf16.gmra.mxu0 %v867
    %v1390 = vpop.f32.mrf.mxu0
    %v1391 = vadd.f32 %v1174, %v1390
    %v1392 = vpop.f32.mrf.mxu0
    %v1393 = vadd.f32 %v1176, %v1392
    %1394 = vmatmul.bf16.gmra.mxu0 %v868
    %v1395 = vpop.f32.mrf.mxu0
    %v1396 = vadd.f32 %v1179, %v1395
    %v1397 = vpop.f32.mrf.mxu0
    %v1398 = vadd.f32 %v1181, %v1397
    %1399 = vmatmul.bf16.gmra.mxu0 %v869
    %v1400 = vpop.f32.mrf.mxu0
    %v1401 = vadd.f32 %v1184, %v1400
    %v1402 = vpop.f32.mrf.mxu0
    %v1403 = vadd.f32 %v1186, %v1402
    %1404 = vmatmul.bf16.gmra.mxu0 %v870
    %v1405 = vpop.f32.mrf.mxu0
    %v1406 = vadd.f32 %v1189, %v1405
    %v1407 = vpop.f32.mrf.mxu0
    %v1408 = vadd.f32 %v1191, %v1407
    %1409 = vmatmul.bf16.gmra.mxu0 %v871
    %v1410 = vpop.f32.mrf.mxu0
    %v1411 = vadd.f32 %v1194, %v1410
    %v1412 = vpop.f32.mrf.mxu0
    %v1413 = vadd.f32 %v1196, %v1412
    %1414 = vmatmul.bf16.gmra.mxu0 %v872
    %v1415 = vpop.f32.mrf.mxu0
    %v1416 = vadd.f32 %v1199, %v1415
    %v1417 = vpop.f32.mrf.mxu0
    %v1418 = vadd.f32 %v1201, %v1417
    %1419 = vmatmul.bf16.gmra.mxu0 %v873
    %v1420 = vpop.f32.mrf.mxu0
    %v1421 = vadd.f32 %v1204, %v1420
    %v1422 = vpop.f32.mrf.mxu0
    %v1423 = vadd.f32 %v1206, %v1422
    %1424 = vmatmul.bf16.gmra.mxu0 %v874
    %v1425 = vpop.f32.mrf.mxu0
    %v1426 = vadd.f32 %v1209, %v1425
    %v1427 = vpop.f32.mrf.mxu0
    %v1428 = vadd.f32 %v1211, %v1427
    %1429 = vmatmul.bf16.gmra.mxu0 %v875
    %v1430 = vpop.f32.mrf.mxu0
    %v1431 = vadd.f32 %v1214, %v1430
    %v1432 = vpop.f32.mrf.mxu0
    %v1433 = vadd.f32 %v1216, %v1432
    %1434 = vmatmul.bf16.gmra.mxu0 %v876
    %v1435 = vpop.f32.mrf.mxu0
    %v1436 = vadd.f32 %v1219, %v1435
    %v1437 = vpop.f32.mrf.mxu0
    %v1438 = vadd.f32 %v1221, %v1437
    %1439 = vdwg.mxu0
    %v1440 = vld [vmem:[#allocation2 + $0x2] sm:$0xff]
    %v1441 = vld [vmem:[#allocation2 + $0xa] sm:$0xff]
    %v1442 = vld [vmem:[#allocation2 + $0x1a] sm:$0xff]
    %v1443 = vld [vmem:[#allocation2 + $0x22] sm:$0xff]
    %v1444 = vld [vmem:[#allocation2 + $0x32] sm:$0xff]
    %v1445 = vld [vmem:[#allocation2 + $0x3a] sm:$0xff]
    %v1446 = vld [vmem:[#allocation2 + $0x4a] sm:$0xff]
    %v1447 = vld [vmem:[#allocation2 + $0x52] sm:$0xff]
    %v1448 = vld [vmem:[#allocation2 + $0x62] sm:$0xff]
    %v1449 = vld [vmem:[#allocation2 + $0x6a] sm:$0xff]
    %v1450 = vld [vmem:[#allocation2 + $0x7a] sm:$0xff]
    %v1451 = vld [vmem:[#allocation2 + $0x82] sm:$0xff]
    %v1452 = vld [vmem:[#allocation2 + $0x92] sm:$0xff]
    %v1453 = vld [vmem:[#allocation2 + $0x9a] sm:$0xff]
    %v1454 = vld [vmem:[#allocation2 + $0xaa] sm:$0xff]
    %v1455 = vld [vmem:[#allocation2 + $0xb2] sm:$0xff]
    %v1456 = vld [vmem:[#allocation2 + $0xc2] sm:$0xff]
    %v1457 = vld [vmem:[#allocation2 + $0xca] sm:$0xff]
    %v1458 = vld [vmem:[#allocation2 + $0xda] sm:$0xff]
    %v1459 = vld [vmem:[#allocation2 + $0xe2] sm:$0xff]
    %v1460 = vld [vmem:[#allocation2 + $0xf2] sm:$0xff]
    %v1461 = vld [vmem:[#allocation2 + $0xfa] sm:$0xff]
    %v1462 = vld [vmem:[#allocation2 + $0x10a] sm:$0xff]
    %v1463 = vld [vmem:[#allocation2 + $0x112] sm:$0xff]
    %v1464 = vld [vmem:[#allocation2 + $0x122] sm:$0xff]
    %v1465 = vld [vmem:[#allocation2 + $0x12a] sm:$0xff]
    %v1466 = vld [vmem:[#allocation2 + $0x13a] sm:$0xff]
    %v1467 = vld [vmem:[#allocation2 + $0x142] sm:$0xff]
    %v1468 = vld [vmem:[#allocation2 + $0x152] sm:$0xff]
    %v1469 = vld [vmem:[#allocation2 + $0x15a] sm:$0xff]
    %v1470 = vld [vmem:[#allocation2 + $0x16a] sm:$0xff]
    %v1471 = vld [vmem:[#allocation2 + $0x172] sm:$0xff]
    %v1472 = vld [vmem:[#allocation2 + $0x1b2] sm:$0xff]
    %v1473 = vld [vmem:[#allocation2 + $0x1ba] sm:$0xff]
    %v1474 = vld [vmem:[#allocation2 + $0x1ca] sm:$0xff]
    %v1475 = vld [vmem:[#allocation2 + $0x1d2] sm:$0xff]
    %v1476 = vld [vmem:[#allocation2 + $0x1e2] sm:$0xff]
    %v1477 = vld [vmem:[#allocation2 + $0x1ea] sm:$0xff]
    %v1478 = vld [vmem:[#allocation2 + $0x1fa] sm:$0xff]
    %v1479 = vld [vmem:[#allocation2 + $0x202] sm:$0xff]
    %v1480 = vld [vmem:[#allocation2 + $0x212] sm:$0xff]
    %v1481 = vld [vmem:[#allocation2 + $0x21a] sm:$0xff]
    %v1482 = vld [vmem:[#allocation2 + $0x22a] sm:$0xff]
    %v1483 = vld [vmem:[#allocation2 + $0x232] sm:$0xff]
    %v1484 = vld [vmem:[#allocation2 + $0x242] sm:$0xff]
    %v1485 = vld [vmem:[#allocation2 + $0x24a] sm:$0xff]
    %v1486 = vld [vmem:[#allocation2 + $0x25a] sm:$0xff]
    %v1487 = vld [vmem:[#allocation2 + $0x262] sm:$0xff]
    %v1488 = vld [vmem:[#allocation2 + $0x272] sm:$0xff]
    %v1489 = vld [vmem:[#allocation2 + $0x27a] sm:$0xff]
    %v1490 = vld [vmem:[#allocation2 + $0x28a] sm:$0xff]
    %v1491 = vld [vmem:[#allocation2 + $0x292] sm:$0xff]
    %v1492 = vld [vmem:[#allocation2 + $0x2a2] sm:$0xff]
    %v1493 = vld [vmem:[#allocation2 + $0x2aa] sm:$0xff]
    %v1494 = vld [vmem:[#allocation2 + $0x2ba] sm:$0xff]
    %v1495 = vld [vmem:[#allocation2 + $0x2c2] sm:$0xff]
    %v1496 = vld [vmem:[#allocation2 + $0x2d2] sm:$0xff]
    %v1497 = vld [vmem:[#allocation2 + $0x2da] sm:$0xff]
    %v1498 = vld [vmem:[#allocation2 + $0x2ea] sm:$0xff]
    %v1499 = vld [vmem:[#allocation2 + $0x2f2] sm:$0xff]
    %v1500 = vld [vmem:[#allocation2 + $0x302] sm:$0xff]
    %v1501 = vld [vmem:[#allocation2 + $0x30a] sm:$0xff]
    %v1502 = vld [vmem:[#allocation2 + $0x31a] sm:$0xff]
    %v1503 = vld [vmem:[#allocation2 + $0x322] sm:$0xff]
    %v1504 = vpack.c.bf16 %v1441, %v1440
    %v1505 = vpack.c.bf16 %v1443, %v1442
    %v1506 = vpack.c.bf16 %v1445, %v1444
    %v1507 = vpack.c.bf16 %v1447, %v1446
    %v1508 = vpack.c.bf16 %v1449, %v1448
    %v1509 = vpack.c.bf16 %v1451, %v1450
    %v1510 = vpack.c.bf16 %v1453, %v1452
    %v1511 = vpack.c.bf16 %v1455, %v1454
    %v1512 = vpack.c.bf16 %v1457, %v1456
    %v1513 = vpack.c.bf16 %v1459, %v1458
    %v1514 = vpack.c.bf16 %v1461, %v1460
    %v1515 = vpack.c.bf16 %v1463, %v1462
    %v1516 = vpack.c.bf16 %v1465, %v1464
    %v1517 = vpack.c.bf16 %v1467, %v1466
    %v1518 = vpack.c.bf16 %v1469, %v1468
    %v1519 = vpack.c.bf16 %v1471, %v1470
    %v1520 = vpack.c.bf16 %v1473, %v1472
    %v1521 = vpack.c.bf16 %v1475, %v1474
    %v1522 = vpack.c.bf16 %v1477, %v1476
    %v1523 = vpack.c.bf16 %v1479, %v1478
    %v1524 = vpack.c.bf16 %v1481, %v1480
    %v1525 = vpack.c.bf16 %v1483, %v1482
    %v1526 = vpack.c.bf16 %v1485, %v1484
    %v1527 = vpack.c.bf16 %v1487, %v1486
    %v1528 = vpack.c.bf16 %v1489, %v1488
    %v1529 = vpack.c.bf16 %v1491, %v1490
    %v1530 = vpack.c.bf16 %v1493, %v1492
    %v1531 = vpack.c.bf16 %v1495, %v1494
    %v1532 = vpack.c.bf16 %v1497, %v1496
    %v1533 = vpack.c.bf16 %v1499, %v1498
    %v1534 = vpack.c.bf16 %v1501, %v1500
    %v1535 = vpack.c.bf16 %v1503, %v1502
    %s1536 = scalar_lea.vmem %s3, 128
    %v1537 = vld [vmem:[%s1536] sm:$0xf]
    %v1538 = vld [vmem:[%s1536 + $0x4] sm:$0xf]
    %v1539 = vld [vmem:[%s1536 + $0x8] sm:$0xf]
    %v1540 = vld [vmem:[%s1536 + $0xc] sm:$0xf]
    %v1541 = vld [vmem:[%s1536 + $0x10] sm:$0xf]
    %v1542 = vld [vmem:[%s1536 + $0x14] sm:$0xf]
    %v1543 = vld [vmem:[%s1536 + $0x18] sm:$0xf]
    %v1544 = vld [vmem:[%s1536 + $0x1c] sm:$0xf]
    %v1545 = vld [vmem:[%s1536 + $0x20] sm:$0xf]
    %v1546 = vld [vmem:[%s1536 + $0x24] sm:$0xf]
    %v1547 = vld [vmem:[%s1536 + $0x28] sm:$0xf]
    %v1548 = vld [vmem:[%s1536 + $0x2c] sm:$0xf]
    %v1549 = vld [vmem:[%s1536 + $0x30] sm:$0xf]
    %v1550 = vld [vmem:[%s1536 + $0x34] sm:$0xf]
    %v1551 = vld [vmem:[%s1536 + $0x38] sm:$0xf]
    %v1552 = vld [vmem:[%s1536 + $0x3c] sm:$0xf]
    %v1569 = vunpack.c.l.b16 %v1537
    %v1570 = vunpack.c.l.b16 %v1538
    %v1571 = vunpack.c.l.b16 %v1539
    %v1572 = vunpack.c.l.b16 %v1540
    %v1573 = vunpack.c.l.b16 %v1541
    %v1574 = vunpack.c.l.b16 %v1542
    %v1575 = vunpack.c.l.b16 %v1543
    %v1576 = vunpack.c.l.b16 %v1544
    %v1577 = vunpack.c.l.b16 %v1545
    %v1578 = vunpack.c.l.b16 %v1546
    %v1579 = vunpack.c.l.b16 %v1547
    %v1580 = vunpack.c.l.b16 %v1548
    %v1581 = vunpack.c.l.b16 %v1549
    %v1582 = vunpack.c.l.b16 %v1550
    %v1583 = vunpack.c.l.b16 %v1551
    %v1584 = vunpack.c.l.b16 %v1552
    %v1585 = vpack.c.b16 %v1570, %v1569
    %v1586 = vpack.c.b16 %v1572, %v1571
    %v1587 = vpack.c.b16 %v1574, %v1573
    %v1588 = vpack.c.b16 %v1576, %v1575
    %v1589 = vpack.c.b16 %v1578, %v1577
    %v1590 = vpack.c.b16 %v1580, %v1579
    %v1591 = vpack.c.b16 %v1582, %v1581
    %v1592 = vpack.c.b16 %v1584, %v1583
    %1601 = vmatpush.bf16.msra.mxu0 %v1592
    %1602 = vmatpush.bf16.msra.mxu0 %v1591
    %1603 = vmatpush.bf16.msra.mxu0 %v1590
    %1604 = vmatpush.bf16.msra.mxu0 %v1589
    %1605 = vmatpush.bf16.msra.mxu0 %v1588
    %1606 = vmatpush.bf16.msra.mxu0 %v1587
    %1607 = vmatpush.bf16.msra.mxu0 %v1586
    %1608 = vmatpush.bf16.msra.mxu0 %v1585
    %1609 = vmatmul.bf16.gmra.mxu0 %v1504
    %v1610 = vpop.f32.mrf.mxu0
    %v1611 = vadd.f32 0.0, %v1610
    %v1612 = vpop.f32.mrf.mxu0
    %v1613 = vadd.f32 0.0, %v1612
    %1614 = vmatmul.bf16.gmra.mxu0 %v1505
    %v1615 = vpop.f32.mrf.mxu0
    %v1616 = vadd.f32 0.0, %v1615
    %v1617 = vpop.f32.mrf.mxu0
    %v1618 = vadd.f32 0.0, %v1617
    %1619 = vmatmul.bf16.gmra.mxu0 %v1506
    %v1620 = vpop.f32.mrf.mxu0
    %v1621 = vadd.f32 0.0, %v1620
    %v1622 = vpop.f32.mrf.mxu0
    %v1623 = vadd.f32 0.0, %v1622
    %1624 = vmatmul.bf16.gmra.mxu0 %v1507
    %v1625 = vpop.f32.mrf.mxu0
    %v1626 = vadd.f32 0.0, %v1625
    %v1627 = vpop.f32.mrf.mxu0
    %v1628 = vadd.f32 0.0, %v1627
    %1629 = vmatmul.bf16.gmra.mxu0 %v1508
    %v1630 = vpop.f32.mrf.mxu0
    %v1631 = vadd.f32 0.0, %v1630
    %v1632 = vpop.f32.mrf.mxu0
    %v1633 = vadd.f32 0.0, %v1632
    %1634 = vmatmul.bf16.gmra.mxu0 %v1509
    %v1635 = vpop.f32.mrf.mxu0
    %v1636 = vadd.f32 0.0, %v1635
    %v1637 = vpop.f32.mrf.mxu0
    %v1638 = vadd.f32 0.0, %v1637
    %1639 = vmatmul.bf16.gmra.mxu0 %v1510
    %v1640 = vpop.f32.mrf.mxu0
    %v1641 = vadd.f32 0.0, %v1640
    %v1642 = vpop.f32.mrf.mxu0
    %v1643 = vadd.f32 0.0, %v1642
    %1644 = vmatmul.bf16.gmra.mxu0 %v1511
    %v1645 = vpop.f32.mrf.mxu0
    %v1646 = vadd.f32 0.0, %v1645
    %v1647 = vpop.f32.mrf.mxu0
    %v1648 = vadd.f32 0.0, %v1647
    %1649 = vmatmul.bf16.gmra.mxu0 %v1512
    %v1650 = vpop.f32.mrf.mxu0
    %v1651 = vadd.f32 0.0, %v1650
    %v1652 = vpop.f32.mrf.mxu0
    %v1653 = vadd.f32 0.0, %v1652
    %1654 = vmatmul.bf16.gmra.mxu0 %v1513
    %v1655 = vpop.f32.mrf.mxu0
    %v1656 = vadd.f32 0.0, %v1655
    %v1657 = vpop.f32.mrf.mxu0
    %v1658 = vadd.f32 0.0, %v1657
    %1659 = vmatmul.bf16.gmra.mxu0 %v1514
    %v1660 = vpop.f32.mrf.mxu0
    %v1661 = vadd.f32 0.0, %v1660
    %v1662 = vpop.f32.mrf.mxu0
    %v1663 = vadd.f32 0.0, %v1662
    %1664 = vmatmul.bf16.gmra.mxu0 %v1515
    %v1665 = vpop.f32.mrf.mxu0
    %v1666 = vadd.f32 0.0, %v1665
    %v1667 = vpop.f32.mrf.mxu0
    %v1668 = vadd.f32 0.0, %v1667
    %1669 = vmatmul.bf16.gmra.mxu0 %v1516
    %v1670 = vpop.f32.mrf.mxu0
    %v1671 = vadd.f32 0.0, %v1670
    %v1672 = vpop.f32.mrf.mxu0
    %v1673 = vadd.f32 0.0, %v1672
    %1674 = vmatmul.bf16.gmra.mxu0 %v1517
    %v1675 = vpop.f32.mrf.mxu0
    %v1676 = vadd.f32 0.0, %v1675
    %v1677 = vpop.f32.mrf.mxu0
    %v1678 = vadd.f32 0.0, %v1677
    %1679 = vmatmul.bf16.gmra.mxu0 %v1518
    %v1680 = vpop.f32.mrf.mxu0
    %v1681 = vadd.f32 0.0, %v1680
    %v1682 = vpop.f32.mrf.mxu0
    %v1683 = vadd.f32 0.0, %v1682
    %1684 = vmatmul.bf16.gmra.mxu0 %v1519
    %v1685 = vpop.f32.mrf.mxu0
    %v1686 = vadd.f32 0.0, %v1685
    %v1687 = vpop.f32.mrf.mxu0
    %v1688 = vadd.f32 0.0, %v1687
    %1689 = vmatmul.bf16.gmra.mxu0 %v1520
    %v1690 = vpop.f32.mrf.mxu0
    %v1691 = vadd.f32 0.0, %v1690
    %v1692 = vpop.f32.mrf.mxu0
    %v1693 = vadd.f32 0.0, %v1692
    %1694 = vmatmul.bf16.gmra.mxu0 %v1521
    %v1695 = vpop.f32.mrf.mxu0
    %v1696 = vadd.f32 0.0, %v1695
    %v1697 = vpop.f32.mrf.mxu0
    %v1698 = vadd.f32 0.0, %v1697
    %1699 = vmatmul.bf16.gmra.mxu0 %v1522
    %v1700 = vpop.f32.mrf.mxu0
    %v1701 = vadd.f32 0.0, %v1700
    %v1702 = vpop.f32.mrf.mxu0
    %v1703 = vadd.f32 0.0, %v1702
    %1704 = vmatmul.bf16.gmra.mxu0 %v1523
    %v1705 = vpop.f32.mrf.mxu0
    %v1706 = vadd.f32 0.0, %v1705
    %v1707 = vpop.f32.mrf.mxu0
    %v1708 = vadd.f32 0.0, %v1707
    %1709 = vmatmul.bf16.gmra.mxu0 %v1524
    %v1710 = vpop.f32.mrf.mxu0
    %v1711 = vadd.f32 0.0, %v1710
    %v1712 = vpop.f32.mrf.mxu0
    %v1713 = vadd.f32 0.0, %v1712
    %1714 = vmatmul.bf16.gmra.mxu0 %v1525
    %v1715 = vpop.f32.mrf.mxu0
    %v1716 = vadd.f32 0.0, %v1715
    %v1717 = vpop.f32.mrf.mxu0
    %v1718 = vadd.f32 0.0, %v1717
    %1719 = vmatmul.bf16.gmra.mxu0 %v1526
    %v1720 = vpop.f32.mrf.mxu0
    %v1721 = vadd.f32 0.0, %v1720
    %v1722 = vpop.f32.mrf.mxu0
    %v1723 = vadd.f32 0.0, %v1722
    %1724 = vmatmul.bf16.gmra.mxu0 %v1527
    %v1725 = vpop.f32.mrf.mxu0
    %v1726 = vadd.f32 0.0, %v1725
    %v1727 = vpop.f32.mrf.mxu0
    %v1728 = vadd.f32 0.0, %v1727
    %1729 = vmatmul.bf16.gmra.mxu0 %v1528
    %v1730 = vpop.f32.mrf.mxu0
    %v1731 = vadd.f32 0.0, %v1730
    %v1732 = vpop.f32.mrf.mxu0
    %v1733 = vadd.f32 0.0, %v1732
    %1734 = vmatmul.bf16.gmra.mxu0 %v1529
    %v1735 = vpop.f32.mrf.mxu0
    %v1736 = vadd.f32 0.0, %v1735
    %v1737 = vpop.f32.mrf.mxu0
    %v1738 = vadd.f32 0.0, %v1737
    %1739 = vmatmul.bf16.gmra.mxu0 %v1530
    %v1740 = vpop.f32.mrf.mxu0
    %v1741 = vadd.f32 0.0, %v1740
    %v1742 = vpop.f32.mrf.mxu0
    %v1743 = vadd.f32 0.0, %v1742
    %1744 = vmatmul.bf16.gmra.mxu0 %v1531
    %v1745 = vpop.f32.mrf.mxu0
    %v1746 = vadd.f32 0.0, %v1745
    %v1747 = vpop.f32.mrf.mxu0
    %v1748 = vadd.f32 0.0, %v1747
    %1749 = vmatmul.bf16.gmra.mxu0 %v1532
    %v1750 = vpop.f32.mrf.mxu0
    %v1751 = vadd.f32 0.0, %v1750
    %v1752 = vpop.f32.mrf.mxu0
    %v1753 = vadd.f32 0.0, %v1752
    %1754 = vmatmul.bf16.gmra.mxu0 %v1533
    %v1755 = vpop.f32.mrf.mxu0
    %v1756 = vadd.f32 0.0, %v1755
    %v1757 = vpop.f32.mrf.mxu0
    %v1758 = vadd.f32 0.0, %v1757
    %1759 = vmatmul.bf16.gmra.mxu0 %v1534
    %v1760 = vpop.f32.mrf.mxu0
    %v1761 = vadd.f32 0.0, %v1760
    %v1762 = vpop.f32.mrf.mxu0
    %v1763 = vadd.f32 0.0, %v1762
    %1764 = vmatmul.bf16.gmra.mxu0 %v1535
    %v1765 = vpop.f32.mrf.mxu0
    %v1766 = vadd.f32 0.0, %v1765
    %v1767 = vpop.f32.mrf.mxu0
    %v1768 = vadd.f32 0.0, %v1767
    %1769 = vdwg.mxu0
    %v1770 = vadd.f32 %v1281, %v1611
    %v1771 = vadd.f32 %v1283, %v1613
    %v1772 = vadd.f32 %v1286, %v1616
    %v1773 = vadd.f32 %v1288, %v1618
    %v1774 = vadd.f32 %v1291, %v1621
    %v1775 = vadd.f32 %v1293, %v1623
    %v1776 = vadd.f32 %v1296, %v1626
    %v1777 = vadd.f32 %v1298, %v1628
    %v1778 = vadd.f32 %v1301, %v1631
    %v1779 = vadd.f32 %v1303, %v1633
    %v1780 = vadd.f32 %v1306, %v1636
    %v1781 = vadd.f32 %v1308, %v1638
    %v1782 = vadd.f32 %v1311, %v1641
    %v1783 = vadd.f32 %v1313, %v1643
    %v1784 = vadd.f32 %v1316, %v1646
    %v1785 = vadd.f32 %v1318, %v1648
    %v1786 = vadd.f32 %v1321, %v1651
    %v1787 = vadd.f32 %v1323, %v1653
    %v1788 = vadd.f32 %v1326, %v1656
    %v1789 = vadd.f32 %v1328, %v1658
    %v1790 = vadd.f32 %v1331, %v1661
    %v1791 = vadd.f32 %v1333, %v1663
    %v1792 = vadd.f32 %v1336, %v1666
    %v1793 = vadd.f32 %v1338, %v1668
    %v1794 = vadd.f32 %v1341, %v1671
    %v1795 = vadd.f32 %v1343, %v1673
    %v1796 = vadd.f32 %v1346, %v1676
    %v1797 = vadd.f32 %v1348, %v1678
    %v1798 = vadd.f32 %v1351, %v1681
    %v1799 = vadd.f32 %v1353, %v1683
    %v1800 = vadd.f32 %v1356, %v1686
    %v1801 = vadd.f32 %v1358, %v1688
    %v1802 = vadd.f32 %v1361, %v1691
    %v1803 = vadd.f32 %v1363, %v1693
    %v1804 = vadd.f32 %v1366, %v1696
    %v1805 = vadd.f32 %v1368, %v1698
    %v1806 = vadd.f32 %v1371, %v1701
    %v1807 = vadd.f32 %v1373, %v1703
    %v1808 = vadd.f32 %v1376, %v1706
    %v1809 = vadd.f32 %v1378, %v1708
    %v1810 = vadd.f32 %v1381, %v1711
    %v1811 = vadd.f32 %v1383, %v1713
    %v1812 = vadd.f32 %v1386, %v1716
    %v1813 = vadd.f32 %v1388, %v1718
    %v1814 = vadd.f32 %v1391, %v1721
    %v1815 = vadd.f32 %v1393, %v1723
    %v1816 = vadd.f32 %v1396, %v1726
    %v1817 = vadd.f32 %v1398, %v1728
    %v1818 = vadd.f32 %v1401, %v1731
    %v1819 = vadd.f32 %v1403, %v1733
    %v1820 = vadd.f32 %v1406, %v1736
    %v1821 = vadd.f32 %v1408, %v1738
    %v1822 = vadd.f32 %v1411, %v1741
    %v1823 = vadd.f32 %v1413, %v1743
    %v1824 = vadd.f32 %v1416, %v1746
    %v1825 = vadd.f32 %v1418, %v1748
    %v1826 = vadd.f32 %v1421, %v1751
    %v1827 = vadd.f32 %v1423, %v1753
    %v1828 = vadd.f32 %v1426, %v1756
    %v1829 = vadd.f32 %v1428, %v1758
    %v1830 = vadd.f32 %v1431, %v1761
    %v1831 = vadd.f32 %v1433, %v1763
    %v1832 = vadd.f32 %v1436, %v1766
    %v1833 = vadd.f32 %v1438, %v1768
    %v1834 = vld [vmem:[%s716] sm:$0xff]
    %v1835 = vld [vmem:[%s716 + $0x8] sm:$0xff]
    %v1836 = vld [vmem:[%s716 + $0x18] sm:$0xff]
    %v1837 = vld [vmem:[%s716 + $0x20] sm:$0xff]
    %v1838 = vld [vmem:[%s716 + $0x30] sm:$0xff]
    %v1839 = vld [vmem:[%s716 + $0x38] sm:$0xff]
    %v1840 = vld [vmem:[%s716 + $0x48] sm:$0xff]
    %v1841 = vld [vmem:[%s716 + $0x50] sm:$0xff]
    %v1842 = vld [vmem:[%s716 + $0x60] sm:$0xff]
    %v1843 = vld [vmem:[%s716 + $0x68] sm:$0xff]
    %v1844 = vld [vmem:[%s716 + $0x78] sm:$0xff]
    %v1845 = vld [vmem:[%s716 + $0x80] sm:$0xff]
    %v1846 = vld [vmem:[%s716 + $0x90] sm:$0xff]
    %v1847 = vld [vmem:[%s716 + $0x98] sm:$0xff]
    %v1848 = vld [vmem:[%s716 + $0xa8] sm:$0xff]
    %v1849 = vld [vmem:[%s716 + $0xb0] sm:$0xff]
    %v1850 = vld [vmem:[%s716 + $0xc0] sm:$0xff]
    %v1851 = vld [vmem:[%s716 + $0xc8] sm:$0xff]
    %v1852 = vld [vmem:[%s716 + $0xd8] sm:$0xff]
    %v1853 = vld [vmem:[%s716 + $0xe0] sm:$0xff]
    %v1854 = vld [vmem:[%s716 + $0xf0] sm:$0xff]
    %v1855 = vld [vmem:[%s716 + $0xf8] sm:$0xff]
    %v1856 = vld [vmem:[%s716 + $0x108] sm:$0xff]
    %v1857 = vld [vmem:[%s716 + $0x110] sm:$0xff]
    %v1858 = vld [vmem:[%s716 + $0x120] sm:$0xff]
    %v1859 = vld [vmem:[%s716 + $0x128] sm:$0xff]
    %v1860 = vld [vmem:[%s716 + $0x138] sm:$0xff]
    %v1861 = vld [vmem:[%s716 + $0x140] sm:$0xff]
    %v1862 = vld [vmem:[%s716 + $0x150] sm:$0xff]
    %v1863 = vld [vmem:[%s716 + $0x158] sm:$0xff]
    %v1864 = vld [vmem:[%s716 + $0x168] sm:$0xff]
    %v1865 = vld [vmem:[%s716 + $0x170] sm:$0xff]
    %v1866 = vld [vmem:[%s716 + $0x1b0] sm:$0xff]
    %v1867 = vld [vmem:[%s716 + $0x1b8] sm:$0xff]
    %v1868 = vld [vmem:[%s716 + $0x1c8] sm:$0xff]
    %v1869 = vld [vmem:[%s716 + $0x1d0] sm:$0xff]
    %v1870 = vld [vmem:[%s716 + $0x1e0] sm:$0xff]
    %v1871 = vld [vmem:[%s716 + $0x1e8] sm:$0xff]
    %v1872 = vld [vmem:[%s716 + $0x1f8] sm:$0xff]
    %v1873 = vld [vmem:[%s716 + $0x200] sm:$0xff]
    %v1874 = vld [vmem:[%s716 + $0x210] sm:$0xff]
    %v1875 = vld [vmem:[%s716 + $0x218] sm:$0xff]
    %v1876 = vld [vmem:[%s716 + $0x228] sm:$0xff]
    %v1877 = vld [vmem:[%s716 + $0x230] sm:$0xff]
    %v1878 = vld [vmem:[%s716 + $0x240] sm:$0xff]
    %v1879 = vld [vmem:[%s716 + $0x248] sm:$0xff]
    %v1880 = vld [vmem:[%s716 + $0x258] sm:$0xff]
    %v1881 = vld [vmem:[%s716 + $0x260] sm:$0xff]
    %v1882 = vld [vmem:[%s716 + $0x270] sm:$0xff]
    %v1883 = vld [vmem:[%s716 + $0x278] sm:$0xff]
    %v1884 = vld [vmem:[%s716 + $0x288] sm:$0xff]
    %v1885 = vld [vmem:[%s716 + $0x290] sm:$0xff]
    %v1886 = vld [vmem:[%s716 + $0x2a0] sm:$0xff]
    %v1887 = vld [vmem:[%s716 + $0x2a8] sm:$0xff]
    %v1888 = vld [vmem:[%s716 + $0x2b8] sm:$0xff]
    %v1889 = vld [vmem:[%s716 + $0x2c0] sm:$0xff]
    %v1890 = vld [vmem:[%s716 + $0x2d0] sm:$0xff]
    %v1891 = vld [vmem:[%s716 + $0x2d8] sm:$0xff]
    %v1892 = vld [vmem:[%s716 + $0x2e8] sm:$0xff]
    %v1893 = vld [vmem:[%s716 + $0x2f0] sm:$0xff]
    %v1894 = vld [vmem:[%s716 + $0x300] sm:$0xff]
    %v1895 = vld [vmem:[%s716 + $0x308] sm:$0xff]
    %v1896 = vld [vmem:[%s716 + $0x318] sm:$0xff]
    %v1897 = vld [vmem:[%s716 + $0x320] sm:$0xff]
    %v1898 = vpack.c.bf16 %v1835, %v1834
    %v1899 = vpack.c.bf16 %v1837, %v1836
    %v1900 = vpack.c.bf16 %v1839, %v1838
    %v1901 = vpack.c.bf16 %v1841, %v1840
    %v1902 = vpack.c.bf16 %v1843, %v1842
    %v1903 = vpack.c.bf16 %v1845, %v1844
    %v1904 = vpack.c.bf16 %v1847, %v1846
    %v1905 = vpack.c.bf16 %v1849, %v1848
    %v1906 = vpack.c.bf16 %v1851, %v1850
    %v1907 = vpack.c.bf16 %v1853, %v1852
    %v1908 = vpack.c.bf16 %v1855, %v1854
    %v1909 = vpack.c.bf16 %v1857, %v1856
    %v1910 = vpack.c.bf16 %v1859, %v1858
    %v1911 = vpack.c.bf16 %v1861, %v1860
    %v1912 = vpack.c.bf16 %v1863, %v1862
    %v1913 = vpack.c.bf16 %v1865, %v1864
    %v1914 = vpack.c.bf16 %v1867, %v1866
    %v1915 = vpack.c.bf16 %v1869, %v1868
    %v1916 = vpack.c.bf16 %v1871, %v1870
    %v1917 = vpack.c.bf16 %v1873, %v1872
    %v1918 = vpack.c.bf16 %v1875, %v1874
    %v1919 = vpack.c.bf16 %v1877, %v1876
    %v1920 = vpack.c.bf16 %v1879, %v1878
    %v1921 = vpack.c.bf16 %v1881, %v1880
    %v1922 = vpack.c.bf16 %v1883, %v1882
    %v1923 = vpack.c.bf16 %v1885, %v1884
    %v1924 = vpack.c.bf16 %v1887, %v1886
    %v1925 = vpack.c.bf16 %v1889, %v1888
    %v1926 = vpack.c.bf16 %v1891, %v1890
    %v1927 = vpack.c.bf16 %v1893, %v1892
    %v1928 = vpack.c.bf16 %v1895, %v1894
    %v1929 = vpack.c.bf16 %v1897, %v1896
    %s1930 = scalar_lea.vmem %s3, 192
    %v1931 = vld [vmem:[%s1930] sm:$0xf]
    %v1932 = vld [vmem:[%s1930 + $0x4] sm:$0xf]
    %v1933 = vld [vmem:[%s1930 + $0x8] sm:$0xf]
    %v1934 = vld [vmem:[%s1930 + $0xc] sm:$0xf]
    %v1935 = vld [vmem:[%s1930 + $0x10] sm:$0xf]
    %v1936 = vld [vmem:[%s1930 + $0x14] sm:$0xf]
    %v1937 = vld [vmem:[%s1930 + $0x18] sm:$0xf]
    %v1938 = vld [vmem:[%s1930 + $0x1c] sm:$0xf]
    %v1939 = vld [vmem:[%s1930 + $0x20] sm:$0xf]
    %v1940 = vld [vmem:[%s1930 + $0x24] sm:$0xf]
    %v1941 = vld [vmem:[%s1930 + $0x28] sm:$0xf]
    %v1942 = vld [vmem:[%s1930 + $0x2c] sm:$0xf]
    %v1943 = vld [vmem:[%s1930 + $0x30] sm:$0xf]
    %v1944 = vld [vmem:[%s1930 + $0x34] sm:$0xf]
    %v1945 = vld [vmem:[%s1930 + $0x38] sm:$0xf]
    %v1946 = vld [vmem:[%s1930 + $0x3c] sm:$0xf]
    %v1963 = vunpack.c.l.b16 %v1931
    %v1964 = vunpack.c.l.b16 %v1932
    %v1965 = vunpack.c.l.b16 %v1933
    %v1966 = vunpack.c.l.b16 %v1934
    %v1967 = vunpack.c.l.b16 %v1935
    %v1968 = vunpack.c.l.b16 %v1936
    %v1969 = vunpack.c.l.b16 %v1937
    %v1970 = vunpack.c.l.b16 %v1938
    %v1971 = vunpack.c.l.b16 %v1939
    %v1972 = vunpack.c.l.b16 %v1940
    %v1973 = vunpack.c.l.b16 %v1941
    %v1974 = vunpack.c.l.b16 %v1942
    %v1975 = vunpack.c.l.b16 %v1943
    %v1976 = vunpack.c.l.b16 %v1944
    %v1977 = vunpack.c.l.b16 %v1945
    %v1978 = vunpack.c.l.b16 %v1946
    %v1979 = vpack.c.b16 %v1964, %v1963
    %v1980 = vpack.c.b16 %v1966, %v1965
    %v1981 = vpack.c.b16 %v1968, %v1967
    %v1982 = vpack.c.b16 %v1970, %v1969
    %v1983 = vpack.c.b16 %v1972, %v1971
    %v1984 = vpack.c.b16 %v1974, %v1973
    %v1985 = vpack.c.b16 %v1976, %v1975
    %v1986 = vpack.c.b16 %v1978, %v1977
    %1995 = vmatpush.bf16.msra.mxu0 %v1986
    %1996 = vmatpush.bf16.msra.mxu0 %v1985
    %1997 = vmatpush.bf16.msra.mxu0 %v1984
    %1998 = vmatpush.bf16.msra.mxu0 %v1983
    %1999 = vmatpush.bf16.msra.mxu0 %v1982
    %2000 = vmatpush.bf16.msra.mxu0 %v1981
    %2001 = vmatpush.bf16.msra.mxu0 %v1980
    %2002 = vmatpush.bf16.msra.mxu0 %v1979
    %2003 = vmatmul.bf16.gmra.mxu0 %v1898
    %v2004 = vpop.f32.mrf.mxu0
    %v2005 = vadd.f32 0.0, %v2004
    %v2006 = vpop.f32.mrf.mxu0
    %v2007 = vadd.f32 0.0, %v2006
    %2008 = vmatmul.bf16.gmra.mxu0 %v1899
    %v2009 = vpop.f32.mrf.mxu0
    %v2010 = vadd.f32 0.0, %v2009
    %v2011 = vpop.f32.mrf.mxu0
    %v2012 = vadd.f32 0.0, %v2011
    %2013 = vmatmul.bf16.gmra.mxu0 %v1900
    %v2014 = vpop.f32.mrf.mxu0
    %v2015 = vadd.f32 0.0, %v2014
    %v2016 = vpop.f32.mrf.mxu0
    %v2017 = vadd.f32 0.0, %v2016
    %2018 = vmatmul.bf16.gmra.mxu0 %v1901
    %v2019 = vpop.f32.mrf.mxu0
    %v2020 = vadd.f32 0.0, %v2019
    %v2021 = vpop.f32.mrf.mxu0
    %v2022 = vadd.f32 0.0, %v2021
    %2023 = vmatmul.bf16.gmra.mxu0 %v1902
    %v2024 = vpop.f32.mrf.mxu0
    %v2025 = vadd.f32 0.0, %v2024
    %v2026 = vpop.f32.mrf.mxu0
    %v2027 = vadd.f32 0.0, %v2026
    %2028 = vmatmul.bf16.gmra.mxu0 %v1903
    %v2029 = vpop.f32.mrf.mxu0
    %v2030 = vadd.f32 0.0, %v2029
    %v2031 = vpop.f32.mrf.mxu0
    %v2032 = vadd.f32 0.0, %v2031
    %2033 = vmatmul.bf16.gmra.mxu0 %v1904
    %v2034 = vpop.f32.mrf.mxu0
    %v2035 = vadd.f32 0.0, %v2034
    %v2036 = vpop.f32.mrf.mxu0
    %v2037 = vadd.f32 0.0, %v2036
    %2038 = vmatmul.bf16.gmra.mxu0 %v1905
    %v2039 = vpop.f32.mrf.mxu0
    %v2040 = vadd.f32 0.0, %v2039
    %v2041 = vpop.f32.mrf.mxu0
    %v2042 = vadd.f32 0.0, %v2041
    %2043 = vmatmul.bf16.gmra.mxu0 %v1906
    %v2044 = vpop.f32.mrf.mxu0
    %v2045 = vadd.f32 0.0, %v2044
    %v2046 = vpop.f32.mrf.mxu0
    %v2047 = vadd.f32 0.0, %v2046
    %2048 = vmatmul.bf16.gmra.mxu0 %v1907
    %v2049 = vpop.f32.mrf.mxu0
    %v2050 = vadd.f32 0.0, %v2049
    %v2051 = vpop.f32.mrf.mxu0
    %v2052 = vadd.f32 0.0, %v2051
    %2053 = vmatmul.bf16.gmra.mxu0 %v1908
    %v2054 = vpop.f32.mrf.mxu0
    %v2055 = vadd.f32 0.0, %v2054
    %v2056 = vpop.f32.mrf.mxu0
    %v2057 = vadd.f32 0.0, %v2056
    %2058 = vmatmul.bf16.gmra.mxu0 %v1909
    %v2059 = vpop.f32.mrf.mxu0
    %v2060 = vadd.f32 0.0, %v2059
    %v2061 = vpop.f32.mrf.mxu0
    %v2062 = vadd.f32 0.0, %v2061
    %2063 = vmatmul.bf16.gmra.mxu0 %v1910
    %v2064 = vpop.f32.mrf.mxu0
    %v2065 = vadd.f32 0.0, %v2064
    %v2066 = vpop.f32.mrf.mxu0
    %v2067 = vadd.f32 0.0, %v2066
    %2068 = vmatmul.bf16.gmra.mxu0 %v1911
    %v2069 = vpop.f32.mrf.mxu0
    %v2070 = vadd.f32 0.0, %v2069
    %v2071 = vpop.f32.mrf.mxu0
    %v2072 = vadd.f32 0.0, %v2071
    %2073 = vmatmul.bf16.gmra.mxu0 %v1912
    %v2074 = vpop.f32.mrf.mxu0
    %v2075 = vadd.f32 0.0, %v2074
    %v2076 = vpop.f32.mrf.mxu0
    %v2077 = vadd.f32 0.0, %v2076
    %2078 = vmatmul.bf16.gmra.mxu0 %v1913
    %v2079 = vpop.f32.mrf.mxu0
    %v2080 = vadd.f32 0.0, %v2079
    %v2081 = vpop.f32.mrf.mxu0
    %v2082 = vadd.f32 0.0, %v2081
    %2083 = vmatmul.bf16.gmra.mxu0 %v1914
    %v2084 = vpop.f32.mrf.mxu0
    %v2085 = vadd.f32 0.0, %v2084
    %v2086 = vpop.f32.mrf.mxu0
    %v2087 = vadd.f32 0.0, %v2086
    %2088 = vmatmul.bf16.gmra.mxu0 %v1915
    %v2089 = vpop.f32.mrf.mxu0
    %v2090 = vadd.f32 0.0, %v2089
    %v2091 = vpop.f32.mrf.mxu0
    %v2092 = vadd.f32 0.0, %v2091
    %2093 = vmatmul.bf16.gmra.mxu0 %v1916
    %v2094 = vpop.f32.mrf.mxu0
    %v2095 = vadd.f32 0.0, %v2094
    %v2096 = vpop.f32.mrf.mxu0
    %v2097 = vadd.f32 0.0, %v2096
    %2098 = vmatmul.bf16.gmra.mxu0 %v1917
    %v2099 = vpop.f32.mrf.mxu0
    %v2100 = vadd.f32 0.0, %v2099
    %v2101 = vpop.f32.mrf.mxu0
    %v2102 = vadd.f32 0.0, %v2101
    %2103 = vmatmul.bf16.gmra.mxu0 %v1918
    %v2104 = vpop.f32.mrf.mxu0
    %v2105 = vadd.f32 0.0, %v2104
    %v2106 = vpop.f32.mrf.mxu0
    %v2107 = vadd.f32 0.0, %v2106
    %2108 = vmatmul.bf16.gmra.mxu0 %v1919
    %v2109 = vpop.f32.mrf.mxu0
    %v2110 = vadd.f32 0.0, %v2109
    %v2111 = vpop.f32.mrf.mxu0
    %v2112 = vadd.f32 0.0, %v2111
    %2113 = vmatmul.bf16.gmra.mxu0 %v1920
    %v2114 = vpop.f32.mrf.mxu0
    %v2115 = vadd.f32 0.0, %v2114
    %v2116 = vpop.f32.mrf.mxu0
    %v2117 = vadd.f32 0.0, %v2116
    %2118 = vmatmul.bf16.gmra.mxu0 %v1921
    %v2119 = vpop.f32.mrf.mxu0
    %v2120 = vadd.f32 0.0, %v2119
    %v2121 = vpop.f32.mrf.mxu0
    %v2122 = vadd.f32 0.0, %v2121
    %2123 = vmatmul.bf16.gmra.mxu0 %v1922
    %v2124 = vpop.f32.mrf.mxu0
    %v2125 = vadd.f32 0.0, %v2124
    %v2126 = vpop.f32.mrf.mxu0
    %v2127 = vadd.f32 0.0, %v2126
    %2128 = vmatmul.bf16.gmra.mxu0 %v1923
    %v2129 = vpop.f32.mrf.mxu0
    %v2130 = vadd.f32 0.0, %v2129
    %v2131 = vpop.f32.mrf.mxu0
    %v2132 = vadd.f32 0.0, %v2131
    %2133 = vmatmul.bf16.gmra.mxu0 %v1924
    %v2134 = vpop.f32.mrf.mxu0
    %v2135 = vadd.f32 0.0, %v2134
    %v2136 = vpop.f32.mrf.mxu0
    %v2137 = vadd.f32 0.0, %v2136
    %2138 = vmatmul.bf16.gmra.mxu0 %v1925
    %v2139 = vpop.f32.mrf.mxu0
    %v2140 = vadd.f32 0.0, %v2139
    %v2141 = vpop.f32.mrf.mxu0
    %v2142 = vadd.f32 0.0, %v2141
    %2143 = vmatmul.bf16.gmra.mxu0 %v1926
    %v2144 = vpop.f32.mrf.mxu0
    %v2145 = vadd.f32 0.0, %v2144
    %v2146 = vpop.f32.mrf.mxu0
    %v2147 = vadd.f32 0.0, %v2146
    %2148 = vmatmul.bf16.gmra.mxu0 %v1927
    %v2149 = vpop.f32.mrf.mxu0
    %v2150 = vadd.f32 0.0, %v2149
    %v2151 = vpop.f32.mrf.mxu0
    %v2152 = vadd.f32 0.0, %v2151
    %2153 = vmatmul.bf16.gmra.mxu0 %v1928
    %v2154 = vpop.f32.mrf.mxu0
    %v2155 = vadd.f32 0.0, %v2154
    %v2156 = vpop.f32.mrf.mxu0
    %v2157 = vadd.f32 0.0, %v2156
    %2158 = vmatmul.bf16.gmra.mxu0 %v1929
    %v2159 = vpop.f32.mrf.mxu0
    %v2160 = vadd.f32 0.0, %v2159
    %v2161 = vpop.f32.mrf.mxu0
    %v2162 = vadd.f32 0.0, %v2161
    %2163 = vdwg.mxu0
    %v2164 = vadd.f32 %v1770, %v2005
    %v2165 = vadd.f32 %v1771, %v2007
    %v2166 = vadd.f32 %v1772, %v2010
    %v2167 = vadd.f32 %v1773, %v2012
    %v2168 = vadd.f32 %v1774, %v2015
    %v2169 = vadd.f32 %v1775, %v2017
    %v2170 = vadd.f32 %v1776, %v2020
    %v2171 = vadd.f32 %v1777, %v2022
    %v2172 = vadd.f32 %v1778, %v2025
    %v2173 = vadd.f32 %v1779, %v2027
    %v2174 = vadd.f32 %v1780, %v2030
    %v2175 = vadd.f32 %v1781, %v2032
    %v2176 = vadd.f32 %v1782, %v2035
    %v2177 = vadd.f32 %v1783, %v2037
    %v2178 = vadd.f32 %v1784, %v2040
    %v2179 = vadd.f32 %v1785, %v2042
    %v2180 = vadd.f32 %v1786, %v2045
    %v2181 = vadd.f32 %v1787, %v2047
    %v2182 = vadd.f32 %v1788, %v2050
    %v2183 = vadd.f32 %v1789, %v2052
    %v2184 = vadd.f32 %v1790, %v2055
    %v2185 = vadd.f32 %v1791, %v2057
    %v2186 = vadd.f32 %v1792, %v2060
    %v2187 = vadd.f32 %v1793, %v2062
    %v2188 = vadd.f32 %v1794, %v2065
    %v2189 = vadd.f32 %v1795, %v2067
    %v2190 = vadd.f32 %v1796, %v2070
    %v2191 = vadd.f32 %v1797, %v2072
    %v2192 = vadd.f32 %v1798, %v2075
    %v2193 = vadd.f32 %v1799, %v2077
    %v2194 = vadd.f32 %v1800, %v2080
    %v2195 = vadd.f32 %v1801, %v2082
    %v2196 = vadd.f32 %v1802, %v2085
    %v2197 = vadd.f32 %v1803, %v2087
    %v2198 = vadd.f32 %v1804, %v2090
    %v2199 = vadd.f32 %v1805, %v2092
    %v2200 = vadd.f32 %v1806, %v2095
    %v2201 = vadd.f32 %v1807, %v2097
    %v2202 = vadd.f32 %v1808, %v2100
    %v2203 = vadd.f32 %v1809, %v2102
    %v2204 = vadd.f32 %v1810, %v2105
    %v2205 = vadd.f32 %v1811, %v2107
    %v2206 = vadd.f32 %v1812, %v2110
    %v2207 = vadd.f32 %v1813, %v2112
    %v2208 = vadd.f32 %v1814, %v2115
    %v2209 = vadd.f32 %v1815, %v2117
    %v2210 = vadd.f32 %v1816, %v2120
    %v2211 = vadd.f32 %v1817, %v2122
    %v2212 = vadd.f32 %v1818, %v2125
    %v2213 = vadd.f32 %v1819, %v2127
    %v2214 = vadd.f32 %v1820, %v2130
    %v2215 = vadd.f32 %v1821, %v2132
    %v2216 = vadd.f32 %v1822, %v2135
    %v2217 = vadd.f32 %v1823, %v2137
    %v2218 = vadd.f32 %v1824, %v2140
    %v2219 = vadd.f32 %v1825, %v2142
    %v2220 = vadd.f32 %v1826, %v2145
    %v2221 = vadd.f32 %v1827, %v2147
    %v2222 = vadd.f32 %v1828, %v2150
    %v2223 = vadd.f32 %v1829, %v2152
    %v2224 = vadd.f32 %v1830, %v2155
    %v2225 = vadd.f32 %v1831, %v2157
    %v2226 = vadd.f32 %v1832, %v2160
    %v2227 = vadd.f32 %v1833, %v2162
    %v2228 = vld [vmem:[%s716 + $0x1] sm:$0xff]
    %v2229 = vld [vmem:[%s716 + $0x9] sm:$0xff]
    %v2230 = vld [vmem:[%s716 + $0x19] sm:$0xff]
    %v2231 = vld [vmem:[%s716 + $0x21] sm:$0xff]
    %v2232 = vld [vmem:[%s716 + $0x31] sm:$0xff]
    %v2233 = vld [vmem:[%s716 + $0x39] sm:$0xff]
    %v2234 = vld [vmem:[%s716 + $0x49] sm:$0xff]
    %v2235 = vld [vmem:[%s716 + $0x51] sm:$0xff]
    %v2236 = vld [vmem:[%s716 + $0x61] sm:$0xff]
    %v2237 = vld [vmem:[%s716 + $0x69] sm:$0xff]
    %v2238 = vld [vmem:[%s716 + $0x79] sm:$0xff]
    %v2239 = vld [vmem:[%s716 + $0x81] sm:$0xff]
    %v2240 = vld [vmem:[%s716 + $0x91] sm:$0xff]
    %v2241 = vld [vmem:[%s716 + $0x99] sm:$0xff]
    %v2242 = vld [vmem:[%s716 + $0xa9] sm:$0xff]
    %v2243 = vld [vmem:[%s716 + $0xb1] sm:$0xff]
    %v2244 = vld [vmem:[%s716 + $0xc1] sm:$0xff]
    %v2245 = vld [vmem:[%s716 + $0xc9] sm:$0xff]
    %v2246 = vld [vmem:[%s716 + $0xd9] sm:$0xff]
    %v2247 = vld [vmem:[%s716 + $0xe1] sm:$0xff]
    %v2248 = vld [vmem:[%s716 + $0xf1] sm:$0xff]
    %v2249 = vld [vmem:[%s716 + $0xf9] sm:$0xff]
    %v2250 = vld [vmem:[%s716 + $0x109] sm:$0xff]
    %v2251 = vld [vmem:[%s716 + $0x111] sm:$0xff]
    %v2252 = vld [vmem:[%s716 + $0x121] sm:$0xff]
    %v2253 = vld [vmem:[%s716 + $0x129] sm:$0xff]
    %v2254 = vld [vmem:[%s716 + $0x139] sm:$0xff]
    %v2255 = vld [vmem:[%s716 + $0x141] sm:$0xff]
    %v2256 = vld [vmem:[%s716 + $0x151] sm:$0xff]
    %v2257 = vld [vmem:[%s716 + $0x159] sm:$0xff]
    %v2258 = vld [vmem:[%s716 + $0x169] sm:$0xff]
    %v2259 = vld [vmem:[%s716 + $0x171] sm:$0xff]
    %v2260 = vld [vmem:[%s716 + $0x1b1] sm:$0xff]
    %v2261 = vld [vmem:[%s716 + $0x1b9] sm:$0xff]
    %v2262 = vld [vmem:[%s716 + $0x1c9] sm:$0xff]
    %v2263 = vld [vmem:[%s716 + $0x1d1] sm:$0xff]
    %v2264 = vld [vmem:[%s716 + $0x1e1] sm:$0xff]
    %v2265 = vld [vmem:[%s716 + $0x1e9] sm:$0xff]
    %v2266 = vld [vmem:[%s716 + $0x1f9] sm:$0xff]
    %v2267 = vld [vmem:[%s716 + $0x201] sm:$0xff]
    %v2268 = vld [vmem:[%s716 + $0x211] sm:$0xff]
    %v2269 = vld [vmem:[%s716 + $0x219] sm:$0xff]
    %v2270 = vld [vmem:[%s716 + $0x229] sm:$0xff]
    %v2271 = vld [vmem:[%s716 + $0x231] sm:$0xff]
    %v2272 = vld [vmem:[%s716 + $0x241] sm:$0xff]
    %v2273 = vld [vmem:[%s716 + $0x249] sm:$0xff]
    %v2274 = vld [vmem:[%s716 + $0x259] sm:$0xff]
    %v2275 = vld [vmem:[%s716 + $0x261] sm:$0xff]
    %v2276 = vld [vmem:[%s716 + $0x271] sm:$0xff]
    %v2277 = vld [vmem:[%s716 + $0x279] sm:$0xff]
    %v2278 = vld [vmem:[%s716 + $0x289] sm:$0xff]
    %v2279 = vld [vmem:[%s716 + $0x291] sm:$0xff]
    %v2280 = vld [vmem:[%s716 + $0x2a1] sm:$0xff]
    %v2281 = vld [vmem:[%s716 + $0x2a9] sm:$0xff]
    %v2282 = vld [vmem:[%s716 + $0x2b9] sm:$0xff]
    %v2283 = vld [vmem:[%s716 + $0x2c1] sm:$0xff]
    %v2284 = vld [vmem:[%s716 + $0x2d1] sm:$0xff]
    %v2285 = vld [vmem:[%s716 + $0x2d9] sm:$0xff]
    %v2286 = vld [vmem:[%s716 + $0x2e9] sm:$0xff]
    %v2287 = vld [vmem:[%s716 + $0x2f1] sm:$0xff]
    %v2288 = vld [vmem:[%s716 + $0x301] sm:$0xff]
    %v2289 = vld [vmem:[%s716 + $0x309] sm:$0xff]
    %v2290 = vld [vmem:[%s716 + $0x319] sm:$0xff]
    %v2291 = vld [vmem:[%s716 + $0x321] sm:$0xff]
    %v2292 = vpack.c.bf16 %v2229, %v2228
    %v2293 = vpack.c.bf16 %v2231, %v2230
    %v2294 = vpack.c.bf16 %v2233, %v2232
    %v2295 = vpack.c.bf16 %v2235, %v2234
    %v2296 = vpack.c.bf16 %v2237, %v2236
    %v2297 = vpack.c.bf16 %v2239, %v2238
    %v2298 = vpack.c.bf16 %v2241, %v2240
    %v2299 = vpack.c.bf16 %v2243, %v2242
    %v2300 = vpack.c.bf16 %v2245, %v2244
    %v2301 = vpack.c.bf16 %v2247, %v2246
    %v2302 = vpack.c.bf16 %v2249, %v2248
    %v2303 = vpack.c.bf16 %v2251, %v2250
    %v2304 = vpack.c.bf16 %v2253, %v2252
    %v2305 = vpack.c.bf16 %v2255, %v2254
    %v2306 = vpack.c.bf16 %v2257, %v2256
    %v2307 = vpack.c.bf16 %v2259, %v2258
    %v2308 = vpack.c.bf16 %v2261, %v2260
    %v2309 = vpack.c.bf16 %v2263, %v2262
    %v2310 = vpack.c.bf16 %v2265, %v2264
    %v2311 = vpack.c.bf16 %v2267, %v2266
    %v2312 = vpack.c.bf16 %v2269, %v2268
    %v2313 = vpack.c.bf16 %v2271, %v2270
    %v2314 = vpack.c.bf16 %v2273, %v2272
    %v2315 = vpack.c.bf16 %v2275, %v2274
    %v2316 = vpack.c.bf16 %v2277, %v2276
    %v2317 = vpack.c.bf16 %v2279, %v2278
    %v2318 = vpack.c.bf16 %v2281, %v2280
    %v2319 = vpack.c.bf16 %v2283, %v2282
    %v2320 = vpack.c.bf16 %v2285, %v2284
    %v2321 = vpack.c.bf16 %v2287, %v2286
    %v2322 = vpack.c.bf16 %v2289, %v2288
    %v2323 = vpack.c.bf16 %v2291, %v2290
    %s2324 = scalar_lea.vmem %s3, 256
    %v2325 = vld [vmem:[%s2324] sm:$0xf]
    %v2326 = vld [vmem:[%s2324 + $0x4] sm:$0xf]
    %v2327 = vld [vmem:[%s2324 + $0x8] sm:$0xf]
    %v2328 = vld [vmem:[%s2324 + $0xc] sm:$0xf]
    %v2329 = vld [vmem:[%s2324 + $0x10] sm:$0xf]
    %v2330 = vld [vmem:[%s2324 + $0x14] sm:$0xf]
    %v2331 = vld [vmem:[%s2324 + $0x18] sm:$0xf]
    %v2332 = vld [vmem:[%s2324 + $0x1c] sm:$0xf]
    %v2333 = vld [vmem:[%s2324 + $0x20] sm:$0xf]
    %v2334 = vld [vmem:[%s2324 + $0x24] sm:$0xf]
    %v2335 = vld [vmem:[%s2324 + $0x28] sm:$0xf]
    %v2336 = vld [vmem:[%s2324 + $0x2c] sm:$0xf]
    %v2337 = vld [vmem:[%s2324 + $0x30] sm:$0xf]
    %v2338 = vld [vmem:[%s2324 + $0x34] sm:$0xf]
    %v2339 = vld [vmem:[%s2324 + $0x38] sm:$0xf]
    %v2340 = vld [vmem:[%s2324 + $0x3c] sm:$0xf]
    %v2357 = vunpack.c.l.b16 %v2325
    %v2358 = vunpack.c.l.b16 %v2326
    %v2359 = vunpack.c.l.b16 %v2327
    %v2360 = vunpack.c.l.b16 %v2328
    %v2361 = vunpack.c.l.b16 %v2329
    %v2362 = vunpack.c.l.b16 %v2330
    %v2363 = vunpack.c.l.b16 %v2331
    %v2364 = vunpack.c.l.b16 %v2332
    %v2365 = vunpack.c.l.b16 %v2333
    %v2366 = vunpack.c.l.b16 %v2334
    %v2367 = vunpack.c.l.b16 %v2335
    %v2368 = vunpack.c.l.b16 %v2336
    %v2369 = vunpack.c.l.b16 %v2337
    %v2370 = vunpack.c.l.b16 %v2338
    %v2371 = vunpack.c.l.b16 %v2339
    %v2372 = vunpack.c.l.b16 %v2340
    %v2373 = vpack.c.b16 %v2358, %v2357
    %v2374 = vpack.c.b16 %v2360, %v2359
    %v2375 = vpack.c.b16 %v2362, %v2361
    %v2376 = vpack.c.b16 %v2364, %v2363
    %v2377 = vpack.c.b16 %v2366, %v2365
    %v2378 = vpack.c.b16 %v2368, %v2367
    %v2379 = vpack.c.b16 %v2370, %v2369
    %v2380 = vpack.c.b16 %v2372, %v2371
    %2389 = vmatpush.bf16.msra.mxu0 %v2380
    %2390 = vmatpush.bf16.msra.mxu0 %v2379
    %2391 = vmatpush.bf16.msra.mxu0 %v2378
    %2392 = vmatpush.bf16.msra.mxu0 %v2377
    %2393 = vmatpush.bf16.msra.mxu0 %v2376
    %2394 = vmatpush.bf16.msra.mxu0 %v2375
    %2395 = vmatpush.bf16.msra.mxu0 %v2374
    %2396 = vmatpush.bf16.msra.mxu0 %v2373
    %2397 = vmatmul.bf16.gmra.mxu0 %v2292
    %v2398 = vpop.f32.mrf.mxu0
    %v2399 = vadd.f32 0.0, %v2398
    %v2400 = vpop.f32.mrf.mxu0
    %v2401 = vadd.f32 0.0, %v2400
    %2402 = vmatmul.bf16.gmra.mxu0 %v2293
    %v2403 = vpop.f32.mrf.mxu0
    %v2404 = vadd.f32 0.0, %v2403
    %v2405 = vpop.f32.mrf.mxu0
    %v2406 = vadd.f32 0.0, %v2405
    %2407 = vmatmul.bf16.gmra.mxu0 %v2294
    %v2408 = vpop.f32.mrf.mxu0
    %v2409 = vadd.f32 0.0, %v2408
    %v2410 = vpop.f32.mrf.mxu0
    %v2411 = vadd.f32 0.0, %v2410
    %2412 = vmatmul.bf16.gmra.mxu0 %v2295
    %v2413 = vpop.f32.mrf.mxu0
    %v2414 = vadd.f32 0.0, %v2413
    %v2415 = vpop.f32.mrf.mxu0
    %v2416 = vadd.f32 0.0, %v2415
    %2417 = vmatmul.bf16.gmra.mxu0 %v2296
    %v2418 = vpop.f32.mrf.mxu0
    %v2419 = vadd.f32 0.0, %v2418
    %v2420 = vpop.f32.mrf.mxu0
    %v2421 = vadd.f32 0.0, %v2420
    %2422 = vmatmul.bf16.gmra.mxu0 %v2297
    %v2423 = vpop.f32.mrf.mxu0
    %v2424 = vadd.f32 0.0, %v2423
    %v2425 = vpop.f32.mrf.mxu0
    %v2426 = vadd.f32 0.0, %v2425
    %2427 = vmatmul.bf16.gmra.mxu0 %v2298
    %v2428 = vpop.f32.mrf.mxu0
    %v2429 = vadd.f32 0.0, %v2428
    %v2430 = vpop.f32.mrf.mxu0
    %v2431 = vadd.f32 0.0, %v2430
    %2432 = vmatmul.bf16.gmra.mxu0 %v2299
    %v2433 = vpop.f32.mrf.mxu0
    %v2434 = vadd.f32 0.0, %v2433
    %v2435 = vpop.f32.mrf.mxu0
    %v2436 = vadd.f32 0.0, %v2435
    %2437 = vmatmul.bf16.gmra.mxu0 %v2300
    %v2438 = vpop.f32.mrf.mxu0
    %v2439 = vadd.f32 0.0, %v2438
    %v2440 = vpop.f32.mrf.mxu0
    %v2441 = vadd.f32 0.0, %v2440
    %2442 = vmatmul.bf16.gmra.mxu0 %v2301
    %v2443 = vpop.f32.mrf.mxu0
    %v2444 = vadd.f32 0.0, %v2443
    %v2445 = vpop.f32.mrf.mxu0
    %v2446 = vadd.f32 0.0, %v2445
    %2447 = vmatmul.bf16.gmra.mxu0 %v2302
    %v2448 = vpop.f32.mrf.mxu0
    %v2449 = vadd.f32 0.0, %v2448
    %v2450 = vpop.f32.mrf.mxu0
    %v2451 = vadd.f32 0.0, %v2450
    %2452 = vmatmul.bf16.gmra.mxu0 %v2303
    %v2453 = vpop.f32.mrf.mxu0
    %v2454 = vadd.f32 0.0, %v2453
    %v2455 = vpop.f32.mrf.mxu0
    %v2456 = vadd.f32 0.0, %v2455
    %2457 = vmatmul.bf16.gmra.mxu0 %v2304
    %v2458 = vpop.f32.mrf.mxu0
    %v2459 = vadd.f32 0.0, %v2458
    %v2460 = vpop.f32.mrf.mxu0
    %v2461 = vadd.f32 0.0, %v2460
    %2462 = vmatmul.bf16.gmra.mxu0 %v2305
    %v2463 = vpop.f32.mrf.mxu0
    %v2464 = vadd.f32 0.0, %v2463
    %v2465 = vpop.f32.mrf.mxu0
    %v2466 = vadd.f32 0.0, %v2465
    %2467 = vmatmul.bf16.gmra.mxu0 %v2306
    %v2468 = vpop.f32.mrf.mxu0
    %v2469 = vadd.f32 0.0, %v2468
    %v2470 = vpop.f32.mrf.mxu0
    %v2471 = vadd.f32 0.0, %v2470
    %2472 = vmatmul.bf16.gmra.mxu0 %v2307
    %v2473 = vpop.f32.mrf.mxu0
    %v2474 = vadd.f32 0.0, %v2473
    %v2475 = vpop.f32.mrf.mxu0
    %v2476 = vadd.f32 0.0, %v2475
    %2477 = vmatmul.bf16.gmra.mxu0 %v2308
    %v2478 = vpop.f32.mrf.mxu0
    %v2479 = vadd.f32 0.0, %v2478
    %v2480 = vpop.f32.mrf.mxu0
    %v2481 = vadd.f32 0.0, %v2480
    %2482 = vmatmul.bf16.gmra.mxu0 %v2309
    %v2483 = vpop.f32.mrf.mxu0
    %v2484 = vadd.f32 0.0, %v2483
    %v2485 = vpop.f32.mrf.mxu0
    %v2486 = vadd.f32 0.0, %v2485
    %2487 = vmatmul.bf16.gmra.mxu0 %v2310
    %v2488 = vpop.f32.mrf.mxu0
    %v2489 = vadd.f32 0.0, %v2488
    %v2490 = vpop.f32.mrf.mxu0
    %v2491 = vadd.f32 0.0, %v2490
    %2492 = vmatmul.bf16.gmra.mxu0 %v2311
    %v2493 = vpop.f32.mrf.mxu0
    %v2494 = vadd.f32 0.0, %v2493
    %v2495 = vpop.f32.mrf.mxu0
    %v2496 = vadd.f32 0.0, %v2495
    %2497 = vmatmul.bf16.gmra.mxu0 %v2312
    %v2498 = vpop.f32.mrf.mxu0
    %v2499 = vadd.f32 0.0, %v2498
    %v2500 = vpop.f32.mrf.mxu0
    %v2501 = vadd.f32 0.0, %v2500
    %2502 = vmatmul.bf16.gmra.mxu0 %v2313
    %v2503 = vpop.f32.mrf.mxu0
    %v2504 = vadd.f32 0.0, %v2503
    %v2505 = vpop.f32.mrf.mxu0
    %v2506 = vadd.f32 0.0, %v2505
    %2507 = vmatmul.bf16.gmra.mxu0 %v2314
    %v2508 = vpop.f32.mrf.mxu0
    %v2509 = vadd.f32 0.0, %v2508
    %v2510 = vpop.f32.mrf.mxu0
    %v2511 = vadd.f32 0.0, %v2510
    %2512 = vmatmul.bf16.gmra.mxu0 %v2315
    %v2513 = vpop.f32.mrf.mxu0
    %v2514 = vadd.f32 0.0, %v2513
    %v2515 = vpop.f32.mrf.mxu0
    %v2516 = vadd.f32 0.0, %v2515
    %2517 = vmatmul.bf16.gmra.mxu0 %v2316
    %v2518 = vpop.f32.mrf.mxu0
    %v2519 = vadd.f32 0.0, %v2518
    %v2520 = vpop.f32.mrf.mxu0
    %v2521 = vadd.f32 0.0, %v2520
    %2522 = vmatmul.bf16.gmra.mxu0 %v2317
    %v2523 = vpop.f32.mrf.mxu0
    %v2524 = vadd.f32 0.0, %v2523
    %v2525 = vpop.f32.mrf.mxu0
    %v2526 = vadd.f32 0.0, %v2525
    %2527 = vmatmul.bf16.gmra.mxu0 %v2318
    %v2528 = vpop.f32.mrf.mxu0
    %v2529 = vadd.f32 0.0, %v2528
    %v2530 = vpop.f32.mrf.mxu0
    %v2531 = vadd.f32 0.0, %v2530
    %2532 = vmatmul.bf16.gmra.mxu0 %v2319
    %v2533 = vpop.f32.mrf.mxu0
    %v2534 = vadd.f32 0.0, %v2533
    %v2535 = vpop.f32.mrf.mxu0
    %v2536 = vadd.f32 0.0, %v2535
    %2537 = vmatmul.bf16.gmra.mxu0 %v2320
    %v2538 = vpop.f32.mrf.mxu0
    %v2539 = vadd.f32 0.0, %v2538
    %v2540 = vpop.f32.mrf.mxu0
    %v2541 = vadd.f32 0.0, %v2540
    %2542 = vmatmul.bf16.gmra.mxu0 %v2321
    %v2543 = vpop.f32.mrf.mxu0
    %v2544 = vadd.f32 0.0, %v2543
    %v2545 = vpop.f32.mrf.mxu0
    %v2546 = vadd.f32 0.0, %v2545
    %2547 = vmatmul.bf16.gmra.mxu0 %v2322
    %v2548 = vpop.f32.mrf.mxu0
    %v2549 = vadd.f32 0.0, %v2548
    %v2550 = vpop.f32.mrf.mxu0
    %v2551 = vadd.f32 0.0, %v2550
    %2552 = vmatmul.bf16.gmra.mxu0 %v2323
    %v2553 = vpop.f32.mrf.mxu0
    %v2554 = vadd.f32 0.0, %v2553
    %v2555 = vpop.f32.mrf.mxu0
    %v2556 = vadd.f32 0.0, %v2555
    %2557 = vdwg.mxu0
    %v2558 = vadd.f32 %v2164, %v2399
    %v2559 = vadd.f32 %v2165, %v2401
    %v2560 = vadd.f32 %v2166, %v2404
    %v2561 = vadd.f32 %v2167, %v2406
    %v2562 = vadd.f32 %v2168, %v2409
    %v2563 = vadd.f32 %v2169, %v2411
    %v2564 = vadd.f32 %v2170, %v2414
    %v2565 = vadd.f32 %v2171, %v2416
    %v2566 = vadd.f32 %v2172, %v2419
    %v2567 = vadd.f32 %v2173, %v2421
    %v2568 = vadd.f32 %v2174, %v2424
    %v2569 = vadd.f32 %v2175, %v2426
    %v2570 = vadd.f32 %v2176, %v2429
    %v2571 = vadd.f32 %v2177, %v2431
    %v2572 = vadd.f32 %v2178, %v2434
    %v2573 = vadd.f32 %v2179, %v2436
    %v2574 = vadd.f32 %v2180, %v2439
    %v2575 = vadd.f32 %v2181, %v2441
    %v2576 = vadd.f32 %v2182, %v2444
    %v2577 = vadd.f32 %v2183, %v2446
    %v2578 = vadd.f32 %v2184, %v2449
    %v2579 = vadd.f32 %v2185, %v2451
    %v2580 = vadd.f32 %v2186, %v2454
    %v2581 = vadd.f32 %v2187, %v2456
    %v2582 = vadd.f32 %v2188, %v2459
    %v2583 = vadd.f32 %v2189, %v2461
    %v2584 = vadd.f32 %v2190, %v2464
    %v2585 = vadd.f32 %v2191, %v2466
    %v2586 = vadd.f32 %v2192, %v2469
    %v2587 = vadd.f32 %v2193, %v2471
    %v2588 = vadd.f32 %v2194, %v2474
    %v2589 = vadd.f32 %v2195, %v2476
    %v2590 = vadd.f32 %v2196, %v2479
    %v2591 = vadd.f32 %v2197, %v2481
    %v2592 = vadd.f32 %v2198, %v2484
    %v2593 = vadd.f32 %v2199, %v2486
    %v2594 = vadd.f32 %v2200, %v2489
    %v2595 = vadd.f32 %v2201, %v2491
    %v2596 = vadd.f32 %v2202, %v2494
    %v2597 = vadd.f32 %v2203, %v2496
    %v2598 = vadd.f32 %v2204, %v2499
    %v2599 = vadd.f32 %v2205, %v2501
    %v2600 = vadd.f32 %v2206, %v2504
    %v2601 = vadd.f32 %v2207, %v2506
    %v2602 = vadd.f32 %v2208, %v2509
    %v2603 = vadd.f32 %v2209, %v2511
    %v2604 = vadd.f32 %v2210, %v2514
    %v2605 = vadd.f32 %v2211, %v2516
    %v2606 = vadd.f32 %v2212, %v2519
    %v2607 = vadd.f32 %v2213, %v2521
    %v2608 = vadd.f32 %v2214, %v2524
    %v2609 = vadd.f32 %v2215, %v2526
    %v2610 = vadd.f32 %v2216, %v2529
    %v2611 = vadd.f32 %v2217, %v2531
    %v2612 = vadd.f32 %v2218, %v2534
    %v2613 = vadd.f32 %v2219, %v2536
    %v2614 = vadd.f32 %v2220, %v2539
    %v2615 = vadd.f32 %v2221, %v2541
    %v2616 = vadd.f32 %v2222, %v2544
    %v2617 = vadd.f32 %v2223, %v2546
    %v2618 = vadd.f32 %v2224, %v2549
    %v2619 = vadd.f32 %v2225, %v2551
    %v2620 = vadd.f32 %v2226, %v2554
    %v2621 = vadd.f32 %v2227, %v2556
    %v2622 = vld [vmem:[%s716 + $0x2] sm:$0xff]
    %v2623 = vld [vmem:[%s716 + $0xa] sm:$0xff]
    %v2624 = vld [vmem:[%s716 + $0x1a] sm:$0xff]
    %v2625 = vld [vmem:[%s716 + $0x22] sm:$0xff]
    %v2626 = vld [vmem:[%s716 + $0x32] sm:$0xff]
    %v2627 = vld [vmem:[%s716 + $0x3a] sm:$0xff]
    %v2628 = vld [vmem:[%s716 + $0x4a] sm:$0xff]
    %v2629 = vld [vmem:[%s716 + $0x52] sm:$0xff]
    %v2630 = vld [vmem:[%s716 + $0x62] sm:$0xff]
    %v2631 = vld [vmem:[%s716 + $0x6a] sm:$0xff]
    %v2632 = vld [vmem:[%s716 + $0x7a] sm:$0xff]
    %v2633 = vld [vmem:[%s716 + $0x82] sm:$0xff]
    %v2634 = vld [vmem:[%s716 + $0x92] sm:$0xff]
    %v2635 = vld [vmem:[%s716 + $0x9a] sm:$0xff]
    %v2636 = vld [vmem:[%s716 + $0xaa] sm:$0xff]
    %v2637 = vld [vmem:[%s716 + $0xb2] sm:$0xff]
    %v2638 = vld [vmem:[%s716 + $0xc2] sm:$0xff]
    %v2639 = vld [vmem:[%s716 + $0xca] sm:$0xff]
    %v2640 = vld [vmem:[%s716 + $0xda] sm:$0xff]
    %v2641 = vld [vmem:[%s716 + $0xe2] sm:$0xff]
    %v2642 = vld [vmem:[%s716 + $0xf2] sm:$0xff]
    %v2643 = vld [vmem:[%s716 + $0xfa] sm:$0xff]
    %v2644 = vld [vmem:[%s716 + $0x10a] sm:$0xff]
    %v2645 = vld [vmem:[%s716 + $0x112] sm:$0xff]
    %v2646 = vld [vmem:[%s716 + $0x122] sm:$0xff]
    %v2647 = vld [vmem:[%s716 + $0x12a] sm:$0xff]
    %v2648 = vld [vmem:[%s716 + $0x13a] sm:$0xff]
    %v2649 = vld [vmem:[%s716 + $0x142] sm:$0xff]
    %v2650 = vld [vmem:[%s716 + $0x152] sm:$0xff]
    %v2651 = vld [vmem:[%s716 + $0x15a] sm:$0xff]
    %v2652 = vld [vmem:[%s716 + $0x16a] sm:$0xff]
    %v2653 = vld [vmem:[%s716 + $0x172] sm:$0xff]
    %v2654 = vld [vmem:[%s716 + $0x1b2] sm:$0xff]
    %v2655 = vld [vmem:[%s716 + $0x1ba] sm:$0xff]
    %v2656 = vld [vmem:[%s716 + $0x1ca] sm:$0xff]
    %v2657 = vld [vmem:[%s716 + $0x1d2] sm:$0xff]
    %v2658 = vld [vmem:[%s716 + $0x1e2] sm:$0xff]
    %v2659 = vld [vmem:[%s716 + $0x1ea] sm:$0xff]
    %v2660 = vld [vmem:[%s716 + $0x1fa] sm:$0xff]
    %v2661 = vld [vmem:[%s716 + $0x202] sm:$0xff]
    %v2662 = vld [vmem:[%s716 + $0x212] sm:$0xff]
    %v2663 = vld [vmem:[%s716 + $0x21a] sm:$0xff]
    %v2664 = vld [vmem:[%s716 + $0x22a] sm:$0xff]
    %v2665 = vld [vmem:[%s716 + $0x232] sm:$0xff]
    %v2666 = vld [vmem:[%s716 + $0x242] sm:$0xff]
    %v2667 = vld [vmem:[%s716 + $0x24a] sm:$0xff]
    %v2668 = vld [vmem:[%s716 + $0x25a] sm:$0xff]
    %v2669 = vld [vmem:[%s716 + $0x262] sm:$0xff]
    %v2670 = vld [vmem:[%s716 + $0x272] sm:$0xff]
    %v2671 = vld [vmem:[%s716 + $0x27a] sm:$0xff]
    %v2672 = vld [vmem:[%s716 + $0x28a] sm:$0xff]
    %v2673 = vld [vmem:[%s716 + $0x292] sm:$0xff]
    %v2674 = vld [vmem:[%s716 + $0x2a2] sm:$0xff]
    %v2675 = vld [vmem:[%s716 + $0x2aa] sm:$0xff]
    %v2676 = vld [vmem:[%s716 + $0x2ba] sm:$0xff]
    %v2677 = vld [vmem:[%s716 + $0x2c2] sm:$0xff]
    %v2678 = vld [vmem:[%s716 + $0x2d2] sm:$0xff]
    %v2679 = vld [vmem:[%s716 + $0x2da] sm:$0xff]
    %v2680 = vld [vmem:[%s716 + $0x2ea] sm:$0xff]
    %v2681 = vld [vmem:[%s716 + $0x2f2] sm:$0xff]
    %v2682 = vld [vmem:[%s716 + $0x302] sm:$0xff]
    %v2683 = vld [vmem:[%s716 + $0x30a] sm:$0xff]
    %v2684 = vld [vmem:[%s716 + $0x31a] sm:$0xff]
    %v2685 = vld [vmem:[%s716 + $0x322] sm:$0xff]
    %v2686 = vpack.c.bf16 %v2623, %v2622
    %v2687 = vpack.c.bf16 %v2625, %v2624
    %v2688 = vpack.c.bf16 %v2627, %v2626
    %v2689 = vpack.c.bf16 %v2629, %v2628
    %v2690 = vpack.c.bf16 %v2631, %v2630
    %v2691 = vpack.c.bf16 %v2633, %v2632
    %v2692 = vpack.c.bf16 %v2635, %v2634
    %v2693 = vpack.c.bf16 %v2637, %v2636
    %v2694 = vpack.c.bf16 %v2639, %v2638
    %v2695 = vpack.c.bf16 %v2641, %v2640
    %v2696 = vpack.c.bf16 %v2643, %v2642
    %v2697 = vpack.c.bf16 %v2645, %v2644
    %v2698 = vpack.c.bf16 %v2647, %v2646
    %v2699 = vpack.c.bf16 %v2649, %v2648
    %v2700 = vpack.c.bf16 %v2651, %v2650
    %v2701 = vpack.c.bf16 %v2653, %v2652
    %v2702 = vpack.c.bf16 %v2655, %v2654
    %v2703 = vpack.c.bf16 %v2657, %v2656
    %v2704 = vpack.c.bf16 %v2659, %v2658
    %v2705 = vpack.c.bf16 %v2661, %v2660
    %v2706 = vpack.c.bf16 %v2663, %v2662
    %v2707 = vpack.c.bf16 %v2665, %v2664
    %v2708 = vpack.c.bf16 %v2667, %v2666
    %v2709 = vpack.c.bf16 %v2669, %v2668
    %v2710 = vpack.c.bf16 %v2671, %v2670
    %v2711 = vpack.c.bf16 %v2673, %v2672
    %v2712 = vpack.c.bf16 %v2675, %v2674
    %v2713 = vpack.c.bf16 %v2677, %v2676
    %v2714 = vpack.c.bf16 %v2679, %v2678
    %v2715 = vpack.c.bf16 %v2681, %v2680
    %v2716 = vpack.c.bf16 %v2683, %v2682
    %v2717 = vpack.c.bf16 %v2685, %v2684
    %s2718 = scalar_lea.vmem %s3, 320
    %v2719 = vld [vmem:[%s2718] sm:$0xf]
    %v2720 = vld [vmem:[%s2718 + $0x4] sm:$0xf]
    %v2721 = vld [vmem:[%s2718 + $0x8] sm:$0xf]
    %v2722 = vld [vmem:[%s2718 + $0xc] sm:$0xf]
    %v2723 = vld [vmem:[%s2718 + $0x10] sm:$0xf]
    %v2724 = vld [vmem:[%s2718 + $0x14] sm:$0xf]
    %v2725 = vld [vmem:[%s2718 + $0x18] sm:$0xf]
    %v2726 = vld [vmem:[%s2718 + $0x1c] sm:$0xf]
    %v2727 = vld [vmem:[%s2718 + $0x20] sm:$0xf]
    %v2728 = vld [vmem:[%s2718 + $0x24] sm:$0xf]
    %v2729 = vld [vmem:[%s2718 + $0x28] sm:$0xf]
    %v2730 = vld [vmem:[%s2718 + $0x2c] sm:$0xf]
    %v2731 = vld [vmem:[%s2718 + $0x30] sm:$0xf]
    %v2732 = vld [vmem:[%s2718 + $0x34] sm:$0xf]
    %v2733 = vld [vmem:[%s2718 + $0x38] sm:$0xf]
    %v2734 = vld [vmem:[%s2718 + $0x3c] sm:$0xf]
    %v2751 = vunpack.c.l.b16 %v2719
    %v2752 = vunpack.c.l.b16 %v2720
    %v2753 = vunpack.c.l.b16 %v2721
    %v2754 = vunpack.c.l.b16 %v2722
    %v2755 = vunpack.c.l.b16 %v2723
    %v2756 = vunpack.c.l.b16 %v2724
    %v2757 = vunpack.c.l.b16 %v2725
    %v2758 = vunpack.c.l.b16 %v2726
    %v2759 = vunpack.c.l.b16 %v2727
    %v2760 = vunpack.c.l.b16 %v2728
    %v2761 = vunpack.c.l.b16 %v2729
    %v2762 = vunpack.c.l.b16 %v2730
    %v2763 = vunpack.c.l.b16 %v2731
    %v2764 = vunpack.c.l.b16 %v2732
    %v2765 = vunpack.c.l.b16 %v2733
    %v2766 = vunpack.c.l.b16 %v2734
    %v2767 = vpack.c.b16 %v2752, %v2751
    %v2768 = vpack.c.b16 %v2754, %v2753
    %v2769 = vpack.c.b16 %v2756, %v2755
    %v2770 = vpack.c.b16 %v2758, %v2757
    %v2771 = vpack.c.b16 %v2760, %v2759
    %v2772 = vpack.c.b16 %v2762, %v2761
    %v2773 = vpack.c.b16 %v2764, %v2763
    %v2774 = vpack.c.b16 %v2766, %v2765
    %2783 = vmatpush.bf16.msra.mxu0 %v2774
    %2784 = vmatpush.bf16.msra.mxu0 %v2773
    %2785 = vmatpush.bf16.msra.mxu0 %v2772
    %2786 = vmatpush.bf16.msra.mxu0 %v2771
    %2787 = vmatpush.bf16.msra.mxu0 %v2770
    %2788 = vmatpush.bf16.msra.mxu0 %v2769
    %2789 = vmatpush.bf16.msra.mxu0 %v2768
    %2790 = vmatpush.bf16.msra.mxu0 %v2767
    %2791 = vmatmul.bf16.gmra.mxu0 %v2686
    %v2792 = vpop.f32.mrf.mxu0
    %v2793 = vadd.f32 0.0, %v2792
    %v2794 = vpop.f32.mrf.mxu0
    %v2795 = vadd.f32 0.0, %v2794
    %2796 = vmatmul.bf16.gmra.mxu0 %v2687
    %v2797 = vpop.f32.mrf.mxu0
    %v2798 = vadd.f32 0.0, %v2797
    %v2799 = vpop.f32.mrf.mxu0
    %v2800 = vadd.f32 0.0, %v2799
    %2801 = vmatmul.bf16.gmra.mxu0 %v2688
    %v2802 = vpop.f32.mrf.mxu0
    %v2803 = vadd.f32 0.0, %v2802
    %v2804 = vpop.f32.mrf.mxu0
    %v2805 = vadd.f32 0.0, %v2804
    %2806 = vmatmul.bf16.gmra.mxu0 %v2689
    %v2807 = vpop.f32.mrf.mxu0
    %v2808 = vadd.f32 0.0, %v2807
    %v2809 = vpop.f32.mrf.mxu0
    %v2810 = vadd.f32 0.0, %v2809
    %2811 = vmatmul.bf16.gmra.mxu0 %v2690
    %v2812 = vpop.f32.mrf.mxu0
    %v2813 = vadd.f32 0.0, %v2812
    %v2814 = vpop.f32.mrf.mxu0
    %v2815 = vadd.f32 0.0, %v2814
    %2816 = vmatmul.bf16.gmra.mxu0 %v2691
    %v2817 = vpop.f32.mrf.mxu0
    %v2818 = vadd.f32 0.0, %v2817
    %v2819 = vpop.f32.mrf.mxu0
    %v2820 = vadd.f32 0.0, %v2819
    %2821 = vmatmul.bf16.gmra.mxu0 %v2692
    %v2822 = vpop.f32.mrf.mxu0
    %v2823 = vadd.f32 0.0, %v2822
    %v2824 = vpop.f32.mrf.mxu0
    %v2825 = vadd.f32 0.0, %v2824
    %2826 = vmatmul.bf16.gmra.mxu0 %v2693
    %v2827 = vpop.f32.mrf.mxu0
    %v2828 = vadd.f32 0.0, %v2827
    %v2829 = vpop.f32.mrf.mxu0
    %v2830 = vadd.f32 0.0, %v2829
    %2831 = vmatmul.bf16.gmra.mxu0 %v2694
    %v2832 = vpop.f32.mrf.mxu0
    %v2833 = vadd.f32 0.0, %v2832
    %v2834 = vpop.f32.mrf.mxu0
    %v2835 = vadd.f32 0.0, %v2834
    %2836 = vmatmul.bf16.gmra.mxu0 %v2695
    %v2837 = vpop.f32.mrf.mxu0
    %v2838 = vadd.f32 0.0, %v2837
    %v2839 = vpop.f32.mrf.mxu0
    %v2840 = vadd.f32 0.0, %v2839
    %2841 = vmatmul.bf16.gmra.mxu0 %v2696
    %v2842 = vpop.f32.mrf.mxu0
    %v2843 = vadd.f32 0.0, %v2842
    %v2844 = vpop.f32.mrf.mxu0
    %v2845 = vadd.f32 0.0, %v2844
    %2846 = vmatmul.bf16.gmra.mxu0 %v2697
    %v2847 = vpop.f32.mrf.mxu0
    %v2848 = vadd.f32 0.0, %v2847
    %v2849 = vpop.f32.mrf.mxu0
    %v2850 = vadd.f32 0.0, %v2849
    %2851 = vmatmul.bf16.gmra.mxu0 %v2698
    %v2852 = vpop.f32.mrf.mxu0
    %v2853 = vadd.f32 0.0, %v2852
    %v2854 = vpop.f32.mrf.mxu0
    %v2855 = vadd.f32 0.0, %v2854
    %2856 = vmatmul.bf16.gmra.mxu0 %v2699
    %v2857 = vpop.f32.mrf.mxu0
    %v2858 = vadd.f32 0.0, %v2857
    %v2859 = vpop.f32.mrf.mxu0
    %v2860 = vadd.f32 0.0, %v2859
    %2861 = vmatmul.bf16.gmra.mxu0 %v2700
    %v2862 = vpop.f32.mrf.mxu0
    %v2863 = vadd.f32 0.0, %v2862
    %v2864 = vpop.f32.mrf.mxu0
    %v2865 = vadd.f32 0.0, %v2864
    %2866 = vmatmul.bf16.gmra.mxu0 %v2701
    %v2867 = vpop.f32.mrf.mxu0
    %v2868 = vadd.f32 0.0, %v2867
    %v2869 = vpop.f32.mrf.mxu0
    %v2870 = vadd.f32 0.0, %v2869
    %2871 = vmatmul.bf16.gmra.mxu0 %v2702
    %v2872 = vpop.f32.mrf.mxu0
    %v2873 = vadd.f32 0.0, %v2872
    %v2874 = vpop.f32.mrf.mxu0
    %v2875 = vadd.f32 0.0, %v2874
    %2876 = vmatmul.bf16.gmra.mxu0 %v2703
    %v2877 = vpop.f32.mrf.mxu0
    %v2878 = vadd.f32 0.0, %v2877
    %v2879 = vpop.f32.mrf.mxu0
    %v2880 = vadd.f32 0.0, %v2879
    %2881 = vmatmul.bf16.gmra.mxu0 %v2704
    %v2882 = vpop.f32.mrf.mxu0
    %v2883 = vadd.f32 0.0, %v2882
    %v2884 = vpop.f32.mrf.mxu0
    %v2885 = vadd.f32 0.0, %v2884
    %2886 = vmatmul.bf16.gmra.mxu0 %v2705
    %v2887 = vpop.f32.mrf.mxu0
    %v2888 = vadd.f32 0.0, %v2887
    %v2889 = vpop.f32.mrf.mxu0
    %v2890 = vadd.f32 0.0, %v2889
    %2891 = vmatmul.bf16.gmra.mxu0 %v2706
    %v2892 = vpop.f32.mrf.mxu0
    %v2893 = vadd.f32 0.0, %v2892
    %v2894 = vpop.f32.mrf.mxu0
    %v2895 = vadd.f32 0.0, %v2894
    %2896 = vmatmul.bf16.gmra.mxu0 %v2707
    %v2897 = vpop.f32.mrf.mxu0
    %v2898 = vadd.f32 0.0, %v2897
    %v2899 = vpop.f32.mrf.mxu0
    %v2900 = vadd.f32 0.0, %v2899
    %2901 = vmatmul.bf16.gmra.mxu0 %v2708
    %v2902 = vpop.f32.mrf.mxu0
    %v2903 = vadd.f32 0.0, %v2902
    %v2904 = vpop.f32.mrf.mxu0
    %v2905 = vadd.f32 0.0, %v2904
    %2906 = vmatmul.bf16.gmra.mxu0 %v2709
    %v2907 = vpop.f32.mrf.mxu0
    %v2908 = vadd.f32 0.0, %v2907
    %v2909 = vpop.f32.mrf.mxu0
    %v2910 = vadd.f32 0.0, %v2909
    %2911 = vmatmul.bf16.gmra.mxu0 %v2710
    %v2912 = vpop.f32.mrf.mxu0
    %v2913 = vadd.f32 0.0, %v2912
    %v2914 = vpop.f32.mrf.mxu0
    %v2915 = vadd.f32 0.0, %v2914
    %2916 = vmatmul.bf16.gmra.mxu0 %v2711
    %v2917 = vpop.f32.mrf.mxu0
    %v2918 = vadd.f32 0.0, %v2917
    %v2919 = vpop.f32.mrf.mxu0
    %v2920 = vadd.f32 0.0, %v2919
    %2921 = vmatmul.bf16.gmra.mxu0 %v2712
    %v2922 = vpop.f32.mrf.mxu0
    %v2923 = vadd.f32 0.0, %v2922
    %v2924 = vpop.f32.mrf.mxu0
    %v2925 = vadd.f32 0.0, %v2924
    %2926 = vmatmul.bf16.gmra.mxu0 %v2713
    %v2927 = vpop.f32.mrf.mxu0
    %v2928 = vadd.f32 0.0, %v2927
    %v2929 = vpop.f32.mrf.mxu0
    %v2930 = vadd.f32 0.0, %v2929
    %2931 = vmatmul.bf16.gmra.mxu0 %v2714
    %v2932 = vpop.f32.mrf.mxu0
    %v2933 = vadd.f32 0.0, %v2932
    %v2934 = vpop.f32.mrf.mxu0
    %v2935 = vadd.f32 0.0, %v2934
    %2936 = vmatmul.bf16.gmra.mxu0 %v2715
    %v2937 = vpop.f32.mrf.mxu0
    %v2938 = vadd.f32 0.0, %v2937
    %v2939 = vpop.f32.mrf.mxu0
    %v2940 = vadd.f32 0.0, %v2939
    %2941 = vmatmul.bf16.gmra.mxu0 %v2716
    %v2942 = vpop.f32.mrf.mxu0
    %v2943 = vadd.f32 0.0, %v2942
    %v2944 = vpop.f32.mrf.mxu0
    %v2945 = vadd.f32 0.0, %v2944
    %2946 = vmatmul.bf16.gmra.mxu0 %v2717
    %v2947 = vpop.f32.mrf.mxu0
    %v2948 = vadd.f32 0.0, %v2947
    %v2949 = vpop.f32.mrf.mxu0
    %v2950 = vadd.f32 0.0, %v2949
    %2951 = vdwg.mxu0
    %v2952 = vadd.f32 %v2558, %v2793
    %v2953 = vadd.f32 %v2559, %v2795
    %v2954 = vadd.f32 %v2560, %v2798
    %v2955 = vadd.f32 %v2561, %v2800
    %v2956 = vadd.f32 %v2562, %v2803
    %v2957 = vadd.f32 %v2563, %v2805
    %v2958 = vadd.f32 %v2564, %v2808
    %v2959 = vadd.f32 %v2565, %v2810
    %v2960 = vadd.f32 %v2566, %v2813
    %v2961 = vadd.f32 %v2567, %v2815
    %v2962 = vadd.f32 %v2568, %v2818
    %v2963 = vadd.f32 %v2569, %v2820
    %v2964 = vadd.f32 %v2570, %v2823
    %v2965 = vadd.f32 %v2571, %v2825
    %v2966 = vadd.f32 %v2572, %v2828
    %v2967 = vadd.f32 %v2573, %v2830
    %v2968 = vadd.f32 %v2574, %v2833
    %v2969 = vadd.f32 %v2575, %v2835
    %v2970 = vadd.f32 %v2576, %v2838
    %v2971 = vadd.f32 %v2577, %v2840
    %v2972 = vadd.f32 %v2578, %v2843
    %v2973 = vadd.f32 %v2579, %v2845
    %v2974 = vadd.f32 %v2580, %v2848
    %v2975 = vadd.f32 %v2581, %v2850
    %v2976 = vadd.f32 %v2582, %v2853
    %v2977 = vadd.f32 %v2583, %v2855
    %v2978 = vadd.f32 %v2584, %v2858
    %v2979 = vadd.f32 %v2585, %v2860
    %v2980 = vadd.f32 %v2586, %v2863
    %v2981 = vadd.f32 %v2587, %v2865
    %v2982 = vadd.f32 %v2588, %v2868
    %v2983 = vadd.f32 %v2589, %v2870
    %v2984 = vadd.f32 %v2590, %v2873
    %v2985 = vadd.f32 %v2591, %v2875
    %v2986 = vadd.f32 %v2592, %v2878
    %v2987 = vadd.f32 %v2593, %v2880
    %v2988 = vadd.f32 %v2594, %v2883
    %v2989 = vadd.f32 %v2595, %v2885
    %v2990 = vadd.f32 %v2596, %v2888
    %v2991 = vadd.f32 %v2597, %v2890
    %v2992 = vadd.f32 %v2598, %v2893
    %v2993 = vadd.f32 %v2599, %v2895
    %v2994 = vadd.f32 %v2600, %v2898
    %v2995 = vadd.f32 %v2601, %v2900
    %v2996 = vadd.f32 %v2602, %v2903
    %v2997 = vadd.f32 %v2603, %v2905
    %v2998 = vadd.f32 %v2604, %v2908
    %v2999 = vadd.f32 %v2605, %v2910
    %v3000 = vadd.f32 %v2606, %v2913
    %v3001 = vadd.f32 %v2607, %v2915
    %v3002 = vadd.f32 %v2608, %v2918
    %v3003 = vadd.f32 %v2609, %v2920
    %v3004 = vadd.f32 %v2610, %v2923
    %v3005 = vadd.f32 %v2611, %v2925
    %v3006 = vadd.f32 %v2612, %v2928
    %v3007 = vadd.f32 %v2613, %v2930
    %v3008 = vadd.f32 %v2614, %v2933
    %v3009 = vadd.f32 %v2615, %v2935
    %v3010 = vadd.f32 %v2616, %v2938
    %v3011 = vadd.f32 %v2617, %v2940
    %v3012 = vadd.f32 %v2618, %v2943
    %v3013 = vadd.f32 %v2619, %v2945
    %v3014 = vadd.f32 %v2620, %v2948
    %v3015 = vadd.f32 %v2621, %v2950
    %s3016 = scalar_lea.vmem [#allocation2], 48
    %v3017 = vld [vmem:[%s3016] sm:$0xff]
    %v3018 = vld [vmem:[%s3016 + $0x8] sm:$0xff]
    %v3019 = vld [vmem:[%s3016 + $0x18] sm:$0xff]
    %v3020 = vld [vmem:[%s3016 + $0x20] sm:$0xff]
    %v3021 = vld [vmem:[%s3016 + $0x30] sm:$0xff]
    %v3022 = vld [vmem:[%s3016 + $0x38] sm:$0xff]
    %v3023 = vld [vmem:[%s3016 + $0x48] sm:$0xff]
    %v3024 = vld [vmem:[%s3016 + $0x50] sm:$0xff]
    %v3025 = vld [vmem:[%s3016 + $0x60] sm:$0xff]
    %v3026 = vld [vmem:[%s3016 + $0x68] sm:$0xff]
    %v3027 = vld [vmem:[%s3016 + $0x78] sm:$0xff]
    %v3028 = vld [vmem:[%s3016 + $0x80] sm:$0xff]
    %v3029 = vld [vmem:[%s3016 + $0x90] sm:$0xff]
    %v3030 = vld [vmem:[%s3016 + $0x98] sm:$0xff]
    %v3031 = vld [vmem:[%s3016 + $0xa8] sm:$0xff]
    %v3032 = vld [vmem:[%s3016 + $0xb0] sm:$0xff]
    %v3033 = vld [vmem:[%s3016 + $0xc0] sm:$0xff]
    %v3034 = vld [vmem:[%s3016 + $0xc8] sm:$0xff]
    %v3035 = vld [vmem:[%s3016 + $0xd8] sm:$0xff]
    %v3036 = vld [vmem:[%s3016 + $0xe0] sm:$0xff]
    %v3037 = vld [vmem:[%s3016 + $0xf0] sm:$0xff]
    %v3038 = vld [vmem:[%s3016 + $0xf8] sm:$0xff]
    %v3039 = vld [vmem:[%s3016 + $0x108] sm:$0xff]
    %v3040 = vld [vmem:[%s3016 + $0x110] sm:$0xff]
    %v3041 = vld [vmem:[%s3016 + $0x120] sm:$0xff]
    %v3042 = vld [vmem:[%s3016 + $0x128] sm:$0xff]
    %v3043 = vld [vmem:[%s3016 + $0x138] sm:$0xff]
    %v3044 = vld [vmem:[%s3016 + $0x140] sm:$0xff]
    %v3045 = vld [vmem:[%s3016 + $0x150] sm:$0xff]
    %v3046 = vld [vmem:[%s3016 + $0x158] sm:$0xff]
    %v3047 = vld [vmem:[%s3016 + $0x168] sm:$0xff]
    %v3048 = vld [vmem:[%s3016 + $0x170] sm:$0xff]
    %v3049 = vld [vmem:[%s3016 + $0x1b0] sm:$0xff]
    %v3050 = vld [vmem:[%s3016 + $0x1b8] sm:$0xff]
    %v3051 = vld [vmem:[%s3016 + $0x1c8] sm:$0xff]
    %v3052 = vld [vmem:[%s3016 + $0x1d0] sm:$0xff]
    %v3053 = vld [vmem:[%s3016 + $0x1e0] sm:$0xff]
    %v3054 = vld [vmem:[%s3016 + $0x1e8] sm:$0xff]
    %v3055 = vld [vmem:[%s3016 + $0x1f8] sm:$0xff]
    %v3056 = vld [vmem:[%s3016 + $0x200] sm:$0xff]
    %v3057 = vld [vmem:[%s3016 + $0x210] sm:$0xff]
    %v3058 = vld [vmem:[%s3016 + $0x218] sm:$0xff]
    %v3059 = vld [vmem:[%s3016 + $0x228] sm:$0xff]
    %v3060 = vld [vmem:[%s3016 + $0x230] sm:$0xff]
    %v3061 = vld [vmem:[%s3016 + $0x240] sm:$0xff]
    %v3062 = vld [vmem:[%s3016 + $0x248] sm:$0xff]
    %v3063 = vld [vmem:[%s3016 + $0x258] sm:$0xff]
    %v3064 = vld [vmem:[%s3016 + $0x260] sm:$0xff]
    %v3065 = vld [vmem:[%s3016 + $0x270] sm:$0xff]
    %v3066 = vld [vmem:[%s3016 + $0x278] sm:$0xff]
    %v3067 = vld [vmem:[%s3016 + $0x288] sm:$0xff]
    %v3068 = vld [vmem:[%s3016 + $0x290] sm:$0xff]
    %v3069 = vld [vmem:[%s3016 + $0x2a0] sm:$0xff]
    %v3070 = vld [vmem:[%s3016 + $0x2a8] sm:$0xff]
    %v3071 = vld [vmem:[%s3016 + $0x2b8] sm:$0xff]
    %v3072 = vld [vmem:[%s3016 + $0x2c0] sm:$0xff]
    %v3073 = vld [vmem:[%s3016 + $0x2d0] sm:$0xff]
    %v3074 = vld [vmem:[%s3016 + $0x2d8] sm:$0xff]
    %v3075 = vld [vmem:[%s3016 + $0x2e8] sm:$0xff]
    %v3076 = vld [vmem:[%s3016 + $0x2f0] sm:$0xff]
    %v3077 = vld [vmem:[%s3016 + $0x300] sm:$0xff]
    %v3078 = vld [vmem:[%s3016 + $0x308] sm:$0xff]
    %v3079 = vld [vmem:[%s3016 + $0x318] sm:$0xff]
    %v3080 = vld [vmem:[%s3016 + $0x320] sm:$0xff]
    %v3081 = vpack.c.bf16 %v3018, %v3017
    %v3082 = vpack.c.bf16 %v3020, %v3019
    %v3083 = vpack.c.bf16 %v3022, %v3021
    %v3084 = vpack.c.bf16 %v3024, %v3023
    %v3085 = vpack.c.bf16 %v3026, %v3025
    %v3086 = vpack.c.bf16 %v3028, %v3027
    %v3087 = vpack.c.bf16 %v3030, %v3029
    %v3088 = vpack.c.bf16 %v3032, %v3031
    %v3089 = vpack.c.bf16 %v3034, %v3033
    %v3090 = vpack.c.bf16 %v3036, %v3035
    %v3091 = vpack.c.bf16 %v3038, %v3037
    %v3092 = vpack.c.bf16 %v3040, %v3039
    %v3093 = vpack.c.bf16 %v3042, %v3041
    %v3094 = vpack.c.bf16 %v3044, %v3043
    %v3095 = vpack.c.bf16 %v3046, %v3045
    %v3096 = vpack.c.bf16 %v3048, %v3047
    %v3097 = vpack.c.bf16 %v3050, %v3049
    %v3098 = vpack.c.bf16 %v3052, %v3051
    %v3099 = vpack.c.bf16 %v3054, %v3053
    %v3100 = vpack.c.bf16 %v3056, %v3055
    %v3101 = vpack.c.bf16 %v3058, %v3057
    %v3102 = vpack.c.bf16 %v3060, %v3059
    %v3103 = vpack.c.bf16 %v3062, %v3061
    %v3104 = vpack.c.bf16 %v3064, %v3063
    %v3105 = vpack.c.bf16 %v3066, %v3065
    %v3106 = vpack.c.bf16 %v3068, %v3067
    %v3107 = vpack.c.bf16 %v3070, %v3069
    %v3108 = vpack.c.bf16 %v3072, %v3071
    %v3109 = vpack.c.bf16 %v3074, %v3073
    %v3110 = vpack.c.bf16 %v3076, %v3075
    %v3111 = vpack.c.bf16 %v3078, %v3077
    %v3112 = vpack.c.bf16 %v3080, %v3079
    %s3113 = scalar_lea.vmem %s3, 384
    %v3114 = vld [vmem:[%s3113] sm:$0xf]
    %v3115 = vld [vmem:[%s3113 + $0x4] sm:$0xf]
    %v3116 = vld [vmem:[%s3113 + $0x8] sm:$0xf]
    %v3117 = vld [vmem:[%s3113 + $0xc] sm:$0xf]
    %v3118 = vld [vmem:[%s3113 + $0x10] sm:$0xf]
    %v3119 = vld [vmem:[%s3113 + $0x14] sm:$0xf]
    %v3120 = vld [vmem:[%s3113 + $0x18] sm:$0xf]
    %v3121 = vld [vmem:[%s3113 + $0x1c] sm:$0xf]
    %v3122 = vld [vmem:[%s3113 + $0x20] sm:$0xf]
    %v3123 = vld [vmem:[%s3113 + $0x24] sm:$0xf]
    %v3124 = vld [vmem:[%s3113 + $0x28] sm:$0xf]
    %v3125 = vld [vmem:[%s3113 + $0x2c] sm:$0xf]
    %v3126 = vld [vmem:[%s3113 + $0x30] sm:$0xf]
    %v3127 = vld [vmem:[%s3113 + $0x34] sm:$0xf]
    %v3128 = vld [vmem:[%s3113 + $0x38] sm:$0xf]
    %v3129 = vld [vmem:[%s3113 + $0x3c] sm:$0xf]
    %v3146 = vunpack.c.l.b16 %v3114
    %v3147 = vunpack.c.l.b16 %v3115
    %v3148 = vunpack.c.l.b16 %v3116
    %v3149 = vunpack.c.l.b16 %v3117
    %v3150 = vunpack.c.l.b16 %v3118
    %v3151 = vunpack.c.l.b16 %v3119
    %v3152 = vunpack.c.l.b16 %v3120
    %v3153 = vunpack.c.l.b16 %v3121
    %v3154 = vunpack.c.l.b16 %v3122
    %v3155 = vunpack.c.l.b16 %v3123
    %v3156 = vunpack.c.l.b16 %v3124
    %v3157 = vunpack.c.l.b16 %v3125
    %v3158 = vunpack.c.l.b16 %v3126
    %v3159 = vunpack.c.l.b16 %v3127
    %v3160 = vunpack.c.l.b16 %v3128
    %v3161 = vunpack.c.l.b16 %v3129
    %v3162 = vpack.c.b16 %v3147, %v3146
    %v3163 = vpack.c.b16 %v3149, %v3148
    %v3164 = vpack.c.b16 %v3151, %v3150
    %v3165 = vpack.c.b16 %v3153, %v3152
    %v3166 = vpack.c.b16 %v3155, %v3154
    %v3167 = vpack.c.b16 %v3157, %v3156
    %v3168 = vpack.c.b16 %v3159, %v3158
    %v3169 = vpack.c.b16 %v3161, %v3160
    %3178 = vmatpush.bf16.msra.mxu0 %v3169
    %3179 = vmatpush.bf16.msra.mxu0 %v3168
    %3180 = vmatpush.bf16.msra.mxu0 %v3167
    %3181 = vmatpush.bf16.msra.mxu0 %v3166
    %3182 = vmatpush.bf16.msra.mxu0 %v3165
    %3183 = vmatpush.bf16.msra.mxu0 %v3164
    %3184 = vmatpush.bf16.msra.mxu0 %v3163
    %3185 = vmatpush.bf16.msra.mxu0 %v3162
    %3186 = vmatmul.bf16.gmra.mxu0 %v3081
    %v3187 = vpop.f32.mrf.mxu0
    %v3188 = vadd.f32 0.0, %v3187
    %v3189 = vpop.f32.mrf.mxu0
    %v3190 = vadd.f32 0.0, %v3189
    %3191 = vmatmul.bf16.gmra.mxu0 %v3082
    %v3192 = vpop.f32.mrf.mxu0
    %v3193 = vadd.f32 0.0, %v3192
    %v3194 = vpop.f32.mrf.mxu0
    %v3195 = vadd.f32 0.0, %v3194
    %3196 = vmatmul.bf16.gmra.mxu0 %v3083
    %v3197 = vpop.f32.mrf.mxu0
    %v3198 = vadd.f32 0.0, %v3197
    %v3199 = vpop.f32.mrf.mxu0
    %v3200 = vadd.f32 0.0, %v3199
    %3201 = vmatmul.bf16.gmra.mxu0 %v3084
    %v3202 = vpop.f32.mrf.mxu0
    %v3203 = vadd.f32 0.0, %v3202
    %v3204 = vpop.f32.mrf.mxu0
    %v3205 = vadd.f32 0.0, %v3204
    %3206 = vmatmul.bf16.gmra.mxu0 %v3085
    %v3207 = vpop.f32.mrf.mxu0
    %v3208 = vadd.f32 0.0, %v3207
    %v3209 = vpop.f32.mrf.mxu0
    %v3210 = vadd.f32 0.0, %v3209
    %3211 = vmatmul.bf16.gmra.mxu0 %v3086
    %v3212 = vpop.f32.mrf.mxu0
    %v3213 = vadd.f32 0.0, %v3212
    %v3214 = vpop.f32.mrf.mxu0
    %v3215 = vadd.f32 0.0, %v3214
    %3216 = vmatmul.bf16.gmra.mxu0 %v3087
    %v3217 = vpop.f32.mrf.mxu0
    %v3218 = vadd.f32 0.0, %v3217
    %v3219 = vpop.f32.mrf.mxu0
    %v3220 = vadd.f32 0.0, %v3219
    %3221 = vmatmul.bf16.gmra.mxu0 %v3088
    %v3222 = vpop.f32.mrf.mxu0
    %v3223 = vadd.f32 0.0, %v3222
    %v3224 = vpop.f32.mrf.mxu0
    %v3225 = vadd.f32 0.0, %v3224
    %3226 = vmatmul.bf16.gmra.mxu0 %v3089
    %v3227 = vpop.f32.mrf.mxu0
    %v3228 = vadd.f32 0.0, %v3227
    %v3229 = vpop.f32.mrf.mxu0
    %v3230 = vadd.f32 0.0, %v3229
    %3231 = vmatmul.bf16.gmra.mxu0 %v3090
    %v3232 = vpop.f32.mrf.mxu0
    %v3233 = vadd.f32 0.0, %v3232
    %v3234 = vpop.f32.mrf.mxu0
    %v3235 = vadd.f32 0.0, %v3234
    %3236 = vmatmul.bf16.gmra.mxu0 %v3091
    %v3237 = vpop.f32.mrf.mxu0
    %v3238 = vadd.f32 0.0, %v3237
    %v3239 = vpop.f32.mrf.mxu0
    %v3240 = vadd.f32 0.0, %v3239
    %3241 = vmatmul.bf16.gmra.mxu0 %v3092
    %v3242 = vpop.f32.mrf.mxu0
    %v3243 = vadd.f32 0.0, %v3242
    %v3244 = vpop.f32.mrf.mxu0
    %v3245 = vadd.f32 0.0, %v3244
    %3246 = vmatmul.bf16.gmra.mxu0 %v3093
    %v3247 = vpop.f32.mrf.mxu0
    %v3248 = vadd.f32 0.0, %v3247
    %v3249 = vpop.f32.mrf.mxu0
    %v3250 = vadd.f32 0.0, %v3249
    %3251 = vmatmul.bf16.gmra.mxu0 %v3094
    %v3252 = vpop.f32.mrf.mxu0
    %v3253 = vadd.f32 0.0, %v3252
    %v3254 = vpop.f32.mrf.mxu0
    %v3255 = vadd.f32 0.0, %v3254
    %3256 = vmatmul.bf16.gmra.mxu0 %v3095
    %v3257 = vpop.f32.mrf.mxu0
    %v3258 = vadd.f32 0.0, %v3257
    %v3259 = vpop.f32.mrf.mxu0
    %v3260 = vadd.f32 0.0, %v3259
    %3261 = vmatmul.bf16.gmra.mxu0 %v3096
    %v3262 = vpop.f32.mrf.mxu0
    %v3263 = vadd.f32 0.0, %v3262
    %v3264 = vpop.f32.mrf.mxu0
    %v3265 = vadd.f32 0.0, %v3264
    %3266 = vmatmul.bf16.gmra.mxu0 %v3097
    %v3267 = vpop.f32.mrf.mxu0
    %v3268 = vadd.f32 0.0, %v3267
    %v3269 = vpop.f32.mrf.mxu0
    %v3270 = vadd.f32 0.0, %v3269
    %3271 = vmatmul.bf16.gmra.mxu0 %v3098
    %v3272 = vpop.f32.mrf.mxu0
    %v3273 = vadd.f32 0.0, %v3272
    %v3274 = vpop.f32.mrf.mxu0
    %v3275 = vadd.f32 0.0, %v3274
    %3276 = vmatmul.bf16.gmra.mxu0 %v3099
    %v3277 = vpop.f32.mrf.mxu0
    %v3278 = vadd.f32 0.0, %v3277
    %v3279 = vpop.f32.mrf.mxu0
    %v3280 = vadd.f32 0.0, %v3279
    %3281 = vmatmul.bf16.gmra.mxu0 %v3100
    %v3282 = vpop.f32.mrf.mxu0
    %v3283 = vadd.f32 0.0, %v3282
    %v3284 = vpop.f32.mrf.mxu0
    %v3285 = vadd.f32 0.0, %v3284
    %3286 = vmatmul.bf16.gmra.mxu0 %v3101
    %v3287 = vpop.f32.mrf.mxu0
    %v3288 = vadd.f32 0.0, %v3287
    %v3289 = vpop.f32.mrf.mxu0
    %v3290 = vadd.f32 0.0, %v3289
    %3291 = vmatmul.bf16.gmra.mxu0 %v3102
    %v3292 = vpop.f32.mrf.mxu0
    %v3293 = vadd.f32 0.0, %v3292
    %v3294 = vpop.f32.mrf.mxu0
    %v3295 = vadd.f32 0.0, %v3294
    %3296 = vmatmul.bf16.gmra.mxu0 %v3103
    %v3297 = vpop.f32.mrf.mxu0
    %v3298 = vadd.f32 0.0, %v3297
    %v3299 = vpop.f32.mrf.mxu0
    %v3300 = vadd.f32 0.0, %v3299
    %3301 = vmatmul.bf16.gmra.mxu0 %v3104
    %v3302 = vpop.f32.mrf.mxu0
    %v3303 = vadd.f32 0.0, %v3302
    %v3304 = vpop.f32.mrf.mxu0
    %v3305 = vadd.f32 0.0, %v3304
    %3306 = vmatmul.bf16.gmra.mxu0 %v3105
    %v3307 = vpop.f32.mrf.mxu0
    %v3308 = vadd.f32 0.0, %v3307
    %v3309 = vpop.f32.mrf.mxu0
    %v3310 = vadd.f32 0.0, %v3309
    %3311 = vmatmul.bf16.gmra.mxu0 %v3106
    %v3312 = vpop.f32.mrf.mxu0
    %v3313 = vadd.f32 0.0, %v3312
    %v3314 = vpop.f32.mrf.mxu0
    %v3315 = vadd.f32 0.0, %v3314
    %3316 = vmatmul.bf16.gmra.mxu0 %v3107
    %v3317 = vpop.f32.mrf.mxu0
    %v3318 = vadd.f32 0.0, %v3317
    %v3319 = vpop.f32.mrf.mxu0
    %v3320 = vadd.f32 0.0, %v3319
    %3321 = vmatmul.bf16.gmra.mxu0 %v3108
    %v3322 = vpop.f32.mrf.mxu0
    %v3323 = vadd.f32 0.0, %v3322
    %v3324 = vpop.f32.mrf.mxu0
    %v3325 = vadd.f32 0.0, %v3324
    %3326 = vmatmul.bf16.gmra.mxu0 %v3109
    %v3327 = vpop.f32.mrf.mxu0
    %v3328 = vadd.f32 0.0, %v3327
    %v3329 = vpop.f32.mrf.mxu0
    %v3330 = vadd.f32 0.0, %v3329
    %3331 = vmatmul.bf16.gmra.mxu0 %v3110
    %v3332 = vpop.f32.mrf.mxu0
    %v3333 = vadd.f32 0.0, %v3332
    %v3334 = vpop.f32.mrf.mxu0
    %v3335 = vadd.f32 0.0, %v3334
    %3336 = vmatmul.bf16.gmra.mxu0 %v3111
    %v3337 = vpop.f32.mrf.mxu0
    %v3338 = vadd.f32 0.0, %v3337
    %v3339 = vpop.f32.mrf.mxu0
    %v3340 = vadd.f32 0.0, %v3339
    %3341 = vmatmul.bf16.gmra.mxu0 %v3112
    %v3342 = vpop.f32.mrf.mxu0
    %v3343 = vadd.f32 0.0, %v3342
    %v3344 = vpop.f32.mrf.mxu0
    %v3345 = vadd.f32 0.0, %v3344
    %3346 = vdwg.mxu0
    %v3347 = vadd.f32 %v2952, %v3188
    %v3348 = vadd.f32 %v2953, %v3190
    %v3349 = vadd.f32 %v2954, %v3193
    %v3350 = vadd.f32 %v2955, %v3195
    %v3351 = vadd.f32 %v2956, %v3198
    %v3352 = vadd.f32 %v2957, %v3200
    %v3353 = vadd.f32 %v2958, %v3203
    %v3354 = vadd.f32 %v2959, %v3205
    %v3355 = vadd.f32 %v2960, %v3208
    %v3356 = vadd.f32 %v2961, %v3210
    %v3357 = vadd.f32 %v2962, %v3213
    %v3358 = vadd.f32 %v2963, %v3215
    %v3359 = vadd.f32 %v2964, %v3218
    %v3360 = vadd.f32 %v2965, %v3220
    %v3361 = vadd.f32 %v2966, %v3223
    %v3362 = vadd.f32 %v2967, %v3225
    %v3363 = vadd.f32 %v2968, %v3228
    %v3364 = vadd.f32 %v2969, %v3230
    %v3365 = vadd.f32 %v2970, %v3233
    %v3366 = vadd.f32 %v2971, %v3235
    %v3367 = vadd.f32 %v2972, %v3238
    %v3368 = vadd.f32 %v2973, %v3240
    %v3369 = vadd.f32 %v2974, %v3243
    %v3370 = vadd.f32 %v2975, %v3245
    %v3371 = vadd.f32 %v2976, %v3248
    %v3372 = vadd.f32 %v2977, %v3250
    %v3373 = vadd.f32 %v2978, %v3253
    %v3374 = vadd.f32 %v2979, %v3255
    %v3375 = vadd.f32 %v2980, %v3258
    %v3376 = vadd.f32 %v2981, %v3260
    %v3377 = vadd.f32 %v2982, %v3263
    %v3378 = vadd.f32 %v2983, %v3265
    %v3379 = vadd.f32 %v2984, %v3268
    %v3380 = vadd.f32 %v2985, %v3270
    %v3381 = vadd.f32 %v2986, %v3273
    %v3382 = vadd.f32 %v2987, %v3275
    %v3383 = vadd.f32 %v2988, %v3278
    %v3384 = vadd.f32 %v2989, %v3280
    %v3385 = vadd.f32 %v2990, %v3283
    %v3386 = vadd.f32 %v2991, %v3285
    %v3387 = vadd.f32 %v2992, %v3288
    %v3388 = vadd.f32 %v2993, %v3290
    %v3389 = vadd.f32 %v2994, %v3293
    %v3390 = vadd.f32 %v2995, %v3295
    %v3391 = vadd.f32 %v2996, %v3298
    %v3392 = vadd.f32 %v2997, %v3300
    %v3393 = vadd.f32 %v2998, %v3303
    %v3394 = vadd.f32 %v2999, %v3305
    %v3395 = vadd.f32 %v3000, %v3308
    %v3396 = vadd.f32 %v3001, %v3310
    %v3397 = vadd.f32 %v3002, %v3313
    %v3398 = vadd.f32 %v3003, %v3315
    %v3399 = vadd.f32 %v3004, %v3318
    %v3400 = vadd.f32 %v3005, %v3320
    %v3401 = vadd.f32 %v3006, %v3323
    %v3402 = vadd.f32 %v3007, %v3325
    %v3403 = vadd.f32 %v3008, %v3328
    %v3404 = vadd.f32 %v3009, %v3330
    %v3405 = vadd.f32 %v3010, %v3333
    %v3406 = vadd.f32 %v3011, %v3335
    %v3407 = vadd.f32 %v3012, %v3338
    %v3408 = vadd.f32 %v3013, %v3340
    %v3409 = vadd.f32 %v3014, %v3343
    %v3410 = vadd.f32 %v3015, %v3345
    %v3411 = vld [vmem:[%s3016 + $0x1] sm:$0xff]
    %v3412 = vld [vmem:[%s3016 + $0x9] sm:$0xff]
    %v3413 = vld [vmem:[%s3016 + $0x19] sm:$0xff]
    %v3414 = vld [vmem:[%s3016 + $0x21] sm:$0xff]
    %v3415 = vld [vmem:[%s3016 + $0x31] sm:$0xff]
    %v3416 = vld [vmem:[%s3016 + $0x39] sm:$0xff]
    %v3417 = vld [vmem:[%s3016 + $0x49] sm:$0xff]
    %v3418 = vld [vmem:[%s3016 + $0x51] sm:$0xff]
    %v3419 = vld [vmem:[%s3016 + $0x61] sm:$0xff]
    %v3420 = vld [vmem:[%s3016 + $0x69] sm:$0xff]
    %v3421 = vld [vmem:[%s3016 + $0x79] sm:$0xff]
    %v3422 = vld [vmem:[%s3016 + $0x81] sm:$0xff]
    %v3423 = vld [vmem:[%s3016 + $0x91] sm:$0xff]
    %v3424 = vld [vmem:[%s3016 + $0x99] sm:$0xff]
    %v3425 = vld [vmem:[%s3016 + $0xa9] sm:$0xff]
    %v3426 = vld [vmem:[%s3016 + $0xb1] sm:$0xff]
    %v3427 = vld [vmem:[%s3016 + $0xc1] sm:$0xff]
    %v3428 = vld [vmem:[%s3016 + $0xc9] sm:$0xff]
    %v3429 = vld [vmem:[%s3016 + $0xd9] sm:$0xff]
    %v3430 = vld [vmem:[%s3016 + $0xe1] sm:$0xff]
    %v3431 = vld [vmem:[%s3016 + $0xf1] sm:$0xff]
    %v3432 = vld [vmem:[%s3016 + $0xf9] sm:$0xff]
    %v3433 = vld [vmem:[%s3016 + $0x109] sm:$0xff]
    %v3434 = vld [vmem:[%s3016 + $0x111] sm:$0xff]
    %v3435 = vld [vmem:[%s3016 + $0x121] sm:$0xff]
    %v3436 = vld [vmem:[%s3016 + $0x129] sm:$0xff]
    %v3437 = vld [vmem:[%s3016 + $0x139] sm:$0xff]
    %v3438 = vld [vmem:[%s3016 + $0x141] sm:$0xff]
    %v3439 = vld [vmem:[%s3016 + $0x151] sm:$0xff]
    %v3440 = vld [vmem:[%s3016 + $0x159] sm:$0xff]
    %v3441 = vld [vmem:[%s3016 + $0x169] sm:$0xff]
    %v3442 = vld [vmem:[%s3016 + $0x171] sm:$0xff]
    %v3443 = vld [vmem:[%s3016 + $0x1b1] sm:$0xff]
    %v3444 = vld [vmem:[%s3016 + $0x1b9] sm:$0xff]
    %v3445 = vld [vmem:[%s3016 + $0x1c9] sm:$0xff]
    %v3446 = vld [vmem:[%s3016 + $0x1d1] sm:$0xff]
    %v3447 = vld [vmem:[%s3016 + $0x1e1] sm:$0xff]
    %v3448 = vld [vmem:[%s3016 + $0x1e9] sm:$0xff]
    %v3449 = vld [vmem:[%s3016 + $0x1f9] sm:$0xff]
    %v3450 = vld [vmem:[%s3016 + $0x201] sm:$0xff]
    %v3451 = vld [vmem:[%s3016 + $0x211] sm:$0xff]
    %v3452 = vld [vmem:[%s3016 + $0x219] sm:$0xff]
    %v3453 = vld [vmem:[%s3016 + $0x229] sm:$0xff]
    %v3454 = vld [vmem:[%s3016 + $0x231] sm:$0xff]
    %v3455 = vld [vmem:[%s3016 + $0x241] sm:$0xff]
    %v3456 = vld [vmem:[%s3016 + $0x249] sm:$0xff]
    %v3457 = vld [vmem:[%s3016 + $0x259] sm:$0xff]
    %v3458 = vld [vmem:[%s3016 + $0x261] sm:$0xff]
    %v3459 = vld [vmem:[%s3016 + $0x271] sm:$0xff]
    %v3460 = vld [vmem:[%s3016 + $0x279] sm:$0xff]
    %v3461 = vld [vmem:[%s3016 + $0x289] sm:$0xff]
    %v3462 = vld [vmem:[%s3016 + $0x291] sm:$0xff]
    %v3463 = vld [vmem:[%s3016 + $0x2a1] sm:$0xff]
    %v3464 = vld [vmem:[%s3016 + $0x2a9] sm:$0xff]
    %v3465 = vld [vmem:[%s3016 + $0x2b9] sm:$0xff]
    %v3466 = vld [vmem:[%s3016 + $0x2c1] sm:$0xff]
    %v3467 = vld [vmem:[%s3016 + $0x2d1] sm:$0xff]
    %v3468 = vld [vmem:[%s3016 + $0x2d9] sm:$0xff]
    %v3469 = vld [vmem:[%s3016 + $0x2e9] sm:$0xff]
    %v3470 = vld [vmem:[%s3016 + $0x2f1] sm:$0xff]
    %v3471 = vld [vmem:[%s3016 + $0x301] sm:$0xff]
    %v3472 = vld [vmem:[%s3016 + $0x309] sm:$0xff]
    %v3473 = vld [vmem:[%s3016 + $0x319] sm:$0xff]
    %v3474 = vld [vmem:[%s3016 + $0x321] sm:$0xff]
    %v3475 = vpack.c.bf16 %v3412, %v3411
    %v3476 = vpack.c.bf16 %v3414, %v3413
    %v3477 = vpack.c.bf16 %v3416, %v3415
    %v3478 = vpack.c.bf16 %v3418, %v3417
    %v3479 = vpack.c.bf16 %v3420, %v3419
    %v3480 = vpack.c.bf16 %v3422, %v3421
    %v3481 = vpack.c.bf16 %v3424, %v3423
    %v3482 = vpack.c.bf16 %v3426, %v3425
    %v3483 = vpack.c.bf16 %v3428, %v3427
    %v3484 = vpack.c.bf16 %v3430, %v3429
    %v3485 = vpack.c.bf16 %v3432, %v3431
    %v3486 = vpack.c.bf16 %v3434, %v3433
    %v3487 = vpack.c.bf16 %v3436, %v3435
    %v3488 = vpack.c.bf16 %v3438, %v3437
    %v3489 = vpack.c.bf16 %v3440, %v3439
    %v3490 = vpack.c.bf16 %v3442, %v3441
    %v3491 = vpack.c.bf16 %v3444, %v3443
    %v3492 = vpack.c.bf16 %v3446, %v3445
    %v3493 = vpack.c.bf16 %v3448, %v3447
    %v3494 = vpack.c.bf16 %v3450, %v3449
    %v3495 = vpack.c.bf16 %v3452, %v3451
    %v3496 = vpack.c.bf16 %v3454, %v3453
    %v3497 = vpack.c.bf16 %v3456, %v3455
    %v3498 = vpack.c.bf16 %v3458, %v3457
    %v3499 = vpack.c.bf16 %v3460, %v3459
    %v3500 = vpack.c.bf16 %v3462, %v3461
    %v3501 = vpack.c.bf16 %v3464, %v3463
    %v3502 = vpack.c.bf16 %v3466, %v3465
    %v3503 = vpack.c.bf16 %v3468, %v3467
    %v3504 = vpack.c.bf16 %v3470, %v3469
    %v3505 = vpack.c.bf16 %v3472, %v3471
    %v3506 = vpack.c.bf16 %v3474, %v3473
    %s3507 = scalar_lea.vmem %s3, 448
    %v3508 = vld [vmem:[%s3507] sm:$0xf]
    %v3509 = vld [vmem:[%s3507 + $0x4] sm:$0xf]
    %v3510 = vld [vmem:[%s3507 + $0x8] sm:$0xf]
    %v3511 = vld [vmem:[%s3507 + $0xc] sm:$0xf]
    %v3512 = vld [vmem:[%s3507 + $0x10] sm:$0xf]
    %v3513 = vld [vmem:[%s3507 + $0x14] sm:$0xf]
    %v3514 = vld [vmem:[%s3507 + $0x18] sm:$0xf]
    %v3515 = vld [vmem:[%s3507 + $0x1c] sm:$0xf]
    %v3516 = vld [vmem:[%s3507 + $0x20] sm:$0xf]
    %v3517 = vld [vmem:[%s3507 + $0x24] sm:$0xf]
    %v3518 = vld [vmem:[%s3507 + $0x28] sm:$0xf]
    %v3519 = vld [vmem:[%s3507 + $0x2c] sm:$0xf]
    %v3520 = vld [vmem:[%s3507 + $0x30] sm:$0xf]
    %v3521 = vld [vmem:[%s3507 + $0x34] sm:$0xf]
    %v3522 = vld [vmem:[%s3507 + $0x38] sm:$0xf]
    %v3523 = vld [vmem:[%s3507 + $0x3c] sm:$0xf]
    %v3540 = vunpack.c.l.b16 %v3508
    %v3541 = vunpack.c.l.b16 %v3509
    %v3542 = vunpack.c.l.b16 %v3510
    %v3543 = vunpack.c.l.b16 %v3511
    %v3544 = vunpack.c.l.b16 %v3512
    %v3545 = vunpack.c.l.b16 %v3513
    %v3546 = vunpack.c.l.b16 %v3514
    %v3547 = vunpack.c.l.b16 %v3515
    %v3548 = vunpack.c.l.b16 %v3516
    %v3549 = vunpack.c.l.b16 %v3517
    %v3550 = vunpack.c.l.b16 %v3518
    %v3551 = vunpack.c.l.b16 %v3519
    %v3552 = vunpack.c.l.b16 %v3520
    %v3553 = vunpack.c.l.b16 %v3521
    %v3554 = vunpack.c.l.b16 %v3522
    %v3555 = vunpack.c.l.b16 %v3523
    %v3556 = vpack.c.b16 %v3541, %v3540
    %v3557 = vpack.c.b16 %v3543, %v3542
    %v3558 = vpack.c.b16 %v3545, %v3544
    %v3559 = vpack.c.b16 %v3547, %v3546
    %v3560 = vpack.c.b16 %v3549, %v3548
    %v3561 = vpack.c.b16 %v3551, %v3550
    %v3562 = vpack.c.b16 %v3553, %v3552
    %v3563 = vpack.c.b16 %v3555, %v3554
    %3572 = vmatpush.bf16.msra.mxu0 %v3563
    %3573 = vmatpush.bf16.msra.mxu0 %v3562
    %3574 = vmatpush.bf16.msra.mxu0 %v3561
    %3575 = vmatpush.bf16.msra.mxu0 %v3560
    %3576 = vmatpush.bf16.msra.mxu0 %v3559
    %3577 = vmatpush.bf16.msra.mxu0 %v3558
    %3578 = vmatpush.bf16.msra.mxu0 %v3557
    %3579 = vmatpush.bf16.msra.mxu0 %v3556
    %3580 = vmatmul.bf16.gmra.mxu0 %v3475
    %v3581 = vpop.f32.mrf.mxu0
    %v3582 = vadd.f32 0.0, %v3581
    %v3583 = vpop.f32.mrf.mxu0
    %v3584 = vadd.f32 0.0, %v3583
    %3585 = vmatmul.bf16.gmra.mxu0 %v3476
    %v3586 = vpop.f32.mrf.mxu0
    %v3587 = vadd.f32 0.0, %v3586
    %v3588 = vpop.f32.mrf.mxu0
    %v3589 = vadd.f32 0.0, %v3588
    %3590 = vmatmul.bf16.gmra.mxu0 %v3477
    %v3591 = vpop.f32.mrf.mxu0
    %v3592 = vadd.f32 0.0, %v3591
    %v3593 = vpop.f32.mrf.mxu0
    %v3594 = vadd.f32 0.0, %v3593
    %3595 = vmatmul.bf16.gmra.mxu0 %v3478
    %v3596 = vpop.f32.mrf.mxu0
    %v3597 = vadd.f32 0.0, %v3596
    %v3598 = vpop.f32.mrf.mxu0
    %v3599 = vadd.f32 0.0, %v3598
    %3600 = vmatmul.bf16.gmra.mxu0 %v3479
    %v3601 = vpop.f32.mrf.mxu0
    %v3602 = vadd.f32 0.0, %v3601
    %v3603 = vpop.f32.mrf.mxu0
    %v3604 = vadd.f32 0.0, %v3603
    %3605 = vmatmul.bf16.gmra.mxu0 %v3480
    %v3606 = vpop.f32.mrf.mxu0
    %v3607 = vadd.f32 0.0, %v3606
    %v3608 = vpop.f32.mrf.mxu0
    %v3609 = vadd.f32 0.0, %v3608
    %3610 = vmatmul.bf16.gmra.mxu0 %v3481
    %v3611 = vpop.f32.mrf.mxu0
    %v3612 = vadd.f32 0.0, %v3611
    %v3613 = vpop.f32.mrf.mxu0
    %v3614 = vadd.f32 0.0, %v3613
    %3615 = vmatmul.bf16.gmra.mxu0 %v3482
    %v3616 = vpop.f32.mrf.mxu0
    %v3617 = vadd.f32 0.0, %v3616
    %v3618 = vpop.f32.mrf.mxu0
    %v3619 = vadd.f32 0.0, %v3618
    %3620 = vmatmul.bf16.gmra.mxu0 %v3483
    %v3621 = vpop.f32.mrf.mxu0
    %v3622 = vadd.f32 0.0, %v3621
    %v3623 = vpop.f32.mrf.mxu0
    %v3624 = vadd.f32 0.0, %v3623
    %3625 = vmatmul.bf16.gmra.mxu0 %v3484
    %v3626 = vpop.f32.mrf.mxu0
    %v3627 = vadd.f32 0.0, %v3626
    %v3628 = vpop.f32.mrf.mxu0
    %v3629 = vadd.f32 0.0, %v3628
    %3630 = vmatmul.bf16.gmra.mxu0 %v3485
    %v3631 = vpop.f32.mrf.mxu0
    %v3632 = vadd.f32 0.0, %v3631
    %v3633 = vpop.f32.mrf.mxu0
    %v3634 = vadd.f32 0.0, %v3633
    %3635 = vmatmul.bf16.gmra.mxu0 %v3486
    %v3636 = vpop.f32.mrf.mxu0
    %v3637 = vadd.f32 0.0, %v3636
    %v3638 = vpop.f32.mrf.mxu0
    %v3639 = vadd.f32 0.0, %v3638
    %3640 = vmatmul.bf16.gmra.mxu0 %v3487
    %v3641 = vpop.f32.mrf.mxu0
    %v3642 = vadd.f32 0.0, %v3641
    %v3643 = vpop.f32.mrf.mxu0
    %v3644 = vadd.f32 0.0, %v3643
    %3645 = vmatmul.bf16.gmra.mxu0 %v3488
    %v3646 = vpop.f32.mrf.mxu0
    %v3647 = vadd.f32 0.0, %v3646
    %v3648 = vpop.f32.mrf.mxu0
    %v3649 = vadd.f32 0.0, %v3648
    %3650 = vmatmul.bf16.gmra.mxu0 %v3489
    %v3651 = vpop.f32.mrf.mxu0
    %v3652 = vadd.f32 0.0, %v3651
    %v3653 = vpop.f32.mrf.mxu0
    %v3654 = vadd.f32 0.0, %v3653
    %3655 = vmatmul.bf16.gmra.mxu0 %v3490
    %v3656 = vpop.f32.mrf.mxu0
    %v3657 = vadd.f32 0.0, %v3656
    %v3658 = vpop.f32.mrf.mxu0
    %v3659 = vadd.f32 0.0, %v3658
    %3660 = vmatmul.bf16.gmra.mxu0 %v3491
    %v3661 = vpop.f32.mrf.mxu0
    %v3662 = vadd.f32 0.0, %v3661
    %v3663 = vpop.f32.mrf.mxu0
    %v3664 = vadd.f32 0.0, %v3663
    %3665 = vmatmul.bf16.gmra.mxu0 %v3492
    %v3666 = vpop.f32.mrf.mxu0
    %v3667 = vadd.f32 0.0, %v3666
    %v3668 = vpop.f32.mrf.mxu0
    %v3669 = vadd.f32 0.0, %v3668
    %3670 = vmatmul.bf16.gmra.mxu0 %v3493
    %v3671 = vpop.f32.mrf.mxu0
    %v3672 = vadd.f32 0.0, %v3671
    %v3673 = vpop.f32.mrf.mxu0
    %v3674 = vadd.f32 0.0, %v3673
    %3675 = vmatmul.bf16.gmra.mxu0 %v3494
    %v3676 = vpop.f32.mrf.mxu0
    %v3677 = vadd.f32 0.0, %v3676
    %v3678 = vpop.f32.mrf.mxu0
    %v3679 = vadd.f32 0.0, %v3678
    %3680 = vmatmul.bf16.gmra.mxu0 %v3495
    %v3681 = vpop.f32.mrf.mxu0
    %v3682 = vadd.f32 0.0, %v3681
    %v3683 = vpop.f32.mrf.mxu0
    %v3684 = vadd.f32 0.0, %v3683
    %3685 = vmatmul.bf16.gmra.mxu0 %v3496
    %v3686 = vpop.f32.mrf.mxu0
    %v3687 = vadd.f32 0.0, %v3686
    %v3688 = vpop.f32.mrf.mxu0
    %v3689 = vadd.f32 0.0, %v3688
    %3690 = vmatmul.bf16.gmra.mxu0 %v3497
    %v3691 = vpop.f32.mrf.mxu0
    %v3692 = vadd.f32 0.0, %v3691
    %v3693 = vpop.f32.mrf.mxu0
    %v3694 = vadd.f32 0.0, %v3693
    %3695 = vmatmul.bf16.gmra.mxu0 %v3498
    %v3696 = vpop.f32.mrf.mxu0
    %v3697 = vadd.f32 0.0, %v3696
    %v3698 = vpop.f32.mrf.mxu0
    %v3699 = vadd.f32 0.0, %v3698
    %3700 = vmatmul.bf16.gmra.mxu0 %v3499
    %v3701 = vpop.f32.mrf.mxu0
    %v3702 = vadd.f32 0.0, %v3701
    %v3703 = vpop.f32.mrf.mxu0
    %v3704 = vadd.f32 0.0, %v3703
    %3705 = vmatmul.bf16.gmra.mxu0 %v3500
    %v3706 = vpop.f32.mrf.mxu0
    %v3707 = vadd.f32 0.0, %v3706
    %v3708 = vpop.f32.mrf.mxu0
    %v3709 = vadd.f32 0.0, %v3708
    %3710 = vmatmul.bf16.gmra.mxu0 %v3501
    %v3711 = vpop.f32.mrf.mxu0
    %v3712 = vadd.f32 0.0, %v3711
    %v3713 = vpop.f32.mrf.mxu0
    %v3714 = vadd.f32 0.0, %v3713
    %3715 = vmatmul.bf16.gmra.mxu0 %v3502
    %v3716 = vpop.f32.mrf.mxu0
    %v3717 = vadd.f32 0.0, %v3716
    %v3718 = vpop.f32.mrf.mxu0
    %v3719 = vadd.f32 0.0, %v3718
    %3720 = vmatmul.bf16.gmra.mxu0 %v3503
    %v3721 = vpop.f32.mrf.mxu0
    %v3722 = vadd.f32 0.0, %v3721
    %v3723 = vpop.f32.mrf.mxu0
    %v3724 = vadd.f32 0.0, %v3723
    %3725 = vmatmul.bf16.gmra.mxu0 %v3504
    %v3726 = vpop.f32.mrf.mxu0
    %v3727 = vadd.f32 0.0, %v3726
    %v3728 = vpop.f32.mrf.mxu0
    %v3729 = vadd.f32 0.0, %v3728
    %3730 = vmatmul.bf16.gmra.mxu0 %v3505
    %v3731 = vpop.f32.mrf.mxu0
    %v3732 = vadd.f32 0.0, %v3731
    %v3733 = vpop.f32.mrf.mxu0
    %v3734 = vadd.f32 0.0, %v3733
    %3735 = vmatmul.bf16.gmra.mxu0 %v3506
    %v3736 = vpop.f32.mrf.mxu0
    %v3737 = vadd.f32 0.0, %v3736
    %v3738 = vpop.f32.mrf.mxu0
    %v3739 = vadd.f32 0.0, %v3738
    %3740 = vdwg.mxu0
    %v3741 = vadd.f32 %v3347, %v3582
    %v3742 = vadd.f32 %v3348, %v3584
    %v3743 = vadd.f32 %v3349, %v3587
    %v3744 = vadd.f32 %v3350, %v3589
    %v3745 = vadd.f32 %v3351, %v3592
    %v3746 = vadd.f32 %v3352, %v3594
    %v3747 = vadd.f32 %v3353, %v3597
    %v3748 = vadd.f32 %v3354, %v3599
    %v3749 = vadd.f32 %v3355, %v3602
    %v3750 = vadd.f32 %v3356, %v3604
    %v3751 = vadd.f32 %v3357, %v3607
    %v3752 = vadd.f32 %v3358, %v3609
    %v3753 = vadd.f32 %v3359, %v3612
    %v3754 = vadd.f32 %v3360, %v3614
    %v3755 = vadd.f32 %v3361, %v3617
    %v3756 = vadd.f32 %v3362, %v3619
    %v3757 = vadd.f32 %v3363, %v3622
    %v3758 = vadd.f32 %v3364, %v3624
    %v3759 = vadd.f32 %v3365, %v3627
    %v3760 = vadd.f32 %v3366, %v3629
    %v3761 = vadd.f32 %v3367, %v3632
    %v3762 = vadd.f32 %v3368, %v3634
    %v3763 = vadd.f32 %v3369, %v3637
    %v3764 = vadd.f32 %v3370, %v3639
    %v3765 = vadd.f32 %v3371, %v3642
    %v3766 = vadd.f32 %v3372, %v3644
    %v3767 = vadd.f32 %v3373, %v3647
    %v3768 = vadd.f32 %v3374, %v3649
    %v3769 = vadd.f32 %v3375, %v3652
    %v3770 = vadd.f32 %v3376, %v3654
    %v3771 = vadd.f32 %v3377, %v3657
    %v3772 = vadd.f32 %v3378, %v3659
    %v3773 = vadd.f32 %v3379, %v3662
    %v3774 = vadd.f32 %v3380, %v3664
    %v3775 = vadd.f32 %v3381, %v3667
    %v3776 = vadd.f32 %v3382, %v3669
    %v3777 = vadd.f32 %v3383, %v3672
    %v3778 = vadd.f32 %v3384, %v3674
    %v3779 = vadd.f32 %v3385, %v3677
    %v3780 = vadd.f32 %v3386, %v3679
    %v3781 = vadd.f32 %v3387, %v3682
    %v3782 = vadd.f32 %v3388, %v3684
    %v3783 = vadd.f32 %v3389, %v3687
    %v3784 = vadd.f32 %v3390, %v3689
    %v3785 = vadd.f32 %v3391, %v3692
    %v3786 = vadd.f32 %v3392, %v3694
    %v3787 = vadd.f32 %v3393, %v3697
    %v3788 = vadd.f32 %v3394, %v3699
    %v3789 = vadd.f32 %v3395, %v3702
    %v3790 = vadd.f32 %v3396, %v3704
    %v3791 = vadd.f32 %v3397, %v3707
    %v3792 = vadd.f32 %v3398, %v3709
    %v3793 = vadd.f32 %v3399, %v3712
    %v3794 = vadd.f32 %v3400, %v3714
    %v3795 = vadd.f32 %v3401, %v3717
    %v3796 = vadd.f32 %v3402, %v3719
    %v3797 = vadd.f32 %v3403, %v3722
    %v3798 = vadd.f32 %v3404, %v3724
    %v3799 = vadd.f32 %v3405, %v3727
    %v3800 = vadd.f32 %v3406, %v3729
    %v3801 = vadd.f32 %v3407, %v3732
    %v3802 = vadd.f32 %v3408, %v3734
    %v3803 = vadd.f32 %v3409, %v3737
    %v3804 = vadd.f32 %v3410, %v3739
    %v3805 = vld [vmem:[%s3016 + $0x2] sm:$0xff]
    %v3806 = vld [vmem:[%s3016 + $0xa] sm:$0xff]
    %v3807 = vld [vmem:[%s3016 + $0x1a] sm:$0xff]
    %v3808 = vld [vmem:[%s3016 + $0x22] sm:$0xff]
    %v3809 = vld [vmem:[%s3016 + $0x32] sm:$0xff]
    %v3810 = vld [vmem:[%s3016 + $0x3a] sm:$0xff]
    %v3811 = vld [vmem:[%s3016 + $0x4a] sm:$0xff]
    %v3812 = vld [vmem:[%s3016 + $0x52] sm:$0xff]
    %v3813 = vld [vmem:[%s3016 + $0x62] sm:$0xff]
    %v3814 = vld [vmem:[%s3016 + $0x6a] sm:$0xff]
    %v3815 = vld [vmem:[%s3016 + $0x7a] sm:$0xff]
    %v3816 = vld [vmem:[%s3016 + $0x82] sm:$0xff]
    %v3817 = vld [vmem:[%s3016 + $0x92] sm:$0xff]
    %v3818 = vld [vmem:[%s3016 + $0x9a] sm:$0xff]
    %v3819 = vld [vmem:[%s3016 + $0xaa] sm:$0xff]
    %v3820 = vld [vmem:[%s3016 + $0xb2] sm:$0xff]
    %v3821 = vld [vmem:[%s3016 + $0xc2] sm:$0xff]
    %v3822 = vld [vmem:[%s3016 + $0xca] sm:$0xff]
    %v3823 = vld [vmem:[%s3016 + $0xda] sm:$0xff]
    %v3824 = vld [vmem:[%s3016 + $0xe2] sm:$0xff]
    %v3825 = vld [vmem:[%s3016 + $0xf2] sm:$0xff]
    %v3826 = vld [vmem:[%s3016 + $0xfa] sm:$0xff]
    %v3827 = vld [vmem:[%s3016 + $0x10a] sm:$0xff]
    %v3828 = vld [vmem:[%s3016 + $0x112] sm:$0xff]
    %v3829 = vld [vmem:[%s3016 + $0x122] sm:$0xff]
    %v3830 = vld [vmem:[%s3016 + $0x12a] sm:$0xff]
    %v3831 = vld [vmem:[%s3016 + $0x13a] sm:$0xff]
    %v3832 = vld [vmem:[%s3016 + $0x142] sm:$0xff]
    %v3833 = vld [vmem:[%s3016 + $0x152] sm:$0xff]
    %v3834 = vld [vmem:[%s3016 + $0x15a] sm:$0xff]
    %v3835 = vld [vmem:[%s3016 + $0x16a] sm:$0xff]
    %v3836 = vld [vmem:[%s3016 + $0x172] sm:$0xff]
    %v3837 = vld [vmem:[%s3016 + $0x1b2] sm:$0xff]
    %v3838 = vld [vmem:[%s3016 + $0x1ba] sm:$0xff]
    %v3839 = vld [vmem:[%s3016 + $0x1ca] sm:$0xff]
    %v3840 = vld [vmem:[%s3016 + $0x1d2] sm:$0xff]
    %v3841 = vld [vmem:[%s3016 + $0x1e2] sm:$0xff]
    %v3842 = vld [vmem:[%s3016 + $0x1ea] sm:$0xff]
    %v3843 = vld [vmem:[%s3016 + $0x1fa] sm:$0xff]
    %v3844 = vld [vmem:[%s3016 + $0x202] sm:$0xff]
    %v3845 = vld [vmem:[%s3016 + $0x212] sm:$0xff]
    %v3846 = vld [vmem:[%s3016 + $0x21a] sm:$0xff]
    %v3847 = vld [vmem:[%s3016 + $0x22a] sm:$0xff]
    %v3848 = vld [vmem:[%s3016 + $0x232] sm:$0xff]
    %v3849 = vld [vmem:[%s3016 + $0x242] sm:$0xff]
    %v3850 = vld [vmem:[%s3016 + $0x24a] sm:$0xff]
    %v3851 = vld [vmem:[%s3016 + $0x25a] sm:$0xff]
    %v3852 = vld [vmem:[%s3016 + $0x262] sm:$0xff]
    %v3853 = vld [vmem:[%s3016 + $0x272] sm:$0xff]
    %v3854 = vld [vmem:[%s3016 + $0x27a] sm:$0xff]
    %v3855 = vld [vmem:[%s3016 + $0x28a] sm:$0xff]
    %v3856 = vld [vmem:[%s3016 + $0x292] sm:$0xff]
    %v3857 = vld [vmem:[%s3016 + $0x2a2] sm:$0xff]
    %v3858 = vld [vmem:[%s3016 + $0x2aa] sm:$0xff]
    %v3859 = vld [vmem:[%s3016 + $0x2ba] sm:$0xff]
    %v3860 = vld [vmem:[%s3016 + $0x2c2] sm:$0xff]
    %v3861 = vld [vmem:[%s3016 + $0x2d2] sm:$0xff]
    %v3862 = vld [vmem:[%s3016 + $0x2da] sm:$0xff]
    %v3863 = vld [vmem:[%s3016 + $0x2ea] sm:$0xff]
    %v3864 = vld [vmem:[%s3016 + $0x2f2] sm:$0xff]
    %v3865 = vld [vmem:[%s3016 + $0x302] sm:$0xff]
    %v3866 = vld [vmem:[%s3016 + $0x30a] sm:$0xff]
    %v3867 = vld [vmem:[%s3016 + $0x31a] sm:$0xff]
    %v3868 = vld [vmem:[%s3016 + $0x322] sm:$0xff]
    %v3869 = vpack.c.bf16 %v3806, %v3805
    %v3870 = vpack.c.bf16 %v3808, %v3807
    %v3871 = vpack.c.bf16 %v3810, %v3809
    %v3872 = vpack.c.bf16 %v3812, %v3811
    %v3873 = vpack.c.bf16 %v3814, %v3813
    %v3874 = vpack.c.bf16 %v3816, %v3815
    %v3875 = vpack.c.bf16 %v3818, %v3817
    %v3876 = vpack.c.bf16 %v3820, %v3819
    %v3877 = vpack.c.bf16 %v3822, %v3821
    %v3878 = vpack.c.bf16 %v3824, %v3823
    %v3879 = vpack.c.bf16 %v3826, %v3825
    %v3880 = vpack.c.bf16 %v3828, %v3827
    %v3881 = vpack.c.bf16 %v3830, %v3829
    %v3882 = vpack.c.bf16 %v3832, %v3831
    %v3883 = vpack.c.bf16 %v3834, %v3833
    %v3884 = vpack.c.bf16 %v3836, %v3835
    %v3885 = vpack.c.bf16 %v3838, %v3837
    %v3886 = vpack.c.bf16 %v3840, %v3839
    %v3887 = vpack.c.bf16 %v3842, %v3841
    %v3888 = vpack.c.bf16 %v3844, %v3843
    %v3889 = vpack.c.bf16 %v3846, %v3845
    %v3890 = vpack.c.bf16 %v3848, %v3847
    %v3891 = vpack.c.bf16 %v3850, %v3849
    %v3892 = vpack.c.bf16 %v3852, %v3851
    %v3893 = vpack.c.bf16 %v3854, %v3853
    %v3894 = vpack.c.bf16 %v3856, %v3855
    %v3895 = vpack.c.bf16 %v3858, %v3857
    %v3896 = vpack.c.bf16 %v3860, %v3859
    %v3897 = vpack.c.bf16 %v3862, %v3861
    %v3898 = vpack.c.bf16 %v3864, %v3863
    %v3899 = vpack.c.bf16 %v3866, %v3865
    %v3900 = vpack.c.bf16 %v3868, %v3867
    %s3901 = scalar_lea.vmem %s3, 512
    %v3902 = vld [vmem:[%s3901] sm:$0xf]
    %v3903 = vld [vmem:[%s3901 + $0x4] sm:$0xf]
    %v3904 = vld [vmem:[%s3901 + $0x8] sm:$0xf]
    %v3905 = vld [vmem:[%s3901 + $0xc] sm:$0xf]
    %v3906 = vld [vmem:[%s3901 + $0x10] sm:$0xf]
    %v3907 = vld [vmem:[%s3901 + $0x14] sm:$0xf]
    %v3908 = vld [vmem:[%s3901 + $0x18] sm:$0xf]
    %v3909 = vld [vmem:[%s3901 + $0x1c] sm:$0xf]
    %v3910 = vld [vmem:[%s3901 + $0x20] sm:$0xf]
    %v3911 = vld [vmem:[%s3901 + $0x24] sm:$0xf]
    %v3912 = vld [vmem:[%s3901 + $0x28] sm:$0xf]
    %v3913 = vld [vmem:[%s3901 + $0x2c] sm:$0xf]
    %v3914 = vld [vmem:[%s3901 + $0x30] sm:$0xf]
    %v3915 = vld [vmem:[%s3901 + $0x34] sm:$0xf]
    %v3916 = vld [vmem:[%s3901 + $0x38] sm:$0xf]
    %v3917 = vld [vmem:[%s3901 + $0x3c] sm:$0xf]
    %v3934 = vunpack.c.l.b16 %v3902
    %v3935 = vunpack.c.l.b16 %v3903
    %v3936 = vunpack.c.l.b16 %v3904
    %v3937 = vunpack.c.l.b16 %v3905
    %v3938 = vunpack.c.l.b16 %v3906
    %v3939 = vunpack.c.l.b16 %v3907
    %v3940 = vunpack.c.l.b16 %v3908
    %v3941 = vunpack.c.l.b16 %v3909
    %v3942 = vunpack.c.l.b16 %v3910
    %v3943 = vunpack.c.l.b16 %v3911
    %v3944 = vunpack.c.l.b16 %v3912
    %v3945 = vunpack.c.l.b16 %v3913
    %v3946 = vunpack.c.l.b16 %v3914
    %v3947 = vunpack.c.l.b16 %v3915
    %v3948 = vunpack.c.l.b16 %v3916
    %v3949 = vunpack.c.l.b16 %v3917
    %v3950 = vpack.c.b16 %v3935, %v3934
    %v3951 = vpack.c.b16 %v3937, %v3936
    %v3952 = vpack.c.b16 %v3939, %v3938
    %v3953 = vpack.c.b16 %v3941, %v3940
    %v3954 = vpack.c.b16 %v3943, %v3942
    %v3955 = vpack.c.b16 %v3945, %v3944
    %v3956 = vpack.c.b16 %v3947, %v3946
    %v3957 = vpack.c.b16 %v3949, %v3948
    %3966 = vmatpush.bf16.msra.mxu0 %v3957
    %3967 = vmatpush.bf16.msra.mxu0 %v3956
    %3968 = vmatpush.bf16.msra.mxu0 %v3955
    %3969 = vmatpush.bf16.msra.mxu0 %v3954
    %3970 = vmatpush.bf16.msra.mxu0 %v3953
    %3971 = vmatpush.bf16.msra.mxu0 %v3952
    %3972 = vmatpush.bf16.msra.mxu0 %v3951
    %3973 = vmatpush.bf16.msra.mxu0 %v3950
    %3974 = vmatmul.bf16.gmra.mxu0 %v3869
    %v3975 = vpop.f32.mrf.mxu0
    %v3976 = vadd.f32 0.0, %v3975
    %v3977 = vpop.f32.mrf.mxu0
    %v3978 = vadd.f32 0.0, %v3977
    %3979 = vmatmul.bf16.gmra.mxu0 %v3870
    %v3980 = vpop.f32.mrf.mxu0
    %v3981 = vadd.f32 0.0, %v3980
    %v3982 = vpop.f32.mrf.mxu0
    %v3983 = vadd.f32 0.0, %v3982
    %3984 = vmatmul.bf16.gmra.mxu0 %v3871
    %v3985 = vpop.f32.mrf.mxu0
    %v3986 = vadd.f32 0.0, %v3985
    %v3987 = vpop.f32.mrf.mxu0
    %v3988 = vadd.f32 0.0, %v3987
    %3989 = vmatmul.bf16.gmra.mxu0 %v3872
    %v3990 = vpop.f32.mrf.mxu0
    %v3991 = vadd.f32 0.0, %v3990
    %v3992 = vpop.f32.mrf.mxu0
    %v3993 = vadd.f32 0.0, %v3992
    %3994 = vmatmul.bf16.gmra.mxu0 %v3873
    %v3995 = vpop.f32.mrf.mxu0
    %v3996 = vadd.f32 0.0, %v3995
    %v3997 = vpop.f32.mrf.mxu0
    %v3998 = vadd.f32 0.0, %v3997
    %3999 = vmatmul.bf16.gmra.mxu0 %v3874
    %v4000 = vpop.f32.mrf.mxu0
    %v4001 = vadd.f32 0.0, %v4000
    %v4002 = vpop.f32.mrf.mxu0
    %v4003 = vadd.f32 0.0, %v4002
    %4004 = vmatmul.bf16.gmra.mxu0 %v3875
    %v4005 = vpop.f32.mrf.mxu0
    %v4006 = vadd.f32 0.0, %v4005
    %v4007 = vpop.f32.mrf.mxu0
    %v4008 = vadd.f32 0.0, %v4007
    %4009 = vmatmul.bf16.gmra.mxu0 %v3876
    %v4010 = vpop.f32.mrf.mxu0
    %v4011 = vadd.f32 0.0, %v4010
    %v4012 = vpop.f32.mrf.mxu0
    %v4013 = vadd.f32 0.0, %v4012
    %4014 = vmatmul.bf16.gmra.mxu0 %v3877
    %v4015 = vpop.f32.mrf.mxu0
    %v4016 = vadd.f32 0.0, %v4015
    %v4017 = vpop.f32.mrf.mxu0
    %v4018 = vadd.f32 0.0, %v4017
    %4019 = vmatmul.bf16.gmra.mxu0 %v3878
    %v4020 = vpop.f32.mrf.mxu0
    %v4021 = vadd.f32 0.0, %v4020
    %v4022 = vpop.f32.mrf.mxu0
    %v4023 = vadd.f32 0.0, %v4022
    %4024 = vmatmul.bf16.gmra.mxu0 %v3879
    %v4025 = vpop.f32.mrf.mxu0
    %v4026 = vadd.f32 0.0, %v4025
    %v4027 = vpop.f32.mrf.mxu0
    %v4028 = vadd.f32 0.0, %v4027
    %4029 = vmatmul.bf16.gmra.mxu0 %v3880
    %v4030 = vpop.f32.mrf.mxu0
    %v4031 = vadd.f32 0.0, %v4030
    %v4032 = vpop.f32.mrf.mxu0
    %v4033 = vadd.f32 0.0, %v4032
    %4034 = vmatmul.bf16.gmra.mxu0 %v3881
    %v4035 = vpop.f32.mrf.mxu0
    %v4036 = vadd.f32 0.0, %v4035
    %v4037 = vpop.f32.mrf.mxu0
    %v4038 = vadd.f32 0.0, %v4037
    %4039 = vmatmul.bf16.gmra.mxu0 %v3882
    %v4040 = vpop.f32.mrf.mxu0
    %v4041 = vadd.f32 0.0, %v4040
    %v4042 = vpop.f32.mrf.mxu0
    %v4043 = vadd.f32 0.0, %v4042
    %4044 = vmatmul.bf16.gmra.mxu0 %v3883
    %v4045 = vpop.f32.mrf.mxu0
    %v4046 = vadd.f32 0.0, %v4045
    %v4047 = vpop.f32.mrf.mxu0
    %v4048 = vadd.f32 0.0, %v4047
    %4049 = vmatmul.bf16.gmra.mxu0 %v3884
    %v4050 = vpop.f32.mrf.mxu0
    %v4051 = vadd.f32 0.0, %v4050
    %v4052 = vpop.f32.mrf.mxu0
    %v4053 = vadd.f32 0.0, %v4052
    %4054 = vmatmul.bf16.gmra.mxu0 %v3885
    %v4055 = vpop.f32.mrf.mxu0
    %v4056 = vadd.f32 0.0, %v4055
    %v4057 = vpop.f32.mrf.mxu0
    %v4058 = vadd.f32 0.0, %v4057
    %4059 = vmatmul.bf16.gmra.mxu0 %v3886
    %v4060 = vpop.f32.mrf.mxu0
    %v4061 = vadd.f32 0.0, %v4060
    %v4062 = vpop.f32.mrf.mxu0
    %v4063 = vadd.f32 0.0, %v4062
    %4064 = vmatmul.bf16.gmra.mxu0 %v3887
    %v4065 = vpop.f32.mrf.mxu0
    %v4066 = vadd.f32 0.0, %v4065
    %v4067 = vpop.f32.mrf.mxu0
    %v4068 = vadd.f32 0.0, %v4067
    %4069 = vmatmul.bf16.gmra.mxu0 %v3888
    %v4070 = vpop.f32.mrf.mxu0
    %v4071 = vadd.f32 0.0, %v4070
    %v4072 = vpop.f32.mrf.mxu0
    %v4073 = vadd.f32 0.0, %v4072
    %4074 = vmatmul.bf16.gmra.mxu0 %v3889
    %v4075 = vpop.f32.mrf.mxu0
    %v4076 = vadd.f32 0.0, %v4075
    %v4077 = vpop.f32.mrf.mxu0
    %v4078 = vadd.f32 0.0, %v4077
    %4079 = vmatmul.bf16.gmra.mxu0 %v3890
    %v4080 = vpop.f32.mrf.mxu0
    %v4081 = vadd.f32 0.0, %v4080
    %v4082 = vpop.f32.mrf.mxu0
    %v4083 = vadd.f32 0.0, %v4082
    %4084 = vmatmul.bf16.gmra.mxu0 %v3891
    %v4085 = vpop.f32.mrf.mxu0
    %v4086 = vadd.f32 0.0, %v4085
    %v4087 = vpop.f32.mrf.mxu0
    %v4088 = vadd.f32 0.0, %v4087
    %4089 = vmatmul.bf16.gmra.mxu0 %v3892
    %v4090 = vpop.f32.mrf.mxu0
    %v4091 = vadd.f32 0.0, %v4090
    %v4092 = vpop.f32.mrf.mxu0
    %v4093 = vadd.f32 0.0, %v4092
    %4094 = vmatmul.bf16.gmra.mxu0 %v3893
    %v4095 = vpop.f32.mrf.mxu0
    %v4096 = vadd.f32 0.0, %v4095
    %v4097 = vpop.f32.mrf.mxu0
    %v4098 = vadd.f32 0.0, %v4097
    %4099 = vmatmul.bf16.gmra.mxu0 %v3894
    %v4100 = vpop.f32.mrf.mxu0
    %v4101 = vadd.f32 0.0, %v4100
    %v4102 = vpop.f32.mrf.mxu0
    %v4103 = vadd.f32 0.0, %v4102
    %4104 = vmatmul.bf16.gmra.mxu0 %v3895
    %v4105 = vpop.f32.mrf.mxu0
    %v4106 = vadd.f32 0.0, %v4105
    %v4107 = vpop.f32.mrf.mxu0
    %v4108 = vadd.f32 0.0, %v4107
    %4109 = vmatmul.bf16.gmra.mxu0 %v3896
    %v4110 = vpop.f32.mrf.mxu0
    %v4111 = vadd.f32 0.0, %v4110
    %v4112 = vpop.f32.mrf.mxu0
    %v4113 = vadd.f32 0.0, %v4112
    %4114 = vmatmul.bf16.gmra.mxu0 %v3897
    %v4115 = vpop.f32.mrf.mxu0
    %v4116 = vadd.f32 0.0, %v4115
    %v4117 = vpop.f32.mrf.mxu0
    %v4118 = vadd.f32 0.0, %v4117
    %4119 = vmatmul.bf16.gmra.mxu0 %v3898
    %v4120 = vpop.f32.mrf.mxu0
    %v4121 = vadd.f32 0.0, %v4120
    %v4122 = vpop.f32.mrf.mxu0
    %v4123 = vadd.f32 0.0, %v4122
    %4124 = vmatmul.bf16.gmra.mxu0 %v3899
    %v4125 = vpop.f32.mrf.mxu0
    %v4126 = vadd.f32 0.0, %v4125
    %v4127 = vpop.f32.mrf.mxu0
    %v4128 = vadd.f32 0.0, %v4127
    %4129 = vmatmul.bf16.gmra.mxu0 %v3900
    %v4130 = vpop.f32.mrf.mxu0
    %v4131 = vadd.f32 0.0, %v4130
    %v4132 = vpop.f32.mrf.mxu0
    %v4133 = vadd.f32 0.0, %v4132
    %4134 = vdwg.mxu0
    %v4135 = vadd.f32 %v3741, %v3976
    %v4136 = vadd.f32 %v3742, %v3978
    %v4137 = vadd.f32 %v3743, %v3981
    %v4138 = vadd.f32 %v3744, %v3983
    %v4139 = vadd.f32 %v3745, %v3986
    %v4140 = vadd.f32 %v3746, %v3988
    %v4141 = vadd.f32 %v3747, %v3991
    %v4142 = vadd.f32 %v3748, %v3993
    %v4143 = vadd.f32 %v3749, %v3996
    %v4144 = vadd.f32 %v3750, %v3998
    %v4145 = vadd.f32 %v3751, %v4001
    %v4146 = vadd.f32 %v3752, %v4003
    %v4147 = vadd.f32 %v3753, %v4006
    %v4148 = vadd.f32 %v3754, %v4008
    %v4149 = vadd.f32 %v3755, %v4011
    %v4150 = vadd.f32 %v3756, %v4013
    %v4151 = vadd.f32 %v3757, %v4016
    %v4152 = vadd.f32 %v3758, %v4018
    %v4153 = vadd.f32 %v3759, %v4021
    %v4154 = vadd.f32 %v3760, %v4023
    %v4155 = vadd.f32 %v3761, %v4026
    %v4156 = vadd.f32 %v3762, %v4028
    %v4157 = vadd.f32 %v3763, %v4031
    %v4158 = vadd.f32 %v3764, %v4033
    %v4159 = vadd.f32 %v3765, %v4036
    %v4160 = vadd.f32 %v3766, %v4038
    %v4161 = vadd.f32 %v3767, %v4041
    %v4162 = vadd.f32 %v3768, %v4043
    %v4163 = vadd.f32 %v3769, %v4046
    %v4164 = vadd.f32 %v3770, %v4048
    %v4165 = vadd.f32 %v3771, %v4051
    %v4166 = vadd.f32 %v3772, %v4053
    %v4167 = vadd.f32 %v3773, %v4056
    %v4168 = vadd.f32 %v3774, %v4058
    %v4169 = vadd.f32 %v3775, %v4061
    %v4170 = vadd.f32 %v3776, %v4063
    %v4171 = vadd.f32 %v3777, %v4066
    %v4172 = vadd.f32 %v3778, %v4068
    %v4173 = vadd.f32 %v3779, %v4071
    %v4174 = vadd.f32 %v3780, %v4073
    %v4175 = vadd.f32 %v3781, %v4076
    %v4176 = vadd.f32 %v3782, %v4078
    %v4177 = vadd.f32 %v3783, %v4081
    %v4178 = vadd.f32 %v3784, %v4083
    %v4179 = vadd.f32 %v3785, %v4086
    %v4180 = vadd.f32 %v3786, %v4088
    %v4181 = vadd.f32 %v3787, %v4091
    %v4182 = vadd.f32 %v3788, %v4093
    %v4183 = vadd.f32 %v3789, %v4096
    %v4184 = vadd.f32 %v3790, %v4098
    %v4185 = vadd.f32 %v3791, %v4101
    %v4186 = vadd.f32 %v3792, %v4103
    %v4187 = vadd.f32 %v3793, %v4106
    %v4188 = vadd.f32 %v3794, %v4108
    %v4189 = vadd.f32 %v3795, %v4111
    %v4190 = vadd.f32 %v3796, %v4113
    %v4191 = vadd.f32 %v3797, %v4116
    %v4192 = vadd.f32 %v3798, %v4118
    %v4193 = vadd.f32 %v3799, %v4121
    %v4194 = vadd.f32 %v3800, %v4123
    %v4195 = vadd.f32 %v3801, %v4126
    %v4196 = vadd.f32 %v3802, %v4128
    %v4197 = vadd.f32 %v3803, %v4131
    %v4198 = vadd.f32 %v3804, %v4133
    %v4199 = vld [vmem:[%s4] sm:$0x1]
    %v4201 = vperm.slane %v4199, 0
    %v4203 = vadd.f32 %v4135, %v4201
    %v4204 = vadd.f32 %v4136, %v4201
    %v4205 = vadd.f32 %v4137, %v4201
    %v4206 = vadd.f32 %v4138, %v4201
    %v4207 = vadd.f32 %v4139, %v4201
    %v4208 = vadd.f32 %v4140, %v4201
    %v4209 = vadd.f32 %v4141, %v4201
    %v4210 = vadd.f32 %v4142, %v4201
    %v4211 = vadd.f32 %v4143, %v4201
    %v4212 = vadd.f32 %v4144, %v4201
    %v4213 = vadd.f32 %v4145, %v4201
    %v4214 = vadd.f32 %v4146, %v4201
    %v4215 = vadd.f32 %v4147, %v4201
    %v4216 = vadd.f32 %v4148, %v4201
    %v4217 = vadd.f32 %v4149, %v4201
    %v4218 = vadd.f32 %v4150, %v4201
    %v4219 = vadd.f32 %v4151, %v4201
    %v4220 = vadd.f32 %v4152, %v4201
    %v4221 = vadd.f32 %v4153, %v4201
    %v4222 = vadd.f32 %v4154, %v4201
    %v4223 = vadd.f32 %v4155, %v4201
    %v4224 = vadd.f32 %v4156, %v4201
    %v4225 = vadd.f32 %v4157, %v4201
    %v4226 = vadd.f32 %v4158, %v4201
    %v4227 = vadd.f32 %v4159, %v4201
    %v4228 = vadd.f32 %v4160, %v4201
    %v4229 = vadd.f32 %v4161, %v4201
    %v4230 = vadd.f32 %v4162, %v4201
    %v4231 = vadd.f32 %v4163, %v4201
    %v4232 = vadd.f32 %v4164, %v4201
    %v4233 = vadd.f32 %v4165, %v4201
    %v4234 = vadd.f32 %v4166, %v4201
    %v4235 = vadd.f32 %v4167, %v4201
    %v4236 = vadd.f32 %v4168, %v4201
    %v4237 = vadd.f32 %v4169, %v4201
    %v4238 = vadd.f32 %v4170, %v4201
    %v4239 = vadd.f32 %v4171, %v4201
    %v4240 = vadd.f32 %v4172, %v4201
    %v4241 = vadd.f32 %v4173, %v4201
    %v4242 = vadd.f32 %v4174, %v4201
    %v4243 = vadd.f32 %v4175, %v4201
    %v4244 = vadd.f32 %v4176, %v4201
    %v4245 = vadd.f32 %v4177, %v4201
    %v4246 = vadd.f32 %v4178, %v4201
    %v4247 = vadd.f32 %v4179, %v4201
    %v4248 = vadd.f32 %v4180, %v4201
    %v4249 = vadd.f32 %v4181, %v4201
    %v4250 = vadd.f32 %v4182, %v4201
    %v4251 = vadd.f32 %v4183, %v4201
    %v4252 = vadd.f32 %v4184, %v4201
    %v4253 = vadd.f32 %v4185, %v4201
    %v4254 = vadd.f32 %v4186, %v4201
    %v4255 = vadd.f32 %v4187, %v4201
    %v4256 = vadd.f32 %v4188, %v4201
    %v4257 = vadd.f32 %v4189, %v4201
    %v4258 = vadd.f32 %v4190, %v4201
    %v4259 = vadd.f32 %v4191, %v4201
    %v4260 = vadd.f32 %v4192, %v4201
    %v4261 = vadd.f32 %v4193, %v4201
    %v4262 = vadd.f32 %v4194, %v4201
    %v4263 = vadd.f32 %v4195, %v4201
    %v4264 = vadd.f32 %v4196, %v4201
    %v4265 = vadd.f32 %v4197, %v4201
    %v4266 = vadd.f32 %v4198, %v4201
    %v4267 = vmax.f32 %v4203, 0.0
    %v4268 = vmax.f32 %v4204, 0.0
    %v4269 = vmax.f32 %v4205, 0.0
    %v4270 = vmax.f32 %v4206, 0.0
    %v4271 = vmax.f32 %v4207, 0.0
    %v4272 = vmax.f32 %v4208, 0.0
    %v4273 = vmax.f32 %v4209, 0.0
    %v4274 = vmax.f32 %v4210, 0.0
    %v4275 = vmax.f32 %v4211, 0.0
    %v4276 = vmax.f32 %v4212, 0.0
    %v4277 = vmax.f32 %v4213, 0.0
    %v4278 = vmax.f32 %v4214, 0.0
    %v4279 = vmax.f32 %v4215, 0.0
    %v4280 = vmax.f32 %v4216, 0.0
    %v4281 = vmax.f32 %v4217, 0.0
    %v4282 = vmax.f32 %v4218, 0.0
    %v4283 = vmax.f32 %v4219, 0.0
    %v4284 = vmax.f32 %v4220, 0.0
    %v4285 = vmax.f32 %v4221, 0.0
    %v4286 = vmax.f32 %v4222, 0.0
    %v4287 = vmax.f32 %v4223, 0.0
    %v4288 = vmax.f32 %v4224, 0.0
    %v4289 = vmax.f32 %v4225, 0.0
    %v4290 = vmax.f32 %v4226, 0.0
    %v4291 = vmax.f32 %v4227, 0.0
    %v4292 = vmax.f32 %v4228, 0.0
    %v4293 = vmax.f32 %v4229, 0.0
    %v4294 = vmax.f32 %v4230, 0.0
    %v4295 = vmax.f32 %v4231, 0.0
    %v4296 = vmax.f32 %v4232, 0.0
    %v4297 = vmax.f32 %v4233, 0.0
    %v4298 = vmax.f32 %v4234, 0.0
    %v4299 = vmax.f32 %v4235, 0.0
    %v4300 = vmax.f32 %v4236, 0.0
    %v4301 = vmax.f32 %v4237, 0.0
    %v4302 = vmax.f32 %v4238, 0.0
    %v4303 = vmax.f32 %v4239, 0.0
    %v4304 = vmax.f32 %v4240, 0.0
    %v4305 = vmax.f32 %v4241, 0.0
    %v4306 = vmax.f32 %v4242, 0.0
    %v4307 = vmax.f32 %v4243, 0.0
    %v4308 = vmax.f32 %v4244, 0.0
    %v4309 = vmax.f32 %v4245, 0.0
    %v4310 = vmax.f32 %v4246, 0.0
    %v4311 = vmax.f32 %v4247, 0.0
    %v4312 = vmax.f32 %v4248, 0.0
    %v4313 = vmax.f32 %v4249, 0.0
    %v4314 = vmax.f32 %v4250, 0.0
    %v4315 = vmax.f32 %v4251, 0.0
    %v4316 = vmax.f32 %v4252, 0.0
    %v4317 = vmax.f32 %v4253, 0.0
    %v4318 = vmax.f32 %v4254, 0.0
    %v4319 = vmax.f32 %v4255, 0.0
    %v4320 = vmax.f32 %v4256, 0.0
    %v4321 = vmax.f32 %v4257, 0.0
    %v4322 = vmax.f32 %v4258, 0.0
    %v4323 = vmax.f32 %v4259, 0.0
    %v4324 = vmax.f32 %v4260, 0.0
    %v4325 = vmax.f32 %v4261, 0.0
    %v4326 = vmax.f32 %v4262, 0.0
    %v4327 = vmax.f32 %v4263, 0.0
    %v4328 = vmax.f32 %v4264, 0.0
    %v4329 = vmax.f32 %v4265, 0.0
    %v4330 = vmax.f32 %v4266, 0.0
    %v4331 = vld [vmem:[%s5] sm:$0xf]
    %v4332 = vpack.c.bf16 %v4268, %v4267
    %v4333 = vpack.c.bf16 %v4270, %v4269
    %v4334 = vpack.c.bf16 %v4272, %v4271
    %v4335 = vpack.c.bf16 %v4274, %v4273
    %v4336 = vpack.c.bf16 %v4276, %v4275
    %v4337 = vpack.c.bf16 %v4278, %v4277
    %v4338 = vpack.c.bf16 %v4280, %v4279
    %v4339 = vpack.c.bf16 %v4282, %v4281
    %v4340 = vpack.c.bf16 %v4284, %v4283
    %v4341 = vpack.c.bf16 %v4286, %v4285
    %v4342 = vpack.c.bf16 %v4288, %v4287
    %v4343 = vpack.c.bf16 %v4290, %v4289
    %v4344 = vpack.c.bf16 %v4292, %v4291
    %v4345 = vpack.c.bf16 %v4294, %v4293
    %v4346 = vpack.c.bf16 %v4296, %v4295
    %v4347 = vpack.c.bf16 %v4298, %v4297
    %v4348 = vpack.c.bf16 %v4300, %v4299
    %v4349 = vpack.c.bf16 %v4302, %v4301
    %v4350 = vpack.c.bf16 %v4304, %v4303
    %v4351 = vpack.c.bf16 %v4306, %v4305
    %v4352 = vpack.c.bf16 %v4308, %v4307
    %v4353 = vpack.c.bf16 %v4310, %v4309
    %v4354 = vpack.c.bf16 %v4312, %v4311
    %v4355 = vpack.c.bf16 %v4314, %v4313
    %v4356 = vpack.c.bf16 %v4316, %v4315
    %v4357 = vpack.c.bf16 %v4318, %v4317
    %v4358 = vpack.c.bf16 %v4320, %v4319
    %v4359 = vpack.c.bf16 %v4322, %v4321
    %v4360 = vpack.c.bf16 %v4324, %v4323
    %v4361 = vpack.c.bf16 %v4326, %v4325
    %v4362 = vpack.c.bf16 %v4328, %v4327
    %v4363 = vpack.c.bf16 %v4330, %v4329
    %4365 = vst [vmem:[#allocation1] ss:$9 sm:$0xff] %v4331
    %v4366 = vld [vmem:[#allocation1] sm:$0xff]
    %v4367 = vld [vmem:[#allocation1 + $0x9] sm:$0xff]
    %v4368 = vld [vmem:[#allocation1 + $0x12] sm:$0xff]
    %v4369 = vld [vmem:[#allocation1 + $0x1b] sm:$0xff]
    %4374 = vmatpush.bf16.msra.mxu0 %v4339
    %4375 = vmatpush.bf16.msra.mxu0 %v4338
    %4376 = vmatpush.bf16.msra.mxu0 %v4337
    %4377 = vmatpush.bf16.msra.mxu0 %v4336
    %4378 = vmatpush.bf16.msra.mxu0 %v4335
    %4379 = vmatpush.bf16.msra.mxu0 %v4334
    %4380 = vmatpush.bf16.msra.mxu0 %v4333
    %4381 = vmatpush.bf16.msra.mxu0 %v4332
    %4382 = vmatmul.bf16.gmra.mxu0 %v4366
    %v4383 = vpop.f32.mrf.mxu0
    %v4384 = vadd.f32 0.0, %v4383
    %v4385 = vpop.f32.mrf.mxu0
    %4386 = vdwg.mxu0
    %4387 = vmatpush.bf16.msra.mxu0 %v4347
    %4388 = vmatpush.bf16.msra.mxu0 %v4346
    %4389 = vmatpush.bf16.msra.mxu0 %v4345
    %4390 = vmatpush.bf16.msra.mxu0 %v4344
    %4391 = vmatpush.bf16.msra.mxu0 %v4343
    %4392 = vmatpush.bf16.msra.mxu0 %v4342
    %4393 = vmatpush.bf16.msra.mxu0 %v4341
    %4394 = vmatpush.bf16.msra.mxu0 %v4340
    %4395 = vmatmul.bf16.gmra.mxu0 %v4367
    %v4396 = vpop.f32.mrf.mxu0
    %v4397 = vadd.f32 %v4384, %v4396
    %v4398 = vpop.f32.mrf.mxu0
    %4399 = vdwg.mxu0
    %4400 = vmatpush.bf16.msra.mxu0 %v4355
    %4401 = vmatpush.bf16.msra.mxu0 %v4354
    %4402 = vmatpush.bf16.msra.mxu0 %v4353
    %4403 = vmatpush.bf16.msra.mxu0 %v4352
    %4404 = vmatpush.bf16.msra.mxu0 %v4351
    %4405 = vmatpush.bf16.msra.mxu0 %v4350
    %4406 = vmatpush.bf16.msra.mxu0 %v4349
    %4407 = vmatpush.bf16.msra.mxu0 %v4348
    %4408 = vmatmul.bf16.gmra.mxu0 %v4368
    %v4409 = vpop.f32.mrf.mxu0
    %v4410 = vadd.f32 %v4397, %v4409
    %v4411 = vpop.f32.mrf.mxu0
    %4412 = vdwg.mxu0
    %4413 = vmatpush.bf16.msra.mxu0 %v4363
    %4414 = vmatpush.bf16.msra.mxu0 %v4362
    %4415 = vmatpush.bf16.msra.mxu0 %v4361
    %4416 = vmatpush.bf16.msra.mxu0 %v4360
    %4417 = vmatpush.bf16.msra.mxu0 %v4359
    %4418 = vmatpush.bf16.msra.mxu0 %v4358
    %4419 = vmatpush.bf16.msra.mxu0 %v4357
    %4420 = vmatpush.bf16.msra.mxu0 %v4356
    %4421 = vmatmul.bf16.gmra.mxu0 %v4369
    %v4422 = vpop.f32.mrf.mxu0
    %v4423 = vadd.f32 %v4410, %v4422
    %v4424 = vpop.f32.mrf.mxu0
    %4425 = vdwg.mxu0
    %4426 = vst [vmem:[#allocation5] sm:$0x3] %v4423
    %v4427 = vpack.c.bf16 %v4423, %v4423
    %v4428 = vld [vmem:[%s6] sm:$0xff]
    %v4429 = vld [vmem:[%s6 + $0x8] sm:$0xff]
    %v4430 = vld [vmem:[%s6 + $0x10] sm:$0xff]
    %v4431 = vld [vmem:[%s6 + $0x18] sm:$0xff]
    %v4432 = vld [vmem:[%s6 + $0x20] sm:$0xff]
    %v4433 = vld [vmem:[%s6 + $0x28] sm:$0xff]
    %v4434 = vld [vmem:[%s6 + $0x30] sm:$0xff]
    %v4435 = vld [vmem:[%s6 + $0x38] sm:$0xff]
    %v4436 = vld [vmem:[%s6 + $0x40] sm:$0xff]
    %v4437 = vld [vmem:[%s6 + $0x48] sm:$0xff]
    %v4438 = vld [vmem:[%s6 + $0x50] sm:$0xff]
    %v4439 = vld [vmem:[%s6 + $0x58] sm:$0xff]
    %v4440 = vld [vmem:[%s6 + $0x60] sm:$0xff]
    %v4441 = vld [vmem:[%s6 + $0x68] sm:$0xff]
    %v4442 = vld [vmem:[%s6 + $0x70] sm:$0xff]
    %v4443 = vld [vmem:[%s6 + $0x78] sm:$0xff]
    %v4444 = vld [vmem:[%s6 + $0x80] sm:$0xff]
    %v4445 = vld [vmem:[%s6 + $0x88] sm:$0xff]
    %v4446 = vld [vmem:[%s6 + $0x90] sm:$0xff]
    %v4447 = vld [vmem:[%s6 + $0x98] sm:$0xff]
    %v4448 = vld [vmem:[%s6 + $0xa0] sm:$0xff]
    %v4449 = vld [vmem:[%s6 + $0xa8] sm:$0xff]
    %v4450 = vld [vmem:[%s6 + $0xb0] sm:$0xff]
    %v4451 = vld [vmem:[%s6 + $0xb8] sm:$0xff]
    %v4452 = vld [vmem:[%s6 + $0xc0] sm:$0xff]
    %v4453 = vld [vmem:[%s6 + $0xc8] sm:$0xff]
    %v4454 = vld [vmem:[%s6 + $0xd0] sm:$0xff]
    %v4455 = vld [vmem:[%s6 + $0xd8] sm:$0xff]
    %v4456 = vld [vmem:[%s6 + $0xe0] sm:$0xff]
    %v4457 = vld [vmem:[%s6 + $0xe8] sm:$0xff]
    %v4458 = vld [vmem:[%s6 + $0xf0] sm:$0xff]
    %v4459 = vld [vmem:[%s6 + $0xf8] sm:$0xff]
    %v4460 = vld [vmem:[%s7] sm:$0xf]
    %v4462 = vperm.slane %v4460, 0
    %v4463 = vperm.slane %v4460, 1
    %v4464 = vperm.slane %v4460, 2
    %v4465 = vperm.slane %v4460, 3
    %v4502 = vunpack.c.l.b16 %v4428
    %v4503 = vunpack.c.h.b16 %v4428
    %v4504 = vunpack.c.l.b16 %v4429
    %v4505 = vunpack.c.h.b16 %v4429
    %v4506 = vunpack.c.l.b16 %v4430
    %v4507 = vunpack.c.h.b16 %v4430
    %v4508 = vunpack.c.l.b16 %v4431
    %v4509 = vunpack.c.h.b16 %v4431
    %v4510 = vunpack.c.l.b16 %v4432
    %v4511 = vunpack.c.h.b16 %v4432
    %v4512 = vunpack.c.l.b16 %v4433
    %v4513 = vunpack.c.h.b16 %v4433
    %v4514 = vunpack.c.l.b16 %v4434
    %v4515 = vunpack.c.h.b16 %v4434
    %v4516 = vunpack.c.l.b16 %v4435
    %v4517 = vunpack.c.h.b16 %v4435
    %v4518 = vunpack.c.l.b16 %v4436
    %v4519 = vunpack.c.h.b16 %v4436
    %v4520 = vunpack.c.l.b16 %v4437
    %v4521 = vunpack.c.h.b16 %v4437
    %v4522 = vunpack.c.l.b16 %v4438
    %v4523 = vunpack.c.h.b16 %v4438
    %v4524 = vunpack.c.l.b16 %v4439
    %v4525 = vunpack.c.h.b16 %v4439
    %v4526 = vunpack.c.l.b16 %v4440
    %v4527 = vunpack.c.h.b16 %v4440
    %v4528 = vunpack.c.l.b16 %v4441
    %v4529 = vunpack.c.h.b16 %v4441
    %v4530 = vunpack.c.l.b16 %v4442
    %v4531 = vunpack.c.h.b16 %v4442
    %v4532 = vunpack.c.l.b16 %v4443
    %v4533 = vunpack.c.h.b16 %v4443
    %v4534 = vunpack.c.l.b16 %v4444
    %v4535 = vunpack.c.h.b16 %v4444
    %v4536 = vunpack.c.l.b16 %v4445
    %v4537 = vunpack.c.h.b16 %v4445
    %v4538 = vunpack.c.l.b16 %v4446
    %v4539 = vunpack.c.h.b16 %v4446
    %v4540 = vunpack.c.l.b16 %v4447
    %v4541 = vunpack.c.h.b16 %v4447
    %v4542 = vunpack.c.l.b16 %v4448
    %v4543 = vunpack.c.h.b16 %v4448
    %v4544 = vunpack.c.l.b16 %v4449
    %v4545 = vunpack.c.h.b16 %v4449
    %v4546 = vunpack.c.l.b16 %v4450
    %v4547 = vunpack.c.h.b16 %v4450
    %v4548 = vunpack.c.l.b16 %v4451
    %v4549 = vunpack.c.h.b16 %v4451
    %v4550 = vunpack.c.l.b16 %v4452
    %v4551 = vunpack.c.h.b16 %v4452
    %v4552 = vunpack.c.l.b16 %v4453
    %v4553 = vunpack.c.h.b16 %v4453
    %v4554 = vunpack.c.l.b16 %v4454
    %v4555 = vunpack.c.h.b16 %v4454
    %v4556 = vunpack.c.l.b16 %v4455
    %v4557 = vunpack.c.h.b16 %v4455
    %v4558 = vunpack.c.l.b16 %v4456
    %v4559 = vunpack.c.h.b16 %v4456
    %v4560 = vunpack.c.l.b16 %v4457
    %v4561 = vunpack.c.h.b16 %v4457
    %v4562 = vunpack.c.l.b16 %v4458
    %v4563 = vunpack.c.h.b16 %v4458
    %v4564 = vunpack.c.l.b16 %v4459
    %v4565 = vunpack.c.h.b16 %v4459
    %v4566 = vpack.c.b16 %v4506, %v4502
    %v4567 = vpack.c.b16 %v4507, %v4503
    %v4568 = vpack.c.b16 %v4508, %v4504
    %v4569 = vpack.c.b16 %v4509, %v4505
    %v4570 = vpack.c.b16 %v4514, %v4510
    %v4571 = vpack.c.b16 %v4515, %v4511
    %v4572 = vpack.c.b16 %v4516, %v4512
    %v4573 = vpack.c.b16 %v4517, %v4513
    %v4574 = vpack.c.b16 %v4522, %v4518
    %v4575 = vpack.c.b16 %v4523, %v4519
    %v4576 = vpack.c.b16 %v4524, %v4520
    %v4577 = vpack.c.b16 %v4525, %v4521
    %v4578 = vpack.c.b16 %v4530, %v4526
    %v4579 = vpack.c.b16 %v4531, %v4527
    %v4580 = vpack.c.b16 %v4532, %v4528
    %v4581 = vpack.c.b16 %v4533, %v4529
    %v4582 = vpack.c.b16 %v4538, %v4534
    %v4583 = vpack.c.b16 %v4539, %v4535
    %v4584 = vpack.c.b16 %v4540, %v4536
    %v4585 = vpack.c.b16 %v4541, %v4537
    %v4586 = vpack.c.b16 %v4546, %v4542
    %v4587 = vpack.c.b16 %v4547, %v4543
    %v4588 = vpack.c.b16 %v4548, %v4544
    %v4589 = vpack.c.b16 %v4549, %v4545
    %v4590 = vpack.c.b16 %v4554, %v4550
    %v4591 = vpack.c.b16 %v4555, %v4551
    %v4592 = vpack.c.b16 %v4556, %v4552
    %v4593 = vpack.c.b16 %v4557, %v4553
    %v4594 = vpack.c.b16 %v4562, %v4558
    %v4595 = vpack.c.b16 %v4563, %v4559
    %v4596 = vpack.c.b16 %v4564, %v4560
    %v4597 = vpack.c.b16 %v4565, %v4561
    %4630 = vmatpush.bf16.msra.mxu0 %v4594
    %4631 = vmatpush.bf16.msra.mxu0 %v4590
    %4632 = vmatpush.bf16.msra.mxu0 %v4586
    %4633 = vmatpush.bf16.msra.mxu0 %v4582
    %4634 = vmatpush.bf16.msra.mxu0 %v4578
    %4635 = vmatpush.bf16.msra.mxu0 %v4574
    %4636 = vmatpush.bf16.msra.mxu0 %v4570
    %4637 = vmatpush.bf16.msra.mxu0 %v4566
    %4638 = vmatmul.bf16.gmra.mxu0 %v4427
    %v4639 = vpop.f32.mrf.mxu0
    %v4640 = vadd.f32 %v4462, %v4639
    %v4641 = vpop.f32.mrf.mxu0
    %4642 = vdwg.mxu0
    %4643 = vmatpush.bf16.msra.mxu0 %v4595
    %4644 = vmatpush.bf16.msra.mxu0 %v4591
    %4645 = vmatpush.bf16.msra.mxu0 %v4587
    %4646 = vmatpush.bf16.msra.mxu0 %v4583
    %4647 = vmatpush.bf16.msra.mxu0 %v4579
    %4648 = vmatpush.bf16.msra.mxu0 %v4575
    %4649 = vmatpush.bf16.msra.mxu0 %v4571
    %4650 = vmatpush.bf16.msra.mxu0 %v4567
    %4651 = vmatmul.bf16.gmra.mxu0 %v4427
    %v4652 = vpop.f32.mrf.mxu0
    %v4653 = vadd.f32 %v4463, %v4652
    %v4654 = vpop.f32.mrf.mxu0
    %4655 = vdwg.mxu0
    %4656 = vmatpush.bf16.msra.mxu0 %v4596
    %4657 = vmatpush.bf16.msra.mxu0 %v4592
    %4658 = vmatpush.bf16.msra.mxu0 %v4588
    %4659 = vmatpush.bf16.msra.mxu0 %v4584
    %4660 = vmatpush.bf16.msra.mxu0 %v4580
    %4661 = vmatpush.bf16.msra.mxu0 %v4576
    %4662 = vmatpush.bf16.msra.mxu0 %v4572
    %4663 = vmatpush.bf16.msra.mxu0 %v4568
    %4664 = vmatmul.bf16.gmra.mxu0 %v4427
    %v4665 = vpop.f32.mrf.mxu0
    %v4666 = vadd.f32 %v4464, %v4665
    %v4667 = vpop.f32.mrf.mxu0
    %4668 = vdwg.mxu0
    %4669 = vmatpush.bf16.msra.mxu0 %v4597
    %4670 = vmatpush.bf16.msra.mxu0 %v4593
    %4671 = vmatpush.bf16.msra.mxu0 %v4589
    %4672 = vmatpush.bf16.msra.mxu0 %v4585
    %4673 = vmatpush.bf16.msra.mxu0 %v4581
    %4674 = vmatpush.bf16.msra.mxu0 %v4577
    %4675 = vmatpush.bf16.msra.mxu0 %v4573
    %4676 = vmatpush.bf16.msra.mxu0 %v4569
    %4677 = vmatmul.bf16.gmra.mxu0 %v4427
    %v4678 = vpop.f32.mrf.mxu0
    %v4679 = vadd.f32 %v4465, %v4678
    %v4680 = vpop.f32.mrf.mxu0
    %4681 = vdwg.mxu0
    %v4686 = vrot.slane %v4653, 6
    %v4687 = vrot.slane %v4666, 4
    %v4688 = vrot.slane %v4679, 2
    %vm4689 = vcmask 1041408
    %v4690 = vsel %vm4689, %v4640, %v4686
    %vm4691 = vcmask 1045508
    %v4692 = vsel %vm4691, %v4687, %v4688
    %vm4693 = vcmask 1043456
    %v4694 = vsel %vm4693, %v4690, %v4692
    %4696 = vst [vmem:[#allocation3] sm:$0xff] %v4694
    // Predicated region
    $region34: #{gradcam_forward.1} parent=1 // pred_check
      _
    $region35: #{gradcam_forward.1} parent=1 // pred_check_branch
      %4698 = sbr.rel (0) target = $region37
    $region36: #{gradcam_forward.1} parent=1 // pred_region
      %4700 = vsyncadd [#allocation4], 0
      %s4702 = sshll.u32 [#allocation3], 4
      %s4703 = int_to_ptr.vmem [resolvable:$true] %s4702
      %s4704 = sshll.u32 %s8, 4
      %s4705 = int_to_ptr.hbm [resolvable:$true] %s4704
      %4707 = dma.vmem_to_hbm [thread:$0]  %s4703, 128, %s4705, [#allocation4]
    $region37: #{gradcam_forward.1} parent=1 // pred_fallthru
      _
    // Predicated region
    $region38: #{gradcam_forward.1} parent=1 // pred_check
      _
    $region39: #{gradcam_forward.1} parent=1 // pred_check_branch
      %4709 = sbr.rel (0) target = $region41
    $region40: #{gradcam_forward.1} parent=1 // pred_region
      %4711 = vsyncadd [#allocation6], 0
      %s4713 = sshll.u32 [#allocation5], 4
      %s4714 = int_to_ptr.vmem [resolvable:$true] %s4713
      %s4715 = sshll.u32 %s9, 4
      %s4716 = int_to_ptr.hbm [resolvable:$true] %s4715
      %4718 = dma.vmem_to_hbm [thread:$0]  %s4714, 32, %s4716, [#allocation6]
    $region41: #{gradcam_forward.1} parent=1 // pred_fallthru
      _
    // Predicated region
    $region42: #{gradcam_forward.1} parent=1 // pred_check
      _
    $region43: #{gradcam_forward.1} parent=1 // pred_check_branch
      %4720 = sbr.rel (0) target = $region45
    $region44: #{gradcam_forward.1} parent=1 // pred_region
      %4722 = dma.done [#allocation4], 128
    $region45: #{gradcam_forward.1} parent=1 // pred_fallthru
      _
    // Predicated region
    $region46: #{gradcam_forward.1} parent=1 // pred_check
      _
    $region47: #{gradcam_forward.1} parent=1 // pred_check_branch
      %4724 = sbr.rel (0) target = $region49
    $region48: #{gradcam_forward.1} parent=1 // pred_region
      %4726 = dma.done [#allocation6], 32
    $region49: #{gradcam_forward.1} parent=1 // pred_fallthru
      _
    %4727 = vsyncpa [#allocation4], 1
    %4728 = vsyncpa [#allocation6], 1

</llo_original>
